<compile_context>
chip_gen: v7x
topology: tpu7x:2x2x1
jax: 0.10.0
libtpu: 0.0.40
codegen_flags: <defaults>
</compile_context>

<pallas_src>
import functools
import math

import jax
import jax.numpy as jnp
from jax import lax
from jax.experimental import pallas as pl
from jax.experimental.pallas import tpu as pltpu


# ----------------------------- in-kernel helpers (traced inside Pallas) -----------------------------

def _dot(a, b):
    """MXU matmul: bf16 operands (weights arrive pre-cast to bf16), f32 accumulation."""
    return jnp.dot(a.astype(jnp.bfloat16), b.astype(jnp.bfloat16),
                   preferred_element_type=jnp.float32)


def _dot_nt(a, b):
    """a @ b.T without materialising a transpose (contract last dims on the MXU)."""
    return lax.dot_general(a.astype(jnp.bfloat16), b.astype(jnp.bfloat16),
                           dimension_numbers=(((1,), (1,)), ((), ())),
                           preferred_element_type=jnp.float32)


def _layernorm(x, gb, eps):
    """Row-wise LayerNorm in f32. gb is (2, D): row 0 = gamma, row 1 = beta."""
    g = gb[0:1, :]
    b = gb[1:2, :]
    mu = jnp.mean(x, axis=-1, keepdims=True)
    var = jnp.mean(jnp.square(x - mu), axis=-1, keepdims=True)
    return (x - mu) * lax.rsqrt(var + eps) * g + b


def _softmax_rows(s):
    """Row softmax; normalisation uses the EUP reciprocal instead of a VPU divide."""
    m = jnp.max(s, axis=-1, keepdims=True)
    e = jnp.exp(s - m)
    return e * pl.reciprocal(jnp.sum(e, axis=-1, keepdims=True), approx=True)


def _block_mask(n_blocks, seq, causal):
    """Additive attention mask generated in-kernel (no O(R^2) HBM array / DMA).

    0 inside each batch element's own block (optionally causal), -1e30 across
    blocks.  Block indices come from float-exact iota division (integer vector
    division is avoided on purpose)."""
    rows = n_blocks * seq
    ri = lax.broadcasted_iota(jnp.int32, (rows, rows), 0)
    ci = lax.broadcasted_iota(jnp.int32, (rows, rows), 1)
    s = jnp.float32(seq)
    rb = jnp.floor(ri.astype(jnp.float32) / s)
    cb = jnp.floor(ci.astype(jnp.float32) / s)
    ok = rb == cb
    if causal:
        ok = ok & (ci <= ri)          # within the same block, causal == (column <= row)
    return jnp.where(ok, 0.0, -1e30).astype(jnp.float32)


def _transformer_block(x, mask, ln1, wqkv, bqkv, wout, bout, ln2, w1, b1, w2, b2,
                       n_heads, eps):
    """CLIP ResidualAttentionBlock on a flattened (rows, D) activation.

    `mask` is an additive (rows, rows) f32 matrix: 0 inside each batch element's own
    block (optionally causal for text), -1e30 across batch elements, so batched
    multi-head attention is a single joint matmul per head (no reshape/transpose)."""
    R, D = x.shape
    Dh = D // n_heads
    scale = 1.0 / math.sqrt(Dh)

    h = _layernorm(x, ln1, eps)
    qkv = _dot(h, wqkv) + bqkv                                   # (R, 3D) f32

    heads = []
    for hh in range(n_heads):                                    # head split = static column slices
        q = qkv[:, hh * Dh:(hh + 1) * Dh]
        k = qkv[:, D + hh * Dh:D + (hh + 1) * Dh]
        v = qkv[:, 2 * D + hh * Dh:2 * D + (hh + 1) * Dh]
        s = _dot_nt(q, k) * scale + mask                         # f32 scores + f32 mask
        p = _softmax_rows(s)
        heads.append(_dot(p, v))                                 # (R, Dh)
    o = jnp.concatenate(heads, axis=-1)                          # (R, D): ONE K=D out-proj matmul
    x = x + _dot(o, wout) + bout                                 # fused residual add

    h = _layernorm(x, ln2, eps)
    h = _dot(h, w1) + b1
    h = h * jax.nn.sigmoid(1.702 * h)                            # QuickGELU (f32)
    return x + _dot(h, w2) + b2                                  # fused residual add


# ----------------------------- fully fused CLIP kernel (single launch) -----------------------------

def _clip_kernel(*refs, cfg):
    (vpatch, vconv, vclspos, vlnpre, vcls_sel,
     vln1, vwqkv, vbqkv, vwout, vbout, vln2, vw1, vb1, vw2, vb2,
     vlnpost, vproj,
     tx0,
     tln1, twqkv, tbqkv, twout, tbout, tln2, tw1, tb1, tw2, tb2,
     tlnfin, teot, tproj,
     ls_ref, o_ref) = refs

    eps = cfg["eps"]

    # ---- vision transformer -> image features (activations stay in VMEM) ----
    vmask = _block_mask(cfg["batch"], cfg["v_seq"], causal=False)
    # patch-embed conv (stride == kernel) as a matmul; the CLS slot is a zero patch
    # row, and class_emb + positional embedding arrive via vclspos.
    x = _dot(vpatch[...], vconv[...]) + vclspos[...]              # (B*Sv, Dw)
    x = _layernorm(x, vlnpre[...], eps)
    # TODO(synk): at real depth, turn this Python unroll into an "arbitrary" grid axis
    #             with (L, ...)-indexed BlockSpecs and a VMEM activation carry.
    for l in range(cfg["layers"]):
        x = _transformer_block(
            x, vmask,
            vln1[l], vwqkv[l], vbqkv[l], vwout[l], vbout[l],
            vln2[l], vw1[l], vb1[l], vw2[l], vb2[l],
            cfg["v_heads"], eps)
    # CLS-token gather as an exact f32 one-hot selection matmul (single contiguous op,
    # no per-image masked single-row stores or tiny drain-dominated matmuls).
    cls = jnp.dot(vcls_sel[...], x, preferred_element_type=jnp.float32)   # (B, Dw)
    cls = _layernorm(cls, vlnpost[...], eps)
    img = _dot(cls, vproj[...])                                           # (B, E), bias-free proj

    # ---- text transformer -> class text features ----
    tmask = _block_mask(cfg["n_cls"], cfg["t_seq"], causal=True)
    y = tx0[...]                                                          # prompts + pos, (n_cls*Lt, Dt)
    for l in range(cfg["layers"]):
        y = _transformer_block(
            y, tmask,
            tln1[l], twqkv[l], tbqkv[l], twout[l], tbout[l],
            tln2[l], tw1[l], tb1[l], tw2[l], tb2[l],
            cfg["t_heads"], eps)
    y = _layernorm(y, tlnfin[...], eps)
    # EOT-token gather as an exact f32 one-hot selection matmul (kept f32 on purpose).
    ye = jnp.dot(teot[...], y, preferred_element_type=jnp.float32)        # (n_cls, Dt)
    txt = _dot(ye, tproj[...])                                            # (n_cls, E), bias-free proj

    # ---- fused epilogue: L2-normalise + scaled logits (no HBM feature round-trip) ----
    img = img * lax.rsqrt(jnp.sum(img * img, axis=-1, keepdims=True) + 1e-12)
    txt = txt * lax.rsqrt(jnp.sum(txt * txt, axis=-1, keepdims=True) + 1e-12)
    sim = lax.dot_general(img, txt, dimension_numbers=(((1,), (1,)), ((), ())),
                          preferred_element_type=jnp.float32)             # img @ txt.T, no transpose
    o_ref[...] = ls_ref[0] * sim                                          # exp(logit_scale) from SMEM


def _run_clip(vpatch, prep):
    meta = prep["meta"]
    arrays = [vpatch] + list(prep["vision_inputs"]) + list(prep["text_inputs"])

    vmem_spec = pl.BlockSpec(memory_space=pltpu.MemorySpace.VMEM)   # whole array, VMEM-resident
    smem_spec = pl.BlockSpec(memory_space=pltpu.MemorySpace.SMEM)   # exp(logit_scale) scalar

    # Explicit VMEM budget: the resident input set (single-buffered, no grid) plus a
    # generous margin for activations / scores / compiler scratch.
    in_bytes = sum(int(a.size) * a.dtype.itemsize for a in arrays)
    vmem_limit = int(min(128 << 20, max(32 << 20, 2 * in_bytes + (8 << 20))))

    return pl.pallas_call(
        functools.partial(_clip_kernel, cfg=meta),
        out_shape=jax.ShapeDtypeStruct((meta["batch"], meta["n_cls"]), jnp.float32),
        in_specs=[vmem_spec] * len(arrays) + [smem_spec],
        out_specs=pl.BlockSpec(memory_space=pltpu.MemorySpace.VMEM),
        compiler_params=pltpu.CompilerParams(vmem_limit_bytes=vmem_limit),
    )(*arrays, prep["logit_scale_exp"])


# ----------------------------- forward (1 pallas_call total) -----------------------------

def custom_clip_forward(image, prep):
    meta = prep["meta"]
    B, Sv, ps = meta["batch"], meta["v_seq"], meta["patch"]
    _, C, H, W = image.shape
    gh, gw = H // ps, W // ps
    # NCHW image -> flattened patches (raster order, (C, kh, kw) flattening). This
    # layout shuffle stays in XLA; it is the only per-call work outside the kernel.
    patches = image.reshape(B, C, gh, ps, gw, ps).transpose(0, 2, 4, 1, 3, 5)
    patches = patches.reshape(B, gh * gw, C * ps * ps)
    patches = jnp.concatenate(
        [jnp.zeros((B, 1, C * ps * ps), patches.dtype), patches], axis=1)   # CLS slot (zero patch)
    vpatch = patches.reshape(B * Sv, C * ps * ps).astype(jnp.float32)

    return _run_clip(vpatch, prep)
    # NOTE: the reference forward computes `logits` without returning; we return them.


# ----------------------------- one-time parameter preprocessing -----------------------------

def prepare_params(params, image_shape):
    """Parameter-only preprocessing into the flat arrays the fused kernel consumes."""
    f32, bf16 = jnp.float32, jnp.bfloat16
    V, T, PR = params["visual"], params["text"], params["prompt"]
    B, C, H, W = image_shape
    ps = V["patch_size"]
    Sv = 1 + (H // ps) * (W // ps)
    Dt = T["pos_emb"].shape[1]
    L = len(V["blocks"])
    n_cls = PR["prefix"].shape[0]
    Lt = T["pos_emb"].shape[0]

    def ln_pair(g, b):
        return jnp.stack([g, b], axis=0).astype(f32)              # (2, D)

    def stacked_blocks(blocks):
        # Matmul weights shipped in bf16 (halved DMA / VMEM); LN params + biases stay f32.
        return [
            jnp.stack([ln_pair(bk["ln1_g"], bk["ln1_b"]) for bk in blocks]),
            jnp.stack([bk["attn_w_qkv"] for bk in blocks]).astype(bf16),
            jnp.stack([bk["attn_b_qkv"][None, :] for bk in blocks]).astype(f32),
            jnp.stack([bk["attn_w_out"] for bk in blocks]).astype(bf16),
            jnp.stack([bk["attn_b_out"][None, :] for bk in blocks]).astype(f32),
            jnp.stack([ln_pair(bk["ln2_g"], bk["ln2_b"]) for bk in blocks]),
            jnp.stack([bk["mlp_w1"] for bk in blocks]).astype(bf16),
            jnp.stack([bk["mlp_b1"][None, :] for bk in blocks]).astype(f32),
            jnp.stack([bk["mlp_w2"] for bk in blocks]).astype(bf16),
            jnp.stack([bk["mlp_b2"][None, :] for bk in blocks]).astype(f32),
        ]

    # ---- vision encoder inputs ----
    cls_pos = V["pos_emb"].astype(f32).at[0].add(V["class_emb"].astype(f32))  # (Sv, Dw)
    # TODO(synk): pass cls_pos un-tiled (Sv, Dw) and broadcast in-kernel when scaling B;
    #             negligible bytes at these toy sizes.
    cls_sel = jax.nn.one_hot(jnp.arange(B) * Sv, B * Sv, dtype=f32)           # (B, B*Sv) CLS selector
    vision_inputs = (
        [V["conv_w"].astype(bf16),
         jnp.tile(cls_pos, (B, 1)),                               # (B*Sv, Dw)
         ln_pair(V["ln_pre_g"], V["ln_pre_b"]),
         cls_sel]
        + stacked_blocks(V["blocks"])
        + [ln_pair(V["ln_post_g"], V["ln_post_b"]),
           V["proj"].astype(bf16)]
    )

    # ---- text encoder inputs (PromptLearner folded in) ----
    ctx = jnp.broadcast_to(PR["ctx"][None], (n_cls,) + PR["ctx"].shape)
    prompts = jnp.concatenate([PR["prefix"], ctx, PR["suffix"]], axis=1)      # (n_cls, Lt, Dt)
    t_x0 = (prompts + T["pos_emb"][None]).reshape(n_cls * Lt, Dt).astype(f32)
    eot = jnp.argmax(params["tokenized_prompts"], axis=-1)                    # (n_cls,)
    t_eot = jax.nn.one_hot(jnp.arange(n_cls) * Lt + eot, n_cls * Lt, dtype=f32)  # exact f32 selector
    text_inputs = (
        [t_x0]
        + stacked_blocks(T["blocks"])
        + [ln_pair(T["ln_final_g"], T["ln_final_b"]),
           t_eot,
           T["text_proj"].astype(bf16)]
    )

    meta = dict(layers=L, v_heads=int(params["vision_heads"]),
                t_heads=int(params["text_heads"]),
                batch=B, v_seq=Sv, n_cls=n_cls, t_seq=Lt,
                patch=ps, eps=1e-5)

    return dict(
        vision_inputs=vision_inputs,
        text_inputs=text_inputs,
        logit_scale_exp=jnp.exp(params["logit_scale"]).astype(f32).reshape(1),
        meta=meta,
    )


# ----------------------------- deterministic init -----------------------------

def build_params():
    key = jax.random.PRNGKey(0)
    keys = iter(jax.random.split(key, 256))

    def nrm(shape, std=0.02):
        return std * jax.random.normal(next(keys), shape, jnp.float32)

    def block_params(d):
        return dict(
            ln1_g=jnp.ones((d,), jnp.float32), ln1_b=jnp.zeros((d,), jnp.float32),
            attn_w_qkv=nrm((d, 3 * d)), attn_b_qkv=jnp.zeros((3 * d,), jnp.float32),
            attn_w_out=nrm((d, d)), attn_b_out=jnp.zeros((d,), jnp.float32),
            ln2_g=jnp.ones((d,), jnp.float32), ln2_b=jnp.zeros((d,), jnp.float32),
            mlp_w1=nrm((d, 4 * d)), mlp_b1=jnp.zeros((4 * d,), jnp.float32),
            mlp_w2=nrm((4 * d, d)), mlp_b2=jnp.zeros((d,), jnp.float32),
        )

    # ---- sizes (small, consistent with the module) ----
    B, C_in, H, W = 2, 3, 16, 16
    patch = 8
    width = 32          # vision transformer width
    d_t = 32            # text transformer width
    embed_dim = 32
    layers = 2
    n_cls, n_ctx, seq_len = 4, 4, 8
    heads = 2

    num_patches = (H // patch) * (W // patch)

    visual = dict(
        patch_size=patch,
        conv_w=nrm((C_in * patch * patch, width)),          # conv1, bias=False
        class_emb=nrm((width,)),
        pos_emb=nrm((1 + num_patches, width)),
        ln_pre_g=jnp.ones((width,), jnp.float32), ln_pre_b=jnp.zeros((width,), jnp.float32),
        blocks=[block_params(width) for _ in range(layers)],
        ln_post_g=jnp.ones((width,), jnp.float32), ln_post_b=jnp.zeros((width,), jnp.float32),
        proj=nrm((width, embed_dim)),
    )

    # PromptLearner pieces: [SOS] prefix, learnable ctx, class-name+EOT suffix embeddings
    prompt = dict(
        ctx=nrm((n_ctx, d_t)),
        prefix=nrm((n_cls, 1, d_t)),
        suffix=nrm((n_cls, seq_len - 1 - n_ctx, d_t)),
    )

    text = dict(
        pos_emb=nrm((seq_len, d_t)),
        blocks=[block_params(d_t) for _ in range(layers)],
        ln_final_g=jnp.ones((d_t,), jnp.float32), ln_final_b=jnp.zeros((d_t,), jnp.float32),
        text_proj=nrm((d_t, embed_dim)),
    )

    # tokenized prompts: [SOS, ctx..., name tokens..., EOT(max id), pad...]; argmax -> EOT pos
    name_lens = [1, 2, 1, 2]
    rows = []
    for c, nl in enumerate(name_lens):
        row = [49406] + [343] * n_ctx + [100 + c] * nl + [49407]
        row = row + [0] * (seq_len - len(row))
        rows.append(row[:seq_len])
    tokenized_prompts = jnp.asarray(rows, jnp.int32)

    return dict(
        visual=visual, prompt=prompt, text=text,
        tokenized_prompts=tokenized_prompts,
        logit_scale=jnp.asarray(math.log(1.0 / 0.07), jnp.float32),
        vision_heads=heads, text_heads=heads,
    ), (B, C_in, H, W)


# ----------------------------- main -----------------------------

if __name__ == "__main__":
    params, img_shape = build_params()
    prep = prepare_params(params, img_shape)
    image = jax.random.normal(jax.random.PRNGKey(0), img_shape, jnp.float32)  # NCHW

    fwd = jax.jit(lambda im: custom_clip_forward(im, prep))
    logits = jax.block_until_ready(fwd(image))

    assert logits.shape == (img_shape[0], params["tokenized_prompts"].shape[0])
    assert bool(jnp.all(jnp.isfinite(logits)))
    print("KERNEL_OK")
</pallas_src>

<mosaic_0001>
module attributes {stable_mosaic.version = 11 : i64} {
  func.func @_clip_kernel(%arg0: memref<10x192xf32, #tpu.memory_space<vmem>>, %arg1: memref<192x32xbf16, #tpu.memory_space<vmem>>, %arg2: memref<10x32xf32, #tpu.memory_space<vmem>>, %arg3: memref<2x32xf32, #tpu.memory_space<vmem>>, %arg4: memref<2x10xf32, #tpu.memory_space<vmem>>, %arg5: memref<2x2x32xf32, #tpu.memory_space<vmem>>, %arg6: memref<2x32x96xbf16, #tpu.memory_space<vmem>>, %arg7: memref<2x1x96xf32, #tpu.memory_space<vmem>>, %arg8: memref<2x32x32xbf16, #tpu.memory_space<vmem>>, %arg9: memref<2x1x32xf32, #tpu.memory_space<vmem>>, %arg10: memref<2x2x32xf32, #tpu.memory_space<vmem>>, %arg11: memref<2x32x128xbf16, #tpu.memory_space<vmem>>, %arg12: memref<2x1x128xf32, #tpu.memory_space<vmem>>, %arg13: memref<2x128x32xbf16, #tpu.memory_space<vmem>>, %arg14: memref<2x1x32xf32, #tpu.memory_space<vmem>>, %arg15: memref<2x32xf32, #tpu.memory_space<vmem>>, %arg16: memref<32x32xbf16, #tpu.memory_space<vmem>>, %arg17: memref<32x32xf32, #tpu.memory_space<vmem>>, %arg18: memref<2x2x32xf32, #tpu.memory_space<vmem>>, %arg19: memref<2x32x96xbf16, #tpu.memory_space<vmem>>, %arg20: memref<2x1x96xf32, #tpu.memory_space<vmem>>, %arg21: memref<2x32x32xbf16, #tpu.memory_space<vmem>>, %arg22: memref<2x1x32xf32, #tpu.memory_space<vmem>>, %arg23: memref<2x2x32xf32, #tpu.memory_space<vmem>>, %arg24: memref<2x32x128xbf16, #tpu.memory_space<vmem>>, %arg25: memref<2x1x128xf32, #tpu.memory_space<vmem>>, %arg26: memref<2x128x32xbf16, #tpu.memory_space<vmem>>, %arg27: memref<2x1x32xf32, #tpu.memory_space<vmem>>, %arg28: memref<2x32xf32, #tpu.memory_space<vmem>>, %arg29: memref<4x32xf32, #tpu.memory_space<vmem>>, %arg30: memref<32x32xbf16, #tpu.memory_space<vmem>>, %arg31: memref<1xf32, #tpu.memory_space<smem>>, %arg32: memref<2x4xf32, #tpu.memory_space<vmem>>) attributes {dimension_semantics = [], scalar_prefetch = 0 : i64, scratch_operands = 0 : i64, tpu.core_type = #tpu.core_type<tc>} {
    %0 = tpu.iota {dimensions = array<i32: 0>} : vector<10x10xi32>
    %1 = tpu.iota {dimensions = array<i32: 1>} : vector<10x10xi32>
    %2 = arith.sitofp %0 : vector<10x10xi32> to vector<10x10xf32>
    %cst = arith.constant 5.000000e+00 : f32
    %3 = vector.broadcast %cst : f32 to vector<10x10xf32>
    %4 = arith.divf %2, %3 : vector<10x10xf32>
    %5 = math.floor %4 : vector<10x10xf32>
    %6 = arith.sitofp %1 : vector<10x10xi32> to vector<10x10xf32>
    %cst_0 = arith.constant 5.000000e+00 : f32
    %7 = vector.broadcast %cst_0 : f32 to vector<10x10xf32>
    %8 = arith.divf %6, %7 : vector<10x10xf32>
    %9 = math.floor %8 : vector<10x10xf32>
    %10 = arith.cmpf oeq, %5, %9 : vector<10x10xf32>
    %cst_1 = arith.constant 0.000000e+00 : f32
    %cst_2 = arith.constant -1.000000e+30 : f32
    %11 = vector.broadcast %cst_1 : f32 to vector<10x10xf32>
    %12 = vector.broadcast %cst_2 : f32 to vector<10x10xf32>
    %13 = arith.select %10, %11, %12 : vector<10x10xi1>, vector<10x10xf32>
    %c0 = arith.constant 0 : index
    %c0_3 = arith.constant 0 : index
    %14 = vector.load %arg0[%c0, %c0_3] : memref<10x192xf32, #tpu.memory_space<vmem>>, vector<10x192xf32>
    %c0_4 = arith.constant 0 : index
    %c0_5 = arith.constant 0 : index
    %15 = vector.load %arg1[%c0_4, %c0_5] : memref<192x32xbf16, #tpu.memory_space<vmem>>, vector<192x32xbf16>
    %16 = arith.truncf %14 : vector<10x192xf32> to vector<10x192xbf16>
    %cst_6 = arith.constant dense<0.000000e+00> : vector<10x32xf32>
    %17 = tpu.matmul %16, %15, %cst_6 {dimension_numbers = #tpu.dot_dimension_numbers<[1], [0], [0], [1], [0, 0, 1, 1], [], []>} : vector<10x192xbf16>, vector<192x32xbf16>, vector<10x32xf32> -> vector<10x32xf32>
    %c0_7 = arith.constant 0 : index
    %c0_8 = arith.constant 0 : index
    %18 = vector.load %arg2[%c0_7, %c0_8] : memref<10x32xf32, #tpu.memory_space<vmem>>, vector<10x32xf32>
    %19 = arith.addf %17, %18 : vector<10x32xf32>
    %c0_9 = arith.constant 0 : index
    %c0_10 = arith.constant 0 : index
    %20 = vector.load %arg3[%c0_9, %c0_10] : memref<2x32xf32, #tpu.memory_space<vmem>>, vector<2x32xf32>
    %21 = vector.extract_strided_slice %20 {offsets = [0, 0], sizes = [1, 32], strides = [1, 1]} : vector<2x32xf32> to vector<1x32xf32>
    %22 = vector.extract_strided_slice %20 {offsets = [1, 0], sizes = [1, 32], strides = [1, 1]} : vector<2x32xf32> to vector<1x32xf32>
    %cst_11 = arith.constant dense<0.000000e+00> : vector<10xf32>
    %23 = vector.multi_reduction <add>, %19, %cst_11 [1] : vector<10x32xf32> to vector<10xf32>
    %24 = vector.shape_cast %23 : vector<10xf32> to vector<10x1xf32>
    %cst_12 = arith.constant 3.200000e+01 : f32
    %25 = vector.broadcast %cst_12 : f32 to vector<10x1xf32>
    %26 = arith.divf %24, %25 : vector<10x1xf32>
    %27 = vector.broadcast %26 : vector<10x1xf32> to vector<10x32xf32>
    %28 = arith.subf %19, %27 : vector<10x32xf32>
    %29 = arith.mulf %28, %28 : vector<10x32xf32>
    %cst_13 = arith.constant dense<0.000000e+00> : vector<10xf32>
    %30 = vector.multi_reduction <add>, %29, %cst_13 [1] : vector<10x32xf32> to vector<10xf32>
    %31 = vector.shape_cast %30 : vector<10xf32> to vector<10x1xf32>
    %cst_14 = arith.constant 3.200000e+01 : f32
    %32 = vector.broadcast %cst_14 : f32 to vector<10x1xf32>
    %33 = arith.divf %31, %32 : vector<10x1xf32>
    %34 = vector.broadcast %26 : vector<10x1xf32> to vector<10x32xf32>
    %35 = arith.subf %19, %34 : vector<10x32xf32>
    %cst_15 = arith.constant 9.99999974E-6 : f32
    %36 = vector.broadcast %cst_15 : f32 to vector<10x1xf32>
    %37 = arith.addf %33, %36 : vector<10x1xf32>
    %38 = math.rsqrt %37 : vector<10x1xf32>
    %39 = vector.broadcast %38 : vector<10x1xf32> to vector<10x32xf32>
    %40 = arith.mulf %35, %39 : vector<10x32xf32>
    %41 = vector.broadcast %21 : vector<1x32xf32> to vector<10x32xf32>
    %42 = arith.mulf %40, %41 : vector<10x32xf32>
    %43 = vector.broadcast %22 : vector<1x32xf32> to vector<10x32xf32>
    %44 = arith.addf %42, %43 : vector<10x32xf32>
    %c0_16 = arith.constant 0 : index
    %c0_17 = arith.constant 0 : index
    %c0_18 = arith.constant 0 : index
    %45 = vector.load %arg5[%c0_16, %c0_17, %c0_18] : memref<2x2x32xf32, #tpu.memory_space<vmem>>, vector<1x2x32xf32>
    %46 = vector.shape_cast %45 : vector<1x2x32xf32> to vector<2x32xf32>
    %c0_19 = arith.constant 0 : index
    %c0_20 = arith.constant 0 : index
    %c0_21 = arith.constant 0 : index
    %47 = vector.load %arg6[%c0_19, %c0_20, %c0_21] : memref<2x32x96xbf16, #tpu.memory_space<vmem>>, vector<1x32x96xbf16>
    %48 = vector.shape_cast %47 : vector<1x32x96xbf16> to vector<32x96xbf16>
    %c0_22 = arith.constant 0 : index
    %c0_23 = arith.constant 0 : index
    %c0_24 = arith.constant 0 : index
    %49 = vector.load %arg7[%c0_22, %c0_23, %c0_24] : memref<2x1x96xf32, #tpu.memory_space<vmem>>, vector<1x1x96xf32>
    %50 = vector.shape_cast %49 : vector<1x1x96xf32> to vector<1x96xf32>
    %c0_25 = arith.constant 0 : index
    %c0_26 = arith.constant 0 : index
    %c0_27 = arith.constant 0 : index
    %51 = vector.load %arg8[%c0_25, %c0_26, %c0_27] : memref<2x32x32xbf16, #tpu.memory_space<vmem>>, vector<1x32x32xbf16>
    %52 = vector.shape_cast %51 : vector<1x32x32xbf16> to vector<32x32xbf16>
    %c0_28 = arith.constant 0 : index
    %c0_29 = arith.constant 0 : index
    %c0_30 = arith.constant 0 : index
    %53 = vector.load %arg9[%c0_28, %c0_29, %c0_30] : memref<2x1x32xf32, #tpu.memory_space<vmem>>, vector<1x1x32xf32>
    %54 = vector.shape_cast %53 : vector<1x1x32xf32> to vector<1x32xf32>
    %c0_31 = arith.constant 0 : index
    %c0_32 = arith.constant 0 : index
    %c0_33 = arith.constant 0 : index
    %55 = vector.load %arg10[%c0_31, %c0_32, %c0_33] : memref<2x2x32xf32, #tpu.memory_space<vmem>>, vector<1x2x32xf32>
    %56 = vector.shape_cast %55 : vector<1x2x32xf32> to vector<2x32xf32>
    %c0_34 = arith.constant 0 : index
    %c0_35 = arith.constant 0 : index
    %c0_36 = arith.constant 0 : index
    %57 = vector.load %arg11[%c0_34, %c0_35, %c0_36] : memref<2x32x128xbf16, #tpu.memory_space<vmem>>, vector<1x32x128xbf16>
    %58 = vector.shape_cast %57 : vector<1x32x128xbf16> to vector<32x128xbf16>
    %c0_37 = arith.constant 0 : index
    %c0_38 = arith.constant 0 : index
    %c0_39 = arith.constant 0 : index
    %59 = vector.load %arg12[%c0_37, %c0_38, %c0_39] : memref<2x1x128xf32, #tpu.memory_space<vmem>>, vector<1x1x128xf32>
    %60 = vector.shape_cast %59 : vector<1x1x128xf32> to vector<1x128xf32>
    %c0_40 = arith.constant 0 : index
    %c0_41 = arith.constant 0 : index
    %c0_42 = arith.constant 0 : index
    %61 = vector.load %arg13[%c0_40, %c0_41, %c0_42] : memref<2x128x32xbf16, #tpu.memory_space<vmem>>, vector<1x128x32xbf16>
    %62 = vector.shape_cast %61 : vector<1x128x32xbf16> to vector<128x32xbf16>
    %c0_43 = arith.constant 0 : index
    %c0_44 = arith.constant 0 : index
    %c0_45 = arith.constant 0 : index
    %63 = vector.load %arg14[%c0_43, %c0_44, %c0_45] : memref<2x1x32xf32, #tpu.memory_space<vmem>>, vector<1x1x32xf32>
    %64 = vector.shape_cast %63 : vector<1x1x32xf32> to vector<1x32xf32>
    %65 = vector.extract_strided_slice %46 {offsets = [0, 0], sizes = [1, 32], strides = [1, 1]} : vector<2x32xf32> to vector<1x32xf32>
    %66 = vector.extract_strided_slice %46 {offsets = [1, 0], sizes = [1, 32], strides = [1, 1]} : vector<2x32xf32> to vector<1x32xf32>
    %cst_46 = arith.constant dense<0.000000e+00> : vector<10xf32>
    %67 = vector.multi_reduction <add>, %44, %cst_46 [1] : vector<10x32xf32> to vector<10xf32>
    %68 = vector.shape_cast %67 : vector<10xf32> to vector<10x1xf32>
    %cst_47 = arith.constant 3.200000e+01 : f32
    %69 = vector.broadcast %cst_47 : f32 to vector<10x1xf32>
    %70 = arith.divf %68, %69 : vector<10x1xf32>
    %71 = vector.broadcast %70 : vector<10x1xf32> to vector<10x32xf32>
    %72 = arith.subf %44, %71 : vector<10x32xf32>
    %73 = arith.mulf %72, %72 : vector<10x32xf32>
    %cst_48 = arith.constant dense<0.000000e+00> : vector<10xf32>
    %74 = vector.multi_reduction <add>, %73, %cst_48 [1] : vector<10x32xf32> to vector<10xf32>
    %75 = vector.shape_cast %74 : vector<10xf32> to vector<10x1xf32>
    %cst_49 = arith.constant 3.200000e+01 : f32
    %76 = vector.broadcast %cst_49 : f32 to vector<10x1xf32>
    %77 = arith.divf %75, %76 : vector<10x1xf32>
    %78 = vector.broadcast %70 : vector<10x1xf32> to vector<10x32xf32>
    %79 = arith.subf %44, %78 : vector<10x32xf32>
    %cst_50 = arith.constant 9.99999974E-6 : f32
    %80 = vector.broadcast %cst_50 : f32 to vector<10x1xf32>
    %81 = arith.addf %77, %80 : vector<10x1xf32>
    %82 = math.rsqrt %81 : vector<10x1xf32>
    %83 = vector.broadcast %82 : vector<10x1xf32> to vector<10x32xf32>
    %84 = arith.mulf %79, %83 : vector<10x32xf32>
    %85 = vector.broadcast %65 : vector<1x32xf32> to vector<10x32xf32>
    %86 = arith.mulf %84, %85 : vector<10x32xf32>
    %87 = vector.broadcast %66 : vector<1x32xf32> to vector<10x32xf32>
    %88 = arith.addf %86, %87 : vector<10x32xf32>
    %89 = arith.truncf %88 : vector<10x32xf32> to vector<10x32xbf16>
    %cst_51 = arith.constant dense<0.000000e+00> : vector<10x96xf32>
    %90 = tpu.matmul %89, %48, %cst_51 {dimension_numbers = #tpu.dot_dimension_numbers<[1], [0], [0], [1], [0, 0, 1, 1], [], []>} : vector<10x32xbf16>, vector<32x96xbf16>, vector<10x96xf32> -> vector<10x96xf32>
    %91 = vector.broadcast %50 : vector<1x96xf32> to vector<10x96xf32>
    %92 = arith.addf %90, %91 : vector<10x96xf32>
    %93 = vector.extract_strided_slice %92 {offsets = [0, 0], sizes = [10, 16], strides = [1, 1]} : vector<10x96xf32> to vector<10x16xf32>
    %94 = vector.extract_strided_slice %92 {offsets = [0, 32], sizes = [10, 16], strides = [1, 1]} : vector<10x96xf32> to vector<10x16xf32>
    %95 = vector.extract_strided_slice %92 {offsets = [0, 64], sizes = [10, 16], strides = [1, 1]} : vector<10x96xf32> to vector<10x16xf32>
    %96 = arith.truncf %93 : vector<10x16xf32> to vector<10x16xbf16>
    %97 = arith.truncf %94 : vector<10x16xf32> to vector<10x16xbf16>
    %cst_52 = arith.constant dense<0.000000e+00> : vector<10x10xf32>
    %98 = tpu.matmul %96, %97, %cst_52 {dimension_numbers = #tpu.dot_dimension_numbers<[1], [1], [0], [0], [0, 0, 1, 0], [], []>} : vector<10x16xbf16>, vector<10x16xbf16>, vector<10x10xf32> -> vector<10x10xf32>
    %cst_53 = arith.constant 2.500000e-01 : f32
    %99 = vector.broadcast %cst_53 : f32 to vector<10x10xf32>
    %100 = arith.mulf %98, %99 : vector<10x10xf32>
    %101 = arith.addf %100, %13 : vector<10x10xf32>
    %cst_54 = arith.constant dense<0xFF800000> : vector<10xf32>
    %102 = vector.multi_reduction <maximumf>, %101, %cst_54 [1] : vector<10x10xf32> to vector<10xf32>
    %103 = vector.shape_cast %102 : vector<10xf32> to vector<10x1xf32>
    %104 = vector.broadcast %103 : vector<10x1xf32> to vector<10x10xf32>
    %105 = arith.subf %101, %104 : vector<10x10xf32>
    %106 = math.exp %105 : vector<10x10xf32>
    %cst_55 = arith.constant dense<0.000000e+00> : vector<10xf32>
    %107 = vector.multi_reduction <add>, %106, %cst_55 [1] : vector<10x10xf32> to vector<10xf32>
    %108 = vector.shape_cast %107 : vector<10xf32> to vector<10x1xf32>
    %109 = tpu.reciprocal %108 {approx = true} : vector<10x1xf32> -> vector<10x1xf32>
    %110 = vector.broadcast %109 : vector<10x1xf32> to vector<10x10xf32>
    %111 = arith.mulf %106, %110 : vector<10x10xf32>
    %112 = arith.truncf %111 : vector<10x10xf32> to vector<10x10xbf16>
    %113 = arith.truncf %95 : vector<10x16xf32> to vector<10x16xbf16>
    %cst_56 = arith.constant dense<0.000000e+00> : vector<10x16xf32>
    %114 = tpu.matmul %112, %113, %cst_56 {dimension_numbers = #tpu.dot_dimension_numbers<[1], [0], [0], [1], [0, 0, 1, 1], [], []>} : vector<10x10xbf16>, vector<10x16xbf16>, vector<10x16xf32> -> vector<10x16xf32>
    %115 = vector.extract_strided_slice %92 {offsets = [0, 16], sizes = [10, 16], strides = [1, 1]} : vector<10x96xf32> to vector<10x16xf32>
    %116 = vector.extract_strided_slice %92 {offsets = [0, 48], sizes = [10, 16], strides = [1, 1]} : vector<10x96xf32> to vector<10x16xf32>
    %117 = vector.extract_strided_slice %92 {offsets = [0, 80], sizes = [10, 16], strides = [1, 1]} : vector<10x96xf32> to vector<10x16xf32>
    %118 = arith.truncf %115 : vector<10x16xf32> to vector<10x16xbf16>
    %119 = arith.truncf %116 : vector<10x16xf32> to vector<10x16xbf16>
    %cst_57 = arith.constant dense<0.000000e+00> : vector<10x10xf32>
    %120 = tpu.matmul %118, %119, %cst_57 {dimension_numbers = #tpu.dot_dimension_numbers<[1], [1], [0], [0], [0, 0, 1, 0], [], []>} : vector<10x16xbf16>, vector<10x16xbf16>, vector<10x10xf32> -> vector<10x10xf32>
    %cst_58 = arith.constant 2.500000e-01 : f32
    %121 = vector.broadcast %cst_58 : f32 to vector<10x10xf32>
    %122 = arith.mulf %120, %121 : vector<10x10xf32>
    %123 = arith.addf %122, %13 : vector<10x10xf32>
    %cst_59 = arith.constant dense<0xFF800000> : vector<10xf32>
    %124 = vector.multi_reduction <maximumf>, %123, %cst_59 [1] : vector<10x10xf32> to vector<10xf32>
    %125 = vector.shape_cast %124 : vector<10xf32> to vector<10x1xf32>
    %126 = vector.broadcast %125 : vector<10x1xf32> to vector<10x10xf32>
    %127 = arith.subf %123, %126 : vector<10x10xf32>
    %128 = math.exp %127 : vector<10x10xf32>
    %cst_60 = arith.constant dense<0.000000e+00> : vector<10xf32>
    %129 = vector.multi_reduction <add>, %128, %cst_60 [1] : vector<10x10xf32> to vector<10xf32>
    %130 = vector.shape_cast %129 : vector<10xf32> to vector<10x1xf32>
    %131 = tpu.reciprocal %130 {approx = true} : vector<10x1xf32> -> vector<10x1xf32>
    %132 = vector.broadcast %131 : vector<10x1xf32> to vector<10x10xf32>
    %133 = arith.mulf %128, %132 : vector<10x10xf32>
    %134 = arith.truncf %133 : vector<10x10xf32> to vector<10x10xbf16>
    %135 = arith.truncf %117 : vector<10x16xf32> to vector<10x16xbf16>
    %cst_61 = arith.constant dense<0.000000e+00> : vector<10x16xf32>
    %136 = tpu.matmul %134, %135, %cst_61 {dimension_numbers = #tpu.dot_dimension_numbers<[1], [0], [0], [1], [0, 0, 1, 1], [], []>} : vector<10x10xbf16>, vector<10x16xbf16>, vector<10x16xf32> -> vector<10x16xf32>
    %137 = tpu.concatenate %114, %136 in 1 : vector<10x16xf32>, vector<10x16xf32> -> vector<10x32xf32>
    %138 = arith.truncf %137 : vector<10x32xf32> to vector<10x32xbf16>
    %cst_62 = arith.constant dense<0.000000e+00> : vector<10x32xf32>
    %139 = tpu.matmul %138, %52, %cst_62 {dimension_numbers = #tpu.dot_dimension_numbers<[1], [0], [0], [1], [0, 0, 1, 1], [], []>} : vector<10x32xbf16>, vector<32x32xbf16>, vector<10x32xf32> -> vector<10x32xf32>
    %140 = arith.addf %44, %139 : vector<10x32xf32>
    %141 = vector.broadcast %54 : vector<1x32xf32> to vector<10x32xf32>
    %142 = arith.addf %140, %141 : vector<10x32xf32>
    %143 = vector.extract_strided_slice %56 {offsets = [0, 0], sizes = [1, 32], strides = [1, 1]} : vector<2x32xf32> to vector<1x32xf32>
    %144 = vector.extract_strided_slice %56 {offsets = [1, 0], sizes = [1, 32], strides = [1, 1]} : vector<2x32xf32> to vector<1x32xf32>
    %cst_63 = arith.constant dense<0.000000e+00> : vector<10xf32>
    %145 = vector.multi_reduction <add>, %142, %cst_63 [1] : vector<10x32xf32> to vector<10xf32>
    %146 = vector.shape_cast %145 : vector<10xf32> to vector<10x1xf32>
    %cst_64 = arith.constant 3.200000e+01 : f32
    %147 = vector.broadcast %cst_64 : f32 to vector<10x1xf32>
    %148 = arith.divf %146, %147 : vector<10x1xf32>
    %149 = vector.broadcast %148 : vector<10x1xf32> to vector<10x32xf32>
    %150 = arith.subf %142, %149 : vector<10x32xf32>
    %151 = arith.mulf %150, %150 : vector<10x32xf32>
    %cst_65 = arith.constant dense<0.000000e+00> : vector<10xf32>
    %152 = vector.multi_reduction <add>, %151, %cst_65 [1] : vector<10x32xf32> to vector<10xf32>
    %153 = vector.shape_cast %152 : vector<10xf32> to vector<10x1xf32>
    %cst_66 = arith.constant 3.200000e+01 : f32
    %154 = vector.broadcast %cst_66 : f32 to vector<10x1xf32>
    %155 = arith.divf %153, %154 : vector<10x1xf32>
    %156 = vector.broadcast %148 : vector<10x1xf32> to vector<10x32xf32>
    %157 = arith.subf %142, %156 : vector<10x32xf32>
    %cst_67 = arith.constant 9.99999974E-6 : f32
    %158 = vector.broadcast %cst_67 : f32 to vector<10x1xf32>
    %159 = arith.addf %155, %158 : vector<10x1xf32>
    %160 = math.rsqrt %159 : vector<10x1xf32>
    %161 = vector.broadcast %160 : vector<10x1xf32> to vector<10x32xf32>
    %162 = arith.mulf %157, %161 : vector<10x32xf32>
    %163 = vector.broadcast %143 : vector<1x32xf32> to vector<10x32xf32>
    %164 = arith.mulf %162, %163 : vector<10x32xf32>
    %165 = vector.broadcast %144 : vector<1x32xf32> to vector<10x32xf32>
    %166 = arith.addf %164, %165 : vector<10x32xf32>
    %167 = arith.truncf %166 : vector<10x32xf32> to vector<10x32xbf16>
    %cst_68 = arith.constant dense<0.000000e+00> : vector<10x128xf32>
    %168 = tpu.matmul %167, %58, %cst_68 {dimension_numbers = #tpu.dot_dimension_numbers<[1], [0], [0], [1], [0, 0, 1, 1], [], []>} : vector<10x32xbf16>, vector<32x128xbf16>, vector<10x128xf32> -> vector<10x128xf32>
    %169 = vector.broadcast %60 : vector<1x128xf32> to vector<10x128xf32>
    %170 = arith.addf %168, %169 : vector<10x128xf32>
    %cst_69 = arith.constant 1.702000e+00 : f32
    %171 = vector.broadcast %cst_69 : f32 to vector<10x128xf32>
    %172 = arith.mulf %171, %170 : vector<10x128xf32>
    %173 = arith.negf %172 : vector<10x128xf32>
    %174 = math.exp %173 : vector<10x128xf32>
    %cst_70 = arith.constant 1.000000e+00 : f32
    %175 = vector.broadcast %cst_70 : f32 to vector<10x128xf32>
    %176 = arith.addf %175, %174 : vector<10x128xf32>
    %177 = arith.divf %175, %176 : vector<10x128xf32>
    %178 = arith.mulf %170, %177 : vector<10x128xf32>
    %179 = arith.truncf %178 : vector<10x128xf32> to vector<10x128xbf16>
    %cst_71 = arith.constant dense<0.000000e+00> : vector<10x32xf32>
    %180 = tpu.matmul %179, %62, %cst_71 {dimension_numbers = #tpu.dot_dimension_numbers<[1], [0], [0], [1], [0, 0, 1, 1], [], []>} : vector<10x128xbf16>, vector<128x32xbf16>, vector<10x32xf32> -> vector<10x32xf32>
    %181 = arith.addf %142, %180 : vector<10x32xf32>
    %182 = vector.broadcast %64 : vector<1x32xf32> to vector<10x32xf32>
    %183 = arith.addf %181, %182 : vector<10x32xf32>
    %c1 = arith.constant 1 : index
    %c0_72 = arith.constant 0 : index
    %c0_73 = arith.constant 0 : index
    %184 = vector.load %arg5[%c1, %c0_72, %c0_73] : memref<2x2x32xf32, #tpu.memory_space<vmem>>, vector<1x2x32xf32>
    %185 = vector.shape_cast %184 : vector<1x2x32xf32> to vector<2x32xf32>
    %c1_74 = arith.constant 1 : index
    %c0_75 = arith.constant 0 : index
    %c0_76 = arith.constant 0 : index
    %186 = vector.load %arg6[%c1_74, %c0_75, %c0_76] : memref<2x32x96xbf16, #tpu.memory_space<vmem>>, vector<1x32x96xbf16>
    %187 = vector.shape_cast %186 : vector<1x32x96xbf16> to vector<32x96xbf16>
    %c1_77 = arith.constant 1 : index
    %c0_78 = arith.constant 0 : index
    %c0_79 = arith.constant 0 : index
    %188 = vector.load %arg7[%c1_77, %c0_78, %c0_79] : memref<2x1x96xf32, #tpu.memory_space<vmem>>, vector<1x1x96xf32>
    %189 = vector.shape_cast %188 : vector<1x1x96xf32> to vector<1x96xf32>
    %c1_80 = arith.constant 1 : index
    %c0_81 = arith.constant 0 : index
    %c0_82 = arith.constant 0 : index
    %190 = vector.load %arg8[%c1_80, %c0_81, %c0_82] : memref<2x32x32xbf16, #tpu.memory_space<vmem>>, vector<1x32x32xbf16>
    %191 = vector.shape_cast %190 : vector<1x32x32xbf16> to vector<32x32xbf16>
    %c1_83 = arith.constant 1 : index
    %c0_84 = arith.constant 0 : index
    %c0_85 = arith.constant 0 : index
    %192 = vector.load %arg9[%c1_83, %c0_84, %c0_85] : memref<2x1x32xf32, #tpu.memory_space<vmem>>, vector<1x1x32xf32>
    %193 = vector.shape_cast %192 : vector<1x1x32xf32> to vector<1x32xf32>
    %c1_86 = arith.constant 1 : index
    %c0_87 = arith.constant 0 : index
    %c0_88 = arith.constant 0 : index
    %194 = vector.load %arg10[%c1_86, %c0_87, %c0_88] : memref<2x2x32xf32, #tpu.memory_space<vmem>>, vector<1x2x32xf32>
    %195 = vector.shape_cast %194 : vector<1x2x32xf32> to vector<2x32xf32>
    %c1_89 = arith.constant 1 : index
    %c0_90 = arith.constant 0 : index
    %c0_91 = arith.constant 0 : index
    %196 = vector.load %arg11[%c1_89, %c0_90, %c0_91] : memref<2x32x128xbf16, #tpu.memory_space<vmem>>, vector<1x32x128xbf16>
    %197 = vector.shape_cast %196 : vector<1x32x128xbf16> to vector<32x128xbf16>
    %c1_92 = arith.constant 1 : index
    %c0_93 = arith.constant 0 : index
    %c0_94 = arith.constant 0 : index
    %198 = vector.load %arg12[%c1_92, %c0_93, %c0_94] : memref<2x1x128xf32, #tpu.memory_space<vmem>>, vector<1x1x128xf32>
    %199 = vector.shape_cast %198 : vector<1x1x128xf32> to vector<1x128xf32>
    %c1_95 = arith.constant 1 : index
    %c0_96 = arith.constant 0 : index
    %c0_97 = arith.constant 0 : index
    %200 = vector.load %arg13[%c1_95, %c0_96, %c0_97] : memref<2x128x32xbf16, #tpu.memory_space<vmem>>, vector<1x128x32xbf16>
    %201 = vector.shape_cast %200 : vector<1x128x32xbf16> to vector<128x32xbf16>
    %c1_98 = arith.constant 1 : index
    %c0_99 = arith.constant 0 : index
    %c0_100 = arith.constant 0 : index
    %202 = vector.load %arg14[%c1_98, %c0_99, %c0_100] : memref<2x1x32xf32, #tpu.memory_space<vmem>>, vector<1x1x32xf32>
    %203 = vector.shape_cast %202 : vector<1x1x32xf32> to vector<1x32xf32>
    %204 = vector.extract_strided_slice %185 {offsets = [0, 0], sizes = [1, 32], strides = [1, 1]} : vector<2x32xf32> to vector<1x32xf32>
    %205 = vector.extract_strided_slice %185 {offsets = [1, 0], sizes = [1, 32], strides = [1, 1]} : vector<2x32xf32> to vector<1x32xf32>
    %cst_101 = arith.constant dense<0.000000e+00> : vector<10xf32>
    %206 = vector.multi_reduction <add>, %183, %cst_101 [1] : vector<10x32xf32> to vector<10xf32>
    %207 = vector.shape_cast %206 : vector<10xf32> to vector<10x1xf32>
    %cst_102 = arith.constant 3.200000e+01 : f32
    %208 = vector.broadcast %cst_102 : f32 to vector<10x1xf32>
    %209 = arith.divf %207, %208 : vector<10x1xf32>
    %210 = vector.broadcast %209 : vector<10x1xf32> to vector<10x32xf32>
    %211 = arith.subf %183, %210 : vector<10x32xf32>
    %212 = arith.mulf %211, %211 : vector<10x32xf32>
    %cst_103 = arith.constant dense<0.000000e+00> : vector<10xf32>
    %213 = vector.multi_reduction <add>, %212, %cst_103 [1] : vector<10x32xf32> to vector<10xf32>
    %214 = vector.shape_cast %213 : vector<10xf32> to vector<10x1xf32>
    %cst_104 = arith.constant 3.200000e+01 : f32
    %215 = vector.broadcast %cst_104 : f32 to vector<10x1xf32>
    %216 = arith.divf %214, %215 : vector<10x1xf32>
    %217 = vector.broadcast %209 : vector<10x1xf32> to vector<10x32xf32>
    %218 = arith.subf %183, %217 : vector<10x32xf32>
    %cst_105 = arith.constant 9.99999974E-6 : f32
    %219 = vector.broadcast %cst_105 : f32 to vector<10x1xf32>
    %220 = arith.addf %216, %219 : vector<10x1xf32>
    %221 = math.rsqrt %220 : vector<10x1xf32>
    %222 = vector.broadcast %221 : vector<10x1xf32> to vector<10x32xf32>
    %223 = arith.mulf %218, %222 : vector<10x32xf32>
    %224 = vector.broadcast %204 : vector<1x32xf32> to vector<10x32xf32>
    %225 = arith.mulf %223, %224 : vector<10x32xf32>
    %226 = vector.broadcast %205 : vector<1x32xf32> to vector<10x32xf32>
    %227 = arith.addf %225, %226 : vector<10x32xf32>
    %228 = arith.truncf %227 : vector<10x32xf32> to vector<10x32xbf16>
    %cst_106 = arith.constant dense<0.000000e+00> : vector<10x96xf32>
    %229 = tpu.matmul %228, %187, %cst_106 {dimension_numbers = #tpu.dot_dimension_numbers<[1], [0], [0], [1], [0, 0, 1, 1], [], []>} : vector<10x32xbf16>, vector<32x96xbf16>, vector<10x96xf32> -> vector<10x96xf32>
    %230 = vector.broadcast %189 : vector<1x96xf32> to vector<10x96xf32>
    %231 = arith.addf %229, %230 : vector<10x96xf32>
    %232 = vector.extract_strided_slice %231 {offsets = [0, 0], sizes = [10, 16], strides = [1, 1]} : vector<10x96xf32> to vector<10x16xf32>
    %233 = vector.extract_strided_slice %231 {offsets = [0, 32], sizes = [10, 16], strides = [1, 1]} : vector<10x96xf32> to vector<10x16xf32>
    %234 = vector.extract_strided_slice %231 {offsets = [0, 64], sizes = [10, 16], strides = [1, 1]} : vector<10x96xf32> to vector<10x16xf32>
    %235 = arith.truncf %232 : vector<10x16xf32> to vector<10x16xbf16>
    %236 = arith.truncf %233 : vector<10x16xf32> to vector<10x16xbf16>
    %cst_107 = arith.constant dense<0.000000e+00> : vector<10x10xf32>
    %237 = tpu.matmul %235, %236, %cst_107 {dimension_numbers = #tpu.dot_dimension_numbers<[1], [1], [0], [0], [0, 0, 1, 0], [], []>} : vector<10x16xbf16>, vector<10x16xbf16>, vector<10x10xf32> -> vector<10x10xf32>
    %cst_108 = arith.constant 2.500000e-01 : f32
    %238 = vector.broadcast %cst_108 : f32 to vector<10x10xf32>
    %239 = arith.mulf %237, %238 : vector<10x10xf32>
    %240 = arith.addf %239, %13 : vector<10x10xf32>
    %cst_109 = arith.constant dense<0xFF800000> : vector<10xf32>
    %241 = vector.multi_reduction <maximumf>, %240, %cst_109 [1] : vector<10x10xf32> to vector<10xf32>
    %242 = vector.shape_cast %241 : vector<10xf32> to vector<10x1xf32>
    %243 = vector.broadcast %242 : vector<10x1xf32> to vector<10x10xf32>
    %244 = arith.subf %240, %243 : vector<10x10xf32>
    %245 = math.exp %244 : vector<10x10xf32>
    %cst_110 = arith.constant dense<0.000000e+00> : vector<10xf32>
    %246 = vector.multi_reduction <add>, %245, %cst_110 [1] : vector<10x10xf32> to vector<10xf32>
    %247 = vector.shape_cast %246 : vector<10xf32> to vector<10x1xf32>
    %248 = tpu.reciprocal %247 {approx = true} : vector<10x1xf32> -> vector<10x1xf32>
    %249 = vector.broadcast %248 : vector<10x1xf32> to vector<10x10xf32>
    %250 = arith.mulf %245, %249 : vector<10x10xf32>
    %251 = arith.truncf %250 : vector<10x10xf32> to vector<10x10xbf16>
    %252 = arith.truncf %234 : vector<10x16xf32> to vector<10x16xbf16>
    %cst_111 = arith.constant dense<0.000000e+00> : vector<10x16xf32>
    %253 = tpu.matmul %251, %252, %cst_111 {dimension_numbers = #tpu.dot_dimension_numbers<[1], [0], [0], [1], [0, 0, 1, 1], [], []>} : vector<10x10xbf16>, vector<10x16xbf16>, vector<10x16xf32> -> vector<10x16xf32>
    %254 = vector.extract_strided_slice %231 {offsets = [0, 16], sizes = [10, 16], strides = [1, 1]} : vector<10x96xf32> to vector<10x16xf32>
    %255 = vector.extract_strided_slice %231 {offsets = [0, 48], sizes = [10, 16], strides = [1, 1]} : vector<10x96xf32> to vector<10x16xf32>
    %256 = vector.extract_strided_slice %231 {offsets = [0, 80], sizes = [10, 16], strides = [1, 1]} : vector<10x96xf32> to vector<10x16xf32>
    %257 = arith.truncf %254 : vector<10x16xf32> to vector<10x16xbf16>
    %258 = arith.truncf %255 : vector<10x16xf32> to vector<10x16xbf16>
    %cst_112 = arith.constant dense<0.000000e+00> : vector<10x10xf32>
    %259 = tpu.matmul %257, %258, %cst_112 {dimension_numbers = #tpu.dot_dimension_numbers<[1], [1], [0], [0], [0, 0, 1, 0], [], []>} : vector<10x16xbf16>, vector<10x16xbf16>, vector<10x10xf32> -> vector<10x10xf32>
    %cst_113 = arith.constant 2.500000e-01 : f32
    %260 = vector.broadcast %cst_113 : f32 to vector<10x10xf32>
    %261 = arith.mulf %259, %260 : vector<10x10xf32>
    %262 = arith.addf %261, %13 : vector<10x10xf32>
    %cst_114 = arith.constant dense<0xFF800000> : vector<10xf32>
    %263 = vector.multi_reduction <maximumf>, %262, %cst_114 [1] : vector<10x10xf32> to vector<10xf32>
    %264 = vector.shape_cast %263 : vector<10xf32> to vector<10x1xf32>
    %265 = vector.broadcast %264 : vector<10x1xf32> to vector<10x10xf32>
    %266 = arith.subf %262, %265 : vector<10x10xf32>
    %267 = math.exp %266 : vector<10x10xf32>
    %cst_115 = arith.constant dense<0.000000e+00> : vector<10xf32>
    %268 = vector.multi_reduction <add>, %267, %cst_115 [1] : vector<10x10xf32> to vector<10xf32>
    %269 = vector.shape_cast %268 : vector<10xf32> to vector<10x1xf32>
    %270 = tpu.reciprocal %269 {approx = true} : vector<10x1xf32> -> vector<10x1xf32>
    %271 = vector.broadcast %270 : vector<10x1xf32> to vector<10x10xf32>
    %272 = arith.mulf %267, %271 : vector<10x10xf32>
    %273 = arith.truncf %272 : vector<10x10xf32> to vector<10x10xbf16>
    %274 = arith.truncf %256 : vector<10x16xf32> to vector<10x16xbf16>
    %cst_116 = arith.constant dense<0.000000e+00> : vector<10x16xf32>
    %275 = tpu.matmul %273, %274, %cst_116 {dimension_numbers = #tpu.dot_dimension_numbers<[1], [0], [0], [1], [0, 0, 1, 1], [], []>} : vector<10x10xbf16>, vector<10x16xbf16>, vector<10x16xf32> -> vector<10x16xf32>
    %276 = tpu.concatenate %253, %275 in 1 : vector<10x16xf32>, vector<10x16xf32> -> vector<10x32xf32>
    %277 = arith.truncf %276 : vector<10x32xf32> to vector<10x32xbf16>
    %cst_117 = arith.constant dense<0.000000e+00> : vector<10x32xf32>
    %278 = tpu.matmul %277, %191, %cst_117 {dimension_numbers = #tpu.dot_dimension_numbers<[1], [0], [0], [1], [0, 0, 1, 1], [], []>} : vector<10x32xbf16>, vector<32x32xbf16>, vector<10x32xf32> -> vector<10x32xf32>
    %279 = arith.addf %183, %278 : vector<10x32xf32>
    %280 = vector.broadcast %193 : vector<1x32xf32> to vector<10x32xf32>
    %281 = arith.addf %279, %280 : vector<10x32xf32>
    %282 = vector.extract_strided_slice %195 {offsets = [0, 0], sizes = [1, 32], strides = [1, 1]} : vector<2x32xf32> to vector<1x32xf32>
    %283 = vector.extract_strided_slice %195 {offsets = [1, 0], sizes = [1, 32], strides = [1, 1]} : vector<2x32xf32> to vector<1x32xf32>
    %cst_118 = arith.constant dense<0.000000e+00> : vector<10xf32>
    %284 = vector.multi_reduction <add>, %281, %cst_118 [1] : vector<10x32xf32> to vector<10xf32>
    %285 = vector.shape_cast %284 : vector<10xf32> to vector<10x1xf32>
    %cst_119 = arith.constant 3.200000e+01 : f32
    %286 = vector.broadcast %cst_119 : f32 to vector<10x1xf32>
    %287 = arith.divf %285, %286 : vector<10x1xf32>
    %288 = vector.broadcast %287 : vector<10x1xf32> to vector<10x32xf32>
    %289 = arith.subf %281, %288 : vector<10x32xf32>
    %290 = arith.mulf %289, %289 : vector<10x32xf32>
    %cst_120 = arith.constant dense<0.000000e+00> : vector<10xf32>
    %291 = vector.multi_reduction <add>, %290, %cst_120 [1] : vector<10x32xf32> to vector<10xf32>
    %292 = vector.shape_cast %291 : vector<10xf32> to vector<10x1xf32>
    %cst_121 = arith.constant 3.200000e+01 : f32
    %293 = vector.broadcast %cst_121 : f32 to vector<10x1xf32>
    %294 = arith.divf %292, %293 : vector<10x1xf32>
    %295 = vector.broadcast %287 : vector<10x1xf32> to vector<10x32xf32>
    %296 = arith.subf %281, %295 : vector<10x32xf32>
    %cst_122 = arith.constant 9.99999974E-6 : f32
    %297 = vector.broadcast %cst_122 : f32 to vector<10x1xf32>
    %298 = arith.addf %294, %297 : vector<10x1xf32>
    %299 = math.rsqrt %298 : vector<10x1xf32>
    %300 = vector.broadcast %299 : vector<10x1xf32> to vector<10x32xf32>
    %301 = arith.mulf %296, %300 : vector<10x32xf32>
    %302 = vector.broadcast %282 : vector<1x32xf32> to vector<10x32xf32>
    %303 = arith.mulf %301, %302 : vector<10x32xf32>
    %304 = vector.broadcast %283 : vector<1x32xf32> to vector<10x32xf32>
    %305 = arith.addf %303, %304 : vector<10x32xf32>
    %306 = arith.truncf %305 : vector<10x32xf32> to vector<10x32xbf16>
    %cst_123 = arith.constant dense<0.000000e+00> : vector<10x128xf32>
    %307 = tpu.matmul %306, %197, %cst_123 {dimension_numbers = #tpu.dot_dimension_numbers<[1], [0], [0], [1], [0, 0, 1, 1], [], []>} : vector<10x32xbf16>, vector<32x128xbf16>, vector<10x128xf32> -> vector<10x128xf32>
    %308 = vector.broadcast %199 : vector<1x128xf32> to vector<10x128xf32>
    %309 = arith.addf %307, %308 : vector<10x128xf32>
    %cst_124 = arith.constant 1.702000e+00 : f32
    %310 = vector.broadcast %cst_124 : f32 to vector<10x128xf32>
    %311 = arith.mulf %310, %309 : vector<10x128xf32>
    %312 = arith.negf %311 : vector<10x128xf32>
    %313 = math.exp %312 : vector<10x128xf32>
    %cst_125 = arith.constant 1.000000e+00 : f32
    %314 = vector.broadcast %cst_125 : f32 to vector<10x128xf32>
    %315 = arith.addf %314, %313 : vector<10x128xf32>
    %316 = arith.divf %314, %315 : vector<10x128xf32>
    %317 = arith.mulf %309, %316 : vector<10x128xf32>
    %318 = arith.truncf %317 : vector<10x128xf32> to vector<10x128xbf16>
    %cst_126 = arith.constant dense<0.000000e+00> : vector<10x32xf32>
    %319 = tpu.matmul %318, %201, %cst_126 {dimension_numbers = #tpu.dot_dimension_numbers<[1], [0], [0], [1], [0, 0, 1, 1], [], []>} : vector<10x128xbf16>, vector<128x32xbf16>, vector<10x32xf32> -> vector<10x32xf32>
    %320 = arith.addf %281, %319 : vector<10x32xf32>
    %321 = vector.broadcast %203 : vector<1x32xf32> to vector<10x32xf32>
    %322 = arith.addf %320, %321 : vector<10x32xf32>
    %c0_127 = arith.constant 0 : index
    %c0_128 = arith.constant 0 : index
    %323 = vector.load %arg4[%c0_127, %c0_128] : memref<2x10xf32, #tpu.memory_space<vmem>>, vector<2x10xf32>
    %cst_129 = arith.constant dense<0.000000e+00> : vector<2x32xf32>
    %324 = tpu.matmul %323, %322, %cst_129 {dimension_numbers = #tpu.dot_dimension_numbers<[1], [0], [0], [1], [0, 0, 1, 1], [], []>} : vector<2x10xf32>, vector<10x32xf32>, vector<2x32xf32> -> vector<2x32xf32>
    %c0_130 = arith.constant 0 : index
    %c0_131 = arith.constant 0 : index
    %325 = vector.load %arg15[%c0_130, %c0_131] : memref<2x32xf32, #tpu.memory_space<vmem>>, vector<2x32xf32>
    %326 = vector.extract_strided_slice %325 {offsets = [0, 0], sizes = [1, 32], strides = [1, 1]} : vector<2x32xf32> to vector<1x32xf32>
    %327 = vector.extract_strided_slice %325 {offsets = [1, 0], sizes = [1, 32], strides = [1, 1]} : vector<2x32xf32> to vector<1x32xf32>
    %cst_132 = arith.constant dense<0.000000e+00> : vector<2xf32>
    %328 = vector.multi_reduction <add>, %324, %cst_132 [1] : vector<2x32xf32> to vector<2xf32>
    %329 = vector.shape_cast %328 : vector<2xf32> to vector<2x1xf32>
    %cst_133 = arith.constant 3.200000e+01 : f32
    %330 = vector.broadcast %cst_133 : f32 to vector<2x1xf32>
    %331 = arith.divf %329, %330 : vector<2x1xf32>
    %332 = vector.broadcast %331 : vector<2x1xf32> to vector<2x32xf32>
    %333 = arith.subf %324, %332 : vector<2x32xf32>
    %334 = arith.mulf %333, %333 : vector<2x32xf32>
    %cst_134 = arith.constant dense<0.000000e+00> : vector<2xf32>
    %335 = vector.multi_reduction <add>, %334, %cst_134 [1] : vector<2x32xf32> to vector<2xf32>
    %336 = vector.shape_cast %335 : vector<2xf32> to vector<2x1xf32>
    %cst_135 = arith.constant 3.200000e+01 : f32
    %337 = vector.broadcast %cst_135 : f32 to vector<2x1xf32>
    %338 = arith.divf %336, %337 : vector<2x1xf32>
    %339 = vector.broadcast %331 : vector<2x1xf32> to vector<2x32xf32>
    %340 = arith.subf %324, %339 : vector<2x32xf32>
    %cst_136 = arith.constant 9.99999974E-6 : f32
    %341 = vector.broadcast %cst_136 : f32 to vector<2x1xf32>
    %342 = arith.addf %338, %341 : vector<2x1xf32>
    %343 = math.rsqrt %342 : vector<2x1xf32>
    %344 = vector.broadcast %343 : vector<2x1xf32> to vector<2x32xf32>
    %345 = arith.mulf %340, %344 : vector<2x32xf32>
    %346 = vector.broadcast %326 : vector<1x32xf32> to vector<2x32xf32>
    %347 = arith.mulf %345, %346 : vector<2x32xf32>
    %348 = vector.broadcast %327 : vector<1x32xf32> to vector<2x32xf32>
    %349 = arith.addf %347, %348 : vector<2x32xf32>
    %c0_137 = arith.constant 0 : index
    %c0_138 = arith.constant 0 : index
    %350 = vector.load %arg16[%c0_137, %c0_138] : memref<32x32xbf16, #tpu.memory_space<vmem>>, vector<32x32xbf16>
    %351 = arith.truncf %349 : vector<2x32xf32> to vector<2x32xbf16>
    %cst_139 = arith.constant dense<0.000000e+00> : vector<2x32xf32>
    %352 = tpu.matmul %351, %350, %cst_139 {dimension_numbers = #tpu.dot_dimension_numbers<[1], [0], [0], [1], [0, 0, 1, 1], [], []>} : vector<2x32xbf16>, vector<32x32xbf16>, vector<2x32xf32> -> vector<2x32xf32>
    %353 = tpu.iota {dimensions = array<i32: 0>} : vector<32x32xi32>
    %354 = tpu.iota {dimensions = array<i32: 1>} : vector<32x32xi32>
    %355 = arith.sitofp %353 : vector<32x32xi32> to vector<32x32xf32>
    %cst_140 = arith.constant 8.000000e+00 : f32
    %356 = vector.broadcast %cst_140 : f32 to vector<32x32xf32>
    %357 = arith.divf %355, %356 : vector<32x32xf32>
    %358 = math.floor %357 : vector<32x32xf32>
    %359 = arith.sitofp %354 : vector<32x32xi32> to vector<32x32xf32>
    %cst_141 = arith.constant 8.000000e+00 : f32
    %360 = vector.broadcast %cst_141 : f32 to vector<32x32xf32>
    %361 = arith.divf %359, %360 : vector<32x32xf32>
    %362 = math.floor %361 : vector<32x32xf32>
    %363 = arith.cmpf oeq, %358, %362 : vector<32x32xf32>
    %364 = arith.cmpi sle, %354, %353 : vector<32x32xi32>
    %365 = arith.andi %363, %364 : vector<32x32xi1>
    %cst_142 = arith.constant 0.000000e+00 : f32
    %cst_143 = arith.constant -1.000000e+30 : f32
    %366 = vector.broadcast %cst_142 : f32 to vector<32x32xf32>
    %367 = vector.broadcast %cst_143 : f32 to vector<32x32xf32>
    %368 = arith.select %365, %366, %367 : vector<32x32xi1>, vector<32x32xf32>
    %c0_144 = arith.constant 0 : index
    %c0_145 = arith.constant 0 : index
    %369 = vector.load %arg17[%c0_144, %c0_145] : memref<32x32xf32, #tpu.memory_space<vmem>>, vector<32x32xf32>
    %c0_146 = arith.constant 0 : index
    %c0_147 = arith.constant 0 : index
    %c0_148 = arith.constant 0 : index
    %370 = vector.load %arg18[%c0_146, %c0_147, %c0_148] : memref<2x2x32xf32, #tpu.memory_space<vmem>>, vector<1x2x32xf32>
    %371 = vector.shape_cast %370 : vector<1x2x32xf32> to vector<2x32xf32>
    %c0_149 = arith.constant 0 : index
    %c0_150 = arith.constant 0 : index
    %c0_151 = arith.constant 0 : index
    %372 = vector.load %arg19[%c0_149, %c0_150, %c0_151] : memref<2x32x96xbf16, #tpu.memory_space<vmem>>, vector<1x32x96xbf16>
    %373 = vector.shape_cast %372 : vector<1x32x96xbf16> to vector<32x96xbf16>
    %c0_152 = arith.constant 0 : index
    %c0_153 = arith.constant 0 : index
    %c0_154 = arith.constant 0 : index
    %374 = vector.load %arg20[%c0_152, %c0_153, %c0_154] : memref<2x1x96xf32, #tpu.memory_space<vmem>>, vector<1x1x96xf32>
    %375 = vector.shape_cast %374 : vector<1x1x96xf32> to vector<1x96xf32>
    %c0_155 = arith.constant 0 : index
    %c0_156 = arith.constant 0 : index
    %c0_157 = arith.constant 0 : index
    %376 = vector.load %arg21[%c0_155, %c0_156, %c0_157] : memref<2x32x32xbf16, #tpu.memory_space<vmem>>, vector<1x32x32xbf16>
    %377 = vector.shape_cast %376 : vector<1x32x32xbf16> to vector<32x32xbf16>
    %c0_158 = arith.constant 0 : index
    %c0_159 = arith.constant 0 : index
    %c0_160 = arith.constant 0 : index
    %378 = vector.load %arg22[%c0_158, %c0_159, %c0_160] : memref<2x1x32xf32, #tpu.memory_space<vmem>>, vector<1x1x32xf32>
    %379 = vector.shape_cast %378 : vector<1x1x32xf32> to vector<1x32xf32>
    %c0_161 = arith.constant 0 : index
    %c0_162 = arith.constant 0 : index
    %c0_163 = arith.constant 0 : index
    %380 = vector.load %arg23[%c0_161, %c0_162, %c0_163] : memref<2x2x32xf32, #tpu.memory_space<vmem>>, vector<1x2x32xf32>
    %381 = vector.shape_cast %380 : vector<1x2x32xf32> to vector<2x32xf32>
    %c0_164 = arith.constant 0 : index
    %c0_165 = arith.constant 0 : index
    %c0_166 = arith.constant 0 : index
    %382 = vector.load %arg24[%c0_164, %c0_165, %c0_166] : memref<2x32x128xbf16, #tpu.memory_space<vmem>>, vector<1x32x128xbf16>
    %383 = vector.shape_cast %382 : vector<1x32x128xbf16> to vector<32x128xbf16>
    %c0_167 = arith.constant 0 : index
    %c0_168 = arith.constant 0 : index
    %c0_169 = arith.constant 0 : index
    %384 = vector.load %arg25[%c0_167, %c0_168, %c0_169] : memref<2x1x128xf32, #tpu.memory_space<vmem>>, vector<1x1x128xf32>
    %385 = vector.shape_cast %384 : vector<1x1x128xf32> to vector<1x128xf32>
    %c0_170 = arith.constant 0 : index
    %c0_171 = arith.constant 0 : index
    %c0_172 = arith.constant 0 : index
    %386 = vector.load %arg26[%c0_170, %c0_171, %c0_172] : memref<2x128x32xbf16, #tpu.memory_space<vmem>>, vector<1x128x32xbf16>
    %387 = vector.shape_cast %386 : vector<1x128x32xbf16> to vector<128x32xbf16>
    %c0_173 = arith.constant 0 : index
    %c0_174 = arith.constant 0 : index
    %c0_175 = arith.constant 0 : index
    %388 = vector.load %arg27[%c0_173, %c0_174, %c0_175] : memref<2x1x32xf32, #tpu.memory_space<vmem>>, vector<1x1x32xf32>
    %389 = vector.shape_cast %388 : vector<1x1x32xf32> to vector<1x32xf32>
    %390 = vector.extract_strided_slice %371 {offsets = [0, 0], sizes = [1, 32], strides = [1, 1]} : vector<2x32xf32> to vector<1x32xf32>
    %391 = vector.extract_strided_slice %371 {offsets = [1, 0], sizes = [1, 32], strides = [1, 1]} : vector<2x32xf32> to vector<1x32xf32>
    %cst_176 = arith.constant dense<0.000000e+00> : vector<32xf32>
    %392 = vector.multi_reduction <add>, %369, %cst_176 [1] : vector<32x32xf32> to vector<32xf32>
    %393 = vector.shape_cast %392 : vector<32xf32> to vector<32x1xf32>
    %cst_177 = arith.constant 3.200000e+01 : f32
    %394 = vector.broadcast %cst_177 : f32 to vector<32x1xf32>
    %395 = arith.divf %393, %394 : vector<32x1xf32>
    %396 = vector.broadcast %395 : vector<32x1xf32> to vector<32x32xf32>
    %397 = arith.subf %369, %396 : vector<32x32xf32>
    %398 = arith.mulf %397, %397 : vector<32x32xf32>
    %cst_178 = arith.constant dense<0.000000e+00> : vector<32xf32>
    %399 = vector.multi_reduction <add>, %398, %cst_178 [1] : vector<32x32xf32> to vector<32xf32>
    %400 = vector.shape_cast %399 : vector<32xf32> to vector<32x1xf32>
    %cst_179 = arith.constant 3.200000e+01 : f32
    %401 = vector.broadcast %cst_179 : f32 to vector<32x1xf32>
    %402 = arith.divf %400, %401 : vector<32x1xf32>
    %403 = vector.broadcast %395 : vector<32x1xf32> to vector<32x32xf32>
    %404 = arith.subf %369, %403 : vector<32x32xf32>
    %cst_180 = arith.constant 9.99999974E-6 : f32
    %405 = vector.broadcast %cst_180 : f32 to vector<32x1xf32>
    %406 = arith.addf %402, %405 : vector<32x1xf32>
    %407 = math.rsqrt %406 : vector<32x1xf32>
    %408 = vector.broadcast %407 : vector<32x1xf32> to vector<32x32xf32>
    %409 = arith.mulf %404, %408 : vector<32x32xf32>
    %410 = vector.broadcast %390 : vector<1x32xf32> to vector<32x32xf32>
    %411 = arith.mulf %409, %410 : vector<32x32xf32>
    %412 = vector.broadcast %391 : vector<1x32xf32> to vector<32x32xf32>
    %413 = arith.addf %411, %412 : vector<32x32xf32>
    %414 = arith.truncf %413 : vector<32x32xf32> to vector<32x32xbf16>
    %cst_181 = arith.constant dense<0.000000e+00> : vector<32x96xf32>
    %415 = tpu.matmul %414, %373, %cst_181 {dimension_numbers = #tpu.dot_dimension_numbers<[1], [0], [0], [1], [0, 0, 1, 1], [], []>} : vector<32x32xbf16>, vector<32x96xbf16>, vector<32x96xf32> -> vector<32x96xf32>
    %416 = vector.broadcast %375 : vector<1x96xf32> to vector<32x96xf32>
    %417 = arith.addf %415, %416 : vector<32x96xf32>
    %418 = vector.extract_strided_slice %417 {offsets = [0, 0], sizes = [32, 16], strides = [1, 1]} : vector<32x96xf32> to vector<32x16xf32>
    %419 = vector.extract_strided_slice %417 {offsets = [0, 32], sizes = [32, 16], strides = [1, 1]} : vector<32x96xf32> to vector<32x16xf32>
    %420 = vector.extract_strided_slice %417 {offsets = [0, 64], sizes = [32, 16], strides = [1, 1]} : vector<32x96xf32> to vector<32x16xf32>
    %421 = arith.truncf %418 : vector<32x16xf32> to vector<32x16xbf16>
    %422 = arith.truncf %419 : vector<32x16xf32> to vector<32x16xbf16>
    %cst_182 = arith.constant dense<0.000000e+00> : vector<32x32xf32>
    %423 = tpu.matmul %421, %422, %cst_182 {dimension_numbers = #tpu.dot_dimension_numbers<[1], [1], [0], [0], [0, 0, 1, 0], [], []>} : vector<32x16xbf16>, vector<32x16xbf16>, vector<32x32xf32> -> vector<32x32xf32>
    %cst_183 = arith.constant 2.500000e-01 : f32
    %424 = vector.broadcast %cst_183 : f32 to vector<32x32xf32>
    %425 = arith.mulf %423, %424 : vector<32x32xf32>
    %426 = arith.addf %425, %368 : vector<32x32xf32>
    %cst_184 = arith.constant dense<0xFF800000> : vector<32xf32>
    %427 = vector.multi_reduction <maximumf>, %426, %cst_184 [1] : vector<32x32xf32> to vector<32xf32>
    %428 = vector.shape_cast %427 : vector<32xf32> to vector<32x1xf32>
    %429 = vector.broadcast %428 : vector<32x1xf32> to vector<32x32xf32>
    %430 = arith.subf %426, %429 : vector<32x32xf32>
    %431 = math.exp %430 : vector<32x32xf32>
    %cst_185 = arith.constant dense<0.000000e+00> : vector<32xf32>
    %432 = vector.multi_reduction <add>, %431, %cst_185 [1] : vector<32x32xf32> to vector<32xf32>
    %433 = vector.shape_cast %432 : vector<32xf32> to vector<32x1xf32>
    %434 = tpu.reciprocal %433 {approx = true} : vector<32x1xf32> -> vector<32x1xf32>
    %435 = vector.broadcast %434 : vector<32x1xf32> to vector<32x32xf32>
    %436 = arith.mulf %431, %435 : vector<32x32xf32>
    %437 = arith.truncf %436 : vector<32x32xf32> to vector<32x32xbf16>
    %438 = arith.truncf %420 : vector<32x16xf32> to vector<32x16xbf16>
    %cst_186 = arith.constant dense<0.000000e+00> : vector<32x16xf32>
    %439 = tpu.matmul %437, %438, %cst_186 {dimension_numbers = #tpu.dot_dimension_numbers<[1], [0], [0], [1], [0, 0, 1, 1], [], []>} : vector<32x32xbf16>, vector<32x16xbf16>, vector<32x16xf32> -> vector<32x16xf32>
    %440 = vector.extract_strided_slice %417 {offsets = [0, 16], sizes = [32, 16], strides = [1, 1]} : vector<32x96xf32> to vector<32x16xf32>
    %441 = vector.extract_strided_slice %417 {offsets = [0, 48], sizes = [32, 16], strides = [1, 1]} : vector<32x96xf32> to vector<32x16xf32>
    %442 = vector.extract_strided_slice %417 {offsets = [0, 80], sizes = [32, 16], strides = [1, 1]} : vector<32x96xf32> to vector<32x16xf32>
    %443 = arith.truncf %440 : vector<32x16xf32> to vector<32x16xbf16>
    %444 = arith.truncf %441 : vector<32x16xf32> to vector<32x16xbf16>
    %cst_187 = arith.constant dense<0.000000e+00> : vector<32x32xf32>
    %445 = tpu.matmul %443, %444, %cst_187 {dimension_numbers = #tpu.dot_dimension_numbers<[1], [1], [0], [0], [0, 0, 1, 0], [], []>} : vector<32x16xbf16>, vector<32x16xbf16>, vector<32x32xf32> -> vector<32x32xf32>
    %cst_188 = arith.constant 2.500000e-01 : f32
    %446 = vector.broadcast %cst_188 : f32 to vector<32x32xf32>
    %447 = arith.mulf %445, %446 : vector<32x32xf32>
    %448 = arith.addf %447, %368 : vector<32x32xf32>
    %cst_189 = arith.constant dense<0xFF800000> : vector<32xf32>
    %449 = vector.multi_reduction <maximumf>, %448, %cst_189 [1] : vector<32x32xf32> to vector<32xf32>
    %450 = vector.shape_cast %449 : vector<32xf32> to vector<32x1xf32>
    %451 = vector.broadcast %450 : vector<32x1xf32> to vector<32x32xf32>
    %452 = arith.subf %448, %451 : vector<32x32xf32>
    %453 = math.exp %452 : vector<32x32xf32>
    %cst_190 = arith.constant dense<0.000000e+00> : vector<32xf32>
    %454 = vector.multi_reduction <add>, %453, %cst_190 [1] : vector<32x32xf32> to vector<32xf32>
    %455 = vector.shape_cast %454 : vector<32xf32> to vector<32x1xf32>
    %456 = tpu.reciprocal %455 {approx = true} : vector<32x1xf32> -> vector<32x1xf32>
    %457 = vector.broadcast %456 : vector<32x1xf32> to vector<32x32xf32>
    %458 = arith.mulf %453, %457 : vector<32x32xf32>
    %459 = arith.truncf %458 : vector<32x32xf32> to vector<32x32xbf16>
    %460 = arith.truncf %442 : vector<32x16xf32> to vector<32x16xbf16>
    %cst_191 = arith.constant dense<0.000000e+00> : vector<32x16xf32>
    %461 = tpu.matmul %459, %460, %cst_191 {dimension_numbers = #tpu.dot_dimension_numbers<[1], [0], [0], [1], [0, 0, 1, 1], [], []>} : vector<32x32xbf16>, vector<32x16xbf16>, vector<32x16xf32> -> vector<32x16xf32>
    %462 = tpu.concatenate %439, %461 in 1 : vector<32x16xf32>, vector<32x16xf32> -> vector<32x32xf32>
    %463 = arith.truncf %462 : vector<32x32xf32> to vector<32x32xbf16>
    %cst_192 = arith.constant dense<0.000000e+00> : vector<32x32xf32>
    %464 = tpu.matmul %463, %377, %cst_192 {dimension_numbers = #tpu.dot_dimension_numbers<[1], [0], [0], [1], [0, 0, 1, 1], [], []>} : vector<32x32xbf16>, vector<32x32xbf16>, vector<32x32xf32> -> vector<32x32xf32>
    %465 = arith.addf %369, %464 : vector<32x32xf32>
    %466 = vector.broadcast %379 : vector<1x32xf32> to vector<32x32xf32>
    %467 = arith.addf %465, %466 : vector<32x32xf32>
    %468 = vector.extract_strided_slice %381 {offsets = [0, 0], sizes = [1, 32], strides = [1, 1]} : vector<2x32xf32> to vector<1x32xf32>
    %469 = vector.extract_strided_slice %381 {offsets = [1, 0], sizes = [1, 32], strides = [1, 1]} : vector<2x32xf32> to vector<1x32xf32>
    %cst_193 = arith.constant dense<0.000000e+00> : vector<32xf32>
    %470 = vector.multi_reduction <add>, %467, %cst_193 [1] : vector<32x32xf32> to vector<32xf32>
    %471 = vector.shape_cast %470 : vector<32xf32> to vector<32x1xf32>
    %cst_194 = arith.constant 3.200000e+01 : f32
    %472 = vector.broadcast %cst_194 : f32 to vector<32x1xf32>
    %473 = arith.divf %471, %472 : vector<32x1xf32>
    %474 = vector.broadcast %473 : vector<32x1xf32> to vector<32x32xf32>
    %475 = arith.subf %467, %474 : vector<32x32xf32>
    %476 = arith.mulf %475, %475 : vector<32x32xf32>
    %cst_195 = arith.constant dense<0.000000e+00> : vector<32xf32>
    %477 = vector.multi_reduction <add>, %476, %cst_195 [1] : vector<32x32xf32> to vector<32xf32>
    %478 = vector.shape_cast %477 : vector<32xf32> to vector<32x1xf32>
    %cst_196 = arith.constant 3.200000e+01 : f32
    %479 = vector.broadcast %cst_196 : f32 to vector<32x1xf32>
    %480 = arith.divf %478, %479 : vector<32x1xf32>
    %481 = vector.broadcast %473 : vector<32x1xf32> to vector<32x32xf32>
    %482 = arith.subf %467, %481 : vector<32x32xf32>
    %cst_197 = arith.constant 9.99999974E-6 : f32
    %483 = vector.broadcast %cst_197 : f32 to vector<32x1xf32>
    %484 = arith.addf %480, %483 : vector<32x1xf32>
    %485 = math.rsqrt %484 : vector<32x1xf32>
    %486 = vector.broadcast %485 : vector<32x1xf32> to vector<32x32xf32>
    %487 = arith.mulf %482, %486 : vector<32x32xf32>
    %488 = vector.broadcast %468 : vector<1x32xf32> to vector<32x32xf32>
    %489 = arith.mulf %487, %488 : vector<32x32xf32>
    %490 = vector.broadcast %469 : vector<1x32xf32> to vector<32x32xf32>
    %491 = arith.addf %489, %490 : vector<32x32xf32>
    %492 = arith.truncf %491 : vector<32x32xf32> to vector<32x32xbf16>
    %cst_198 = arith.constant dense<0.000000e+00> : vector<32x128xf32>
    %493 = tpu.matmul %492, %383, %cst_198 {dimension_numbers = #tpu.dot_dimension_numbers<[1], [0], [0], [1], [0, 0, 1, 1], [], []>} : vector<32x32xbf16>, vector<32x128xbf16>, vector<32x128xf32> -> vector<32x128xf32>
    %494 = vector.broadcast %385 : vector<1x128xf32> to vector<32x128xf32>
    %495 = arith.addf %493, %494 : vector<32x128xf32>
    %cst_199 = arith.constant 1.702000e+00 : f32
    %496 = vector.broadcast %cst_199 : f32 to vector<32x128xf32>
    %497 = arith.mulf %496, %495 : vector<32x128xf32>
    %498 = arith.negf %497 : vector<32x128xf32>
    %499 = math.exp %498 : vector<32x128xf32>
    %cst_200 = arith.constant 1.000000e+00 : f32
    %500 = vector.broadcast %cst_200 : f32 to vector<32x128xf32>
    %501 = arith.addf %500, %499 : vector<32x128xf32>
    %502 = arith.divf %500, %501 : vector<32x128xf32>
    %503 = arith.mulf %495, %502 : vector<32x128xf32>
    %504 = arith.truncf %503 : vector<32x128xf32> to vector<32x128xbf16>
    %cst_201 = arith.constant dense<0.000000e+00> : vector<32x32xf32>
    %505 = tpu.matmul %504, %387, %cst_201 {dimension_numbers = #tpu.dot_dimension_numbers<[1], [0], [0], [1], [0, 0, 1, 1], [], []>} : vector<32x128xbf16>, vector<128x32xbf16>, vector<32x32xf32> -> vector<32x32xf32>
    %506 = arith.addf %467, %505 : vector<32x32xf32>
    %507 = vector.broadcast %389 : vector<1x32xf32> to vector<32x32xf32>
    %508 = arith.addf %506, %507 : vector<32x32xf32>
    %c1_202 = arith.constant 1 : index
    %c0_203 = arith.constant 0 : index
    %c0_204 = arith.constant 0 : index
    %509 = vector.load %arg18[%c1_202, %c0_203, %c0_204] : memref<2x2x32xf32, #tpu.memory_space<vmem>>, vector<1x2x32xf32>
    %510 = vector.shape_cast %509 : vector<1x2x32xf32> to vector<2x32xf32>
    %c1_205 = arith.constant 1 : index
    %c0_206 = arith.constant 0 : index
    %c0_207 = arith.constant 0 : index
    %511 = vector.load %arg19[%c1_205, %c0_206, %c0_207] : memref<2x32x96xbf16, #tpu.memory_space<vmem>>, vector<1x32x96xbf16>
    %512 = vector.shape_cast %511 : vector<1x32x96xbf16> to vector<32x96xbf16>
    %c1_208 = arith.constant 1 : index
    %c0_209 = arith.constant 0 : index
    %c0_210 = arith.constant 0 : index
    %513 = vector.load %arg20[%c1_208, %c0_209, %c0_210] : memref<2x1x96xf32, #tpu.memory_space<vmem>>, vector<1x1x96xf32>
    %514 = vector.shape_cast %513 : vector<1x1x96xf32> to vector<1x96xf32>
    %c1_211 = arith.constant 1 : index
    %c0_212 = arith.constant 0 : index
    %c0_213 = arith.constant 0 : index
    %515 = vector.load %arg21[%c1_211, %c0_212, %c0_213] : memref<2x32x32xbf16, #tpu.memory_space<vmem>>, vector<1x32x32xbf16>
    %516 = vector.shape_cast %515 : vector<1x32x32xbf16> to vector<32x32xbf16>
    %c1_214 = arith.constant 1 : index
    %c0_215 = arith.constant 0 : index
    %c0_216 = arith.constant 0 : index
    %517 = vector.load %arg22[%c1_214, %c0_215, %c0_216] : memref<2x1x32xf32, #tpu.memory_space<vmem>>, vector<1x1x32xf32>
    %518 = vector.shape_cast %517 : vector<1x1x32xf32> to vector<1x32xf32>
    %c1_217 = arith.constant 1 : index
    %c0_218 = arith.constant 0 : index
    %c0_219 = arith.constant 0 : index
    %519 = vector.load %arg23[%c1_217, %c0_218, %c0_219] : memref<2x2x32xf32, #tpu.memory_space<vmem>>, vector<1x2x32xf32>
    %520 = vector.shape_cast %519 : vector<1x2x32xf32> to vector<2x32xf32>
    %c1_220 = arith.constant 1 : index
    %c0_221 = arith.constant 0 : index
    %c0_222 = arith.constant 0 : index
    %521 = vector.load %arg24[%c1_220, %c0_221, %c0_222] : memref<2x32x128xbf16, #tpu.memory_space<vmem>>, vector<1x32x128xbf16>
    %522 = vector.shape_cast %521 : vector<1x32x128xbf16> to vector<32x128xbf16>
    %c1_223 = arith.constant 1 : index
    %c0_224 = arith.constant 0 : index
    %c0_225 = arith.constant 0 : index
    %523 = vector.load %arg25[%c1_223, %c0_224, %c0_225] : memref<2x1x128xf32, #tpu.memory_space<vmem>>, vector<1x1x128xf32>
    %524 = vector.shape_cast %523 : vector<1x1x128xf32> to vector<1x128xf32>
    %c1_226 = arith.constant 1 : index
    %c0_227 = arith.constant 0 : index
    %c0_228 = arith.constant 0 : index
    %525 = vector.load %arg26[%c1_226, %c0_227, %c0_228] : memref<2x128x32xbf16, #tpu.memory_space<vmem>>, vector<1x128x32xbf16>
    %526 = vector.shape_cast %525 : vector<1x128x32xbf16> to vector<128x32xbf16>
    %c1_229 = arith.constant 1 : index
    %c0_230 = arith.constant 0 : index
    %c0_231 = arith.constant 0 : index
    %527 = vector.load %arg27[%c1_229, %c0_230, %c0_231] : memref<2x1x32xf32, #tpu.memory_space<vmem>>, vector<1x1x32xf32>
    %528 = vector.shape_cast %527 : vector<1x1x32xf32> to vector<1x32xf32>
    %529 = vector.extract_strided_slice %510 {offsets = [0, 0], sizes = [1, 32], strides = [1, 1]} : vector<2x32xf32> to vector<1x32xf32>
    %530 = vector.extract_strided_slice %510 {offsets = [1, 0], sizes = [1, 32], strides = [1, 1]} : vector<2x32xf32> to vector<1x32xf32>
    %cst_232 = arith.constant dense<0.000000e+00> : vector<32xf32>
    %531 = vector.multi_reduction <add>, %508, %cst_232 [1] : vector<32x32xf32> to vector<32xf32>
    %532 = vector.shape_cast %531 : vector<32xf32> to vector<32x1xf32>
    %cst_233 = arith.constant 3.200000e+01 : f32
    %533 = vector.broadcast %cst_233 : f32 to vector<32x1xf32>
    %534 = arith.divf %532, %533 : vector<32x1xf32>
    %535 = vector.broadcast %534 : vector<32x1xf32> to vector<32x32xf32>
    %536 = arith.subf %508, %535 : vector<32x32xf32>
    %537 = arith.mulf %536, %536 : vector<32x32xf32>
    %cst_234 = arith.constant dense<0.000000e+00> : vector<32xf32>
    %538 = vector.multi_reduction <add>, %537, %cst_234 [1] : vector<32x32xf32> to vector<32xf32>
    %539 = vector.shape_cast %538 : vector<32xf32> to vector<32x1xf32>
    %cst_235 = arith.constant 3.200000e+01 : f32
    %540 = vector.broadcast %cst_235 : f32 to vector<32x1xf32>
    %541 = arith.divf %539, %540 : vector<32x1xf32>
    %542 = vector.broadcast %534 : vector<32x1xf32> to vector<32x32xf32>
    %543 = arith.subf %508, %542 : vector<32x32xf32>
    %cst_236 = arith.constant 9.99999974E-6 : f32
    %544 = vector.broadcast %cst_236 : f32 to vector<32x1xf32>
    %545 = arith.addf %541, %544 : vector<32x1xf32>
    %546 = math.rsqrt %545 : vector<32x1xf32>
    %547 = vector.broadcast %546 : vector<32x1xf32> to vector<32x32xf32>
    %548 = arith.mulf %543, %547 : vector<32x32xf32>
    %549 = vector.broadcast %529 : vector<1x32xf32> to vector<32x32xf32>
    %550 = arith.mulf %548, %549 : vector<32x32xf32>
    %551 = vector.broadcast %530 : vector<1x32xf32> to vector<32x32xf32>
    %552 = arith.addf %550, %551 : vector<32x32xf32>
    %553 = arith.truncf %552 : vector<32x32xf32> to vector<32x32xbf16>
    %cst_237 = arith.constant dense<0.000000e+00> : vector<32x96xf32>
    %554 = tpu.matmul %553, %512, %cst_237 {dimension_numbers = #tpu.dot_dimension_numbers<[1], [0], [0], [1], [0, 0, 1, 1], [], []>} : vector<32x32xbf16>, vector<32x96xbf16>, vector<32x96xf32> -> vector<32x96xf32>
    %555 = vector.broadcast %514 : vector<1x96xf32> to vector<32x96xf32>
    %556 = arith.addf %554, %555 : vector<32x96xf32>
    %557 = vector.extract_strided_slice %556 {offsets = [0, 0], sizes = [32, 16], strides = [1, 1]} : vector<32x96xf32> to vector<32x16xf32>
    %558 = vector.extract_strided_slice %556 {offsets = [0, 32], sizes = [32, 16], strides = [1, 1]} : vector<32x96xf32> to vector<32x16xf32>
    %559 = vector.extract_strided_slice %556 {offsets = [0, 64], sizes = [32, 16], strides = [1, 1]} : vector<32x96xf32> to vector<32x16xf32>
    %560 = arith.truncf %557 : vector<32x16xf32> to vector<32x16xbf16>
    %561 = arith.truncf %558 : vector<32x16xf32> to vector<32x16xbf16>
    %cst_238 = arith.constant dense<0.000000e+00> : vector<32x32xf32>
    %562 = tpu.matmul %560, %561, %cst_238 {dimension_numbers = #tpu.dot_dimension_numbers<[1], [1], [0], [0], [0, 0, 1, 0], [], []>} : vector<32x16xbf16>, vector<32x16xbf16>, vector<32x32xf32> -> vector<32x32xf32>
    %cst_239 = arith.constant 2.500000e-01 : f32
    %563 = vector.broadcast %cst_239 : f32 to vector<32x32xf32>
    %564 = arith.mulf %562, %563 : vector<32x32xf32>
    %565 = arith.addf %564, %368 : vector<32x32xf32>
    %cst_240 = arith.constant dense<0xFF800000> : vector<32xf32>
    %566 = vector.multi_reduction <maximumf>, %565, %cst_240 [1] : vector<32x32xf32> to vector<32xf32>
    %567 = vector.shape_cast %566 : vector<32xf32> to vector<32x1xf32>
    %568 = vector.broadcast %567 : vector<32x1xf32> to vector<32x32xf32>
    %569 = arith.subf %565, %568 : vector<32x32xf32>
    %570 = math.exp %569 : vector<32x32xf32>
    %cst_241 = arith.constant dense<0.000000e+00> : vector<32xf32>
    %571 = vector.multi_reduction <add>, %570, %cst_241 [1] : vector<32x32xf32> to vector<32xf32>
    %572 = vector.shape_cast %571 : vector<32xf32> to vector<32x1xf32>
    %573 = tpu.reciprocal %572 {approx = true} : vector<32x1xf32> -> vector<32x1xf32>
    %574 = vector.broadcast %573 : vector<32x1xf32> to vector<32x32xf32>
    %575 = arith.mulf %570, %574 : vector<32x32xf32>
    %576 = arith.truncf %575 : vector<32x32xf32> to vector<32x32xbf16>
    %577 = arith.truncf %559 : vector<32x16xf32> to vector<32x16xbf16>
    %cst_242 = arith.constant dense<0.000000e+00> : vector<32x16xf32>
    %578 = tpu.matmul %576, %577, %cst_242 {dimension_numbers = #tpu.dot_dimension_numbers<[1], [0], [0], [1], [0, 0, 1, 1], [], []>} : vector<32x32xbf16>, vector<32x16xbf16>, vector<32x16xf32> -> vector<32x16xf32>
    %579 = vector.extract_strided_slice %556 {offsets = [0, 16], sizes = [32, 16], strides = [1, 1]} : vector<32x96xf32> to vector<32x16xf32>
    %580 = vector.extract_strided_slice %556 {offsets = [0, 48], sizes = [32, 16], strides = [1, 1]} : vector<32x96xf32> to vector<32x16xf32>
    %581 = vector.extract_strided_slice %556 {offsets = [0, 80], sizes = [32, 16], strides = [1, 1]} : vector<32x96xf32> to vector<32x16xf32>
    %582 = arith.truncf %579 : vector<32x16xf32> to vector<32x16xbf16>
    %583 = arith.truncf %580 : vector<32x16xf32> to vector<32x16xbf16>
    %cst_243 = arith.constant dense<0.000000e+00> : vector<32x32xf32>
    %584 = tpu.matmul %582, %583, %cst_243 {dimension_numbers = #tpu.dot_dimension_numbers<[1], [1], [0], [0], [0, 0, 1, 0], [], []>} : vector<32x16xbf16>, vector<32x16xbf16>, vector<32x32xf32> -> vector<32x32xf32>
    %cst_244 = arith.constant 2.500000e-01 : f32
    %585 = vector.broadcast %cst_244 : f32 to vector<32x32xf32>
    %586 = arith.mulf %584, %585 : vector<32x32xf32>
    %587 = arith.addf %586, %368 : vector<32x32xf32>
    %cst_245 = arith.constant dense<0xFF800000> : vector<32xf32>
    %588 = vector.multi_reduction <maximumf>, %587, %cst_245 [1] : vector<32x32xf32> to vector<32xf32>
    %589 = vector.shape_cast %588 : vector<32xf32> to vector<32x1xf32>
    %590 = vector.broadcast %589 : vector<32x1xf32> to vector<32x32xf32>
    %591 = arith.subf %587, %590 : vector<32x32xf32>
    %592 = math.exp %591 : vector<32x32xf32>
    %cst_246 = arith.constant dense<0.000000e+00> : vector<32xf32>
    %593 = vector.multi_reduction <add>, %592, %cst_246 [1] : vector<32x32xf32> to vector<32xf32>
    %594 = vector.shape_cast %593 : vector<32xf32> to vector<32x1xf32>
    %595 = tpu.reciprocal %594 {approx = true} : vector<32x1xf32> -> vector<32x1xf32>
    %596 = vector.broadcast %595 : vector<32x1xf32> to vector<32x32xf32>
    %597 = arith.mulf %592, %596 : vector<32x32xf32>
    %598 = arith.truncf %597 : vector<32x32xf32> to vector<32x32xbf16>
    %599 = arith.truncf %581 : vector<32x16xf32> to vector<32x16xbf16>
    %cst_247 = arith.constant dense<0.000000e+00> : vector<32x16xf32>
    %600 = tpu.matmul %598, %599, %cst_247 {dimension_numbers = #tpu.dot_dimension_numbers<[1], [0], [0], [1], [0, 0, 1, 1], [], []>} : vector<32x32xbf16>, vector<32x16xbf16>, vector<32x16xf32> -> vector<32x16xf32>
    %601 = tpu.concatenate %578, %600 in 1 : vector<32x16xf32>, vector<32x16xf32> -> vector<32x32xf32>
    %602 = arith.truncf %601 : vector<32x32xf32> to vector<32x32xbf16>
    %cst_248 = arith.constant dense<0.000000e+00> : vector<32x32xf32>
    %603 = tpu.matmul %602, %516, %cst_248 {dimension_numbers = #tpu.dot_dimension_numbers<[1], [0], [0], [1], [0, 0, 1, 1], [], []>} : vector<32x32xbf16>, vector<32x32xbf16>, vector<32x32xf32> -> vector<32x32xf32>
    %604 = arith.addf %508, %603 : vector<32x32xf32>
    %605 = vector.broadcast %518 : vector<1x32xf32> to vector<32x32xf32>
    %606 = arith.addf %604, %605 : vector<32x32xf32>
    %607 = vector.extract_strided_slice %520 {offsets = [0, 0], sizes = [1, 32], strides = [1, 1]} : vector<2x32xf32> to vector<1x32xf32>
    %608 = vector.extract_strided_slice %520 {offsets = [1, 0], sizes = [1, 32], strides = [1, 1]} : vector<2x32xf32> to vector<1x32xf32>
    %cst_249 = arith.constant dense<0.000000e+00> : vector<32xf32>
    %609 = vector.multi_reduction <add>, %606, %cst_249 [1] : vector<32x32xf32> to vector<32xf32>
    %610 = vector.shape_cast %609 : vector<32xf32> to vector<32x1xf32>
    %cst_250 = arith.constant 3.200000e+01 : f32
    %611 = vector.broadcast %cst_250 : f32 to vector<32x1xf32>
    %612 = arith.divf %610, %611 : vector<32x1xf32>
    %613 = vector.broadcast %612 : vector<32x1xf32> to vector<32x32xf32>
    %614 = arith.subf %606, %613 : vector<32x32xf32>
    %615 = arith.mulf %614, %614 : vector<32x32xf32>
    %cst_251 = arith.constant dense<0.000000e+00> : vector<32xf32>
    %616 = vector.multi_reduction <add>, %615, %cst_251 [1] : vector<32x32xf32> to vector<32xf32>
    %617 = vector.shape_cast %616 : vector<32xf32> to vector<32x1xf32>
    %cst_252 = arith.constant 3.200000e+01 : f32
    %618 = vector.broadcast %cst_252 : f32 to vector<32x1xf32>
    %619 = arith.divf %617, %618 : vector<32x1xf32>
    %620 = vector.broadcast %612 : vector<32x1xf32> to vector<32x32xf32>
    %621 = arith.subf %606, %620 : vector<32x32xf32>
    %cst_253 = arith.constant 9.99999974E-6 : f32
    %622 = vector.broadcast %cst_253 : f32 to vector<32x1xf32>
    %623 = arith.addf %619, %622 : vector<32x1xf32>
    %624 = math.rsqrt %623 : vector<32x1xf32>
    %625 = vector.broadcast %624 : vector<32x1xf32> to vector<32x32xf32>
    %626 = arith.mulf %621, %625 : vector<32x32xf32>
    %627 = vector.broadcast %607 : vector<1x32xf32> to vector<32x32xf32>
    %628 = arith.mulf %626, %627 : vector<32x32xf32>
    %629 = vector.broadcast %608 : vector<1x32xf32> to vector<32x32xf32>
    %630 = arith.addf %628, %629 : vector<32x32xf32>
    %631 = arith.truncf %630 : vector<32x32xf32> to vector<32x32xbf16>
    %cst_254 = arith.constant dense<0.000000e+00> : vector<32x128xf32>
    %632 = tpu.matmul %631, %522, %cst_254 {dimension_numbers = #tpu.dot_dimension_numbers<[1], [0], [0], [1], [0, 0, 1, 1], [], []>} : vector<32x32xbf16>, vector<32x128xbf16>, vector<32x128xf32> -> vector<32x128xf32>
    %633 = vector.broadcast %524 : vector<1x128xf32> to vector<32x128xf32>
    %634 = arith.addf %632, %633 : vector<32x128xf32>
    %cst_255 = arith.constant 1.702000e+00 : f32
    %635 = vector.broadcast %cst_255 : f32 to vector<32x128xf32>
    %636 = arith.mulf %635, %634 : vector<32x128xf32>
    %637 = arith.negf %636 : vector<32x128xf32>
    %638 = math.exp %637 : vector<32x128xf32>
    %cst_256 = arith.constant 1.000000e+00 : f32
    %639 = vector.broadcast %cst_256 : f32 to vector<32x128xf32>
    %640 = arith.addf %639, %638 : vector<32x128xf32>
    %641 = arith.divf %639, %640 : vector<32x128xf32>
    %642 = arith.mulf %634, %641 : vector<32x128xf32>
    %643 = arith.truncf %642 : vector<32x128xf32> to vector<32x128xbf16>
    %cst_257 = arith.constant dense<0.000000e+00> : vector<32x32xf32>
    %644 = tpu.matmul %643, %526, %cst_257 {dimension_numbers = #tpu.dot_dimension_numbers<[1], [0], [0], [1], [0, 0, 1, 1], [], []>} : vector<32x128xbf16>, vector<128x32xbf16>, vector<32x32xf32> -> vector<32x32xf32>
    %645 = arith.addf %606, %644 : vector<32x32xf32>
    %646 = vector.broadcast %528 : vector<1x32xf32> to vector<32x32xf32>
    %647 = arith.addf %645, %646 : vector<32x32xf32>
    %c0_258 = arith.constant 0 : index
    %c0_259 = arith.constant 0 : index
    %648 = vector.load %arg28[%c0_258, %c0_259] : memref<2x32xf32, #tpu.memory_space<vmem>>, vector<2x32xf32>
    %649 = vector.extract_strided_slice %648 {offsets = [0, 0], sizes = [1, 32], strides = [1, 1]} : vector<2x32xf32> to vector<1x32xf32>
    %650 = vector.extract_strided_slice %648 {offsets = [1, 0], sizes = [1, 32], strides = [1, 1]} : vector<2x32xf32> to vector<1x32xf32>
    %cst_260 = arith.constant dense<0.000000e+00> : vector<32xf32>
    %651 = vector.multi_reduction <add>, %647, %cst_260 [1] : vector<32x32xf32> to vector<32xf32>
    %652 = vector.shape_cast %651 : vector<32xf32> to vector<32x1xf32>
    %cst_261 = arith.constant 3.200000e+01 : f32
    %653 = vector.broadcast %cst_261 : f32 to vector<32x1xf32>
    %654 = arith.divf %652, %653 : vector<32x1xf32>
    %655 = vector.broadcast %654 : vector<32x1xf32> to vector<32x32xf32>
    %656 = arith.subf %647, %655 : vector<32x32xf32>
    %657 = arith.mulf %656, %656 : vector<32x32xf32>
    %cst_262 = arith.constant dense<0.000000e+00> : vector<32xf32>
    %658 = vector.multi_reduction <add>, %657, %cst_262 [1] : vector<32x32xf32> to vector<32xf32>
    %659 = vector.shape_cast %658 : vector<32xf32> to vector<32x1xf32>
    %cst_263 = arith.constant 3.200000e+01 : f32
    %660 = vector.broadcast %cst_263 : f32 to vector<32x1xf32>
    %661 = arith.divf %659, %660 : vector<32x1xf32>
    %662 = vector.broadcast %654 : vector<32x1xf32> to vector<32x32xf32>
    %663 = arith.subf %647, %662 : vector<32x32xf32>
    %cst_264 = arith.constant 9.99999974E-6 : f32
    %664 = vector.broadcast %cst_264 : f32 to vector<32x1xf32>
    %665 = arith.addf %661, %664 : vector<32x1xf32>
    %666 = math.rsqrt %665 : vector<32x1xf32>
    %667 = vector.broadcast %666 : vector<32x1xf32> to vector<32x32xf32>
    %668 = arith.mulf %663, %667 : vector<32x32xf32>
    %669 = vector.broadcast %649 : vector<1x32xf32> to vector<32x32xf32>
    %670 = arith.mulf %668, %669 : vector<32x32xf32>
    %671 = vector.broadcast %650 : vector<1x32xf32> to vector<32x32xf32>
    %672 = arith.addf %670, %671 : vector<32x32xf32>
    %c0_265 = arith.constant 0 : index
    %c0_266 = arith.constant 0 : index
    %673 = vector.load %arg29[%c0_265, %c0_266] : memref<4x32xf32, #tpu.memory_space<vmem>>, vector<4x32xf32>
    %cst_267 = arith.constant dense<0.000000e+00> : vector<4x32xf32>
    %674 = tpu.matmul %673, %672, %cst_267 {dimension_numbers = #tpu.dot_dimension_numbers<[1], [0], [0], [1], [0, 0, 1, 1], [], []>} : vector<4x32xf32>, vector<32x32xf32>, vector<4x32xf32> -> vector<4x32xf32>
    %c0_268 = arith.constant 0 : index
    %c0_269 = arith.constant 0 : index
    %675 = vector.load %arg30[%c0_268, %c0_269] : memref<32x32xbf16, #tpu.memory_space<vmem>>, vector<32x32xbf16>
    %676 = arith.truncf %674 : vector<4x32xf32> to vector<4x32xbf16>
    %cst_270 = arith.constant dense<0.000000e+00> : vector<4x32xf32>
    %677 = tpu.matmul %676, %675, %cst_270 {dimension_numbers = #tpu.dot_dimension_numbers<[1], [0], [0], [1], [0, 0, 1, 1], [], []>} : vector<4x32xbf16>, vector<32x32xbf16>, vector<4x32xf32> -> vector<4x32xf32>
    %678 = arith.mulf %352, %352 : vector<2x32xf32>
    %cst_271 = arith.constant dense<0.000000e+00> : vector<2xf32>
    %679 = vector.multi_reduction <add>, %678, %cst_271 [1] : vector<2x32xf32> to vector<2xf32>
    %680 = vector.shape_cast %679 : vector<2xf32> to vector<2x1xf32>
    %cst_272 = arith.constant 9.99999996E-13 : f32
    %681 = vector.broadcast %cst_272 : f32 to vector<2x1xf32>
    %682 = arith.addf %680, %681 : vector<2x1xf32>
    %683 = math.rsqrt %682 : vector<2x1xf32>
    %684 = vector.broadcast %683 : vector<2x1xf32> to vector<2x32xf32>
    %685 = arith.mulf %352, %684 : vector<2x32xf32>
    %686 = arith.mulf %677, %677 : vector<4x32xf32>
    %cst_273 = arith.constant dense<0.000000e+00> : vector<4xf32>
    %687 = vector.multi_reduction <add>, %686, %cst_273 [1] : vector<4x32xf32> to vector<4xf32>
    %688 = vector.shape_cast %687 : vector<4xf32> to vector<4x1xf32>
    %cst_274 = arith.constant 9.99999996E-13 : f32
    %689 = vector.broadcast %cst_274 : f32 to vector<4x1xf32>
    %690 = arith.addf %688, %689 : vector<4x1xf32>
    %691 = math.rsqrt %690 : vector<4x1xf32>
    %692 = vector.broadcast %691 : vector<4x1xf32> to vector<4x32xf32>
    %693 = arith.mulf %677, %692 : vector<4x32xf32>
    %cst_275 = arith.constant dense<0.000000e+00> : vector<2x4xf32>
    %694 = tpu.matmul %685, %693, %cst_275 {dimension_numbers = #tpu.dot_dimension_numbers<[1], [1], [0], [0], [0, 0, 1, 0], [], []>} : vector<2x32xf32>, vector<4x32xf32>, vector<2x4xf32> -> vector<2x4xf32>
    %c0_276 = arith.constant 0 : index
    %695 = memref.load %arg31[%c0_276] : memref<1xf32, #tpu.memory_space<smem>>
    %696 = vector.broadcast %695 : f32 to vector<2x4xf32>
    %697 = arith.mulf %696, %694 : vector<2x4xf32>
    %c0_277 = arith.constant 0 : index
    %c0_278 = arith.constant 0 : index
    %698 = vector.load %arg32[%c0_277, %c0_278] : memref<2x4xf32, #tpu.memory_space<vmem>>, vector<2x4xf32>
    tpu.vector_store %arg32[%c0_277, %c0_278], %697 {strides = array<i32>} : memref<2x4xf32, #tpu.memory_space<vmem>>, vector<2x4xf32>,
    return
  }
}

</mosaic_0001>

<llo_original>
// kernel: _lambda_.1
$region0: #{_lambda_.1}
  #allocation0 [shape = 'u32[]', space=smem, size = 0x4, offset = 0x4, fixed_abs, tag = 'smem constant byte address 0x4 - core index']
  #allocation1 [shape = 'u32[144,128]{1,0:T(1,128)}', space=vmem, size = 0x12000, scoped, tag = 'internal scratch']
  #allocation2 [shape = 'f32[1]{0:T(128)S(6)}', space=smem, size = 0x200, scoped, tag = 'scoped memory for _lambda_.1']
  %s0 = inlined_call_operand.smem [shape: u32[33], index: -1, kind: input, shape index: {}]
  %s1 = sld [smem:[%s0]]
  %s2 = scalar_lea.smem %s0, 1
  %s3 = sld [smem:[%s2]]
  %s4 = scalar_lea.smem %s0, 2
  %s5 = sld [smem:[%s4]]
  %s6 = scalar_lea.smem %s0, 3
  %s7 = sld [smem:[%s6]]
  %s8 = scalar_lea.smem %s0, 4
  %s9 = sld [smem:[%s8]]
  %s10 = scalar_lea.smem %s0, 5
  %s11 = sld [smem:[%s10]]
  %s12 = scalar_lea.smem %s0, 6
  %s13 = sld [smem:[%s12]]
  %s14 = scalar_lea.smem %s0, 7
  %s15 = sld [smem:[%s14]]
  %s16 = scalar_lea.smem %s0, 8
  %s17 = sld [smem:[%s16]]
  %s18 = scalar_lea.smem %s0, 9
  %s19 = sld [smem:[%s18]]
  %s20 = scalar_lea.smem %s0, 10
  %s21 = sld [smem:[%s20]]
  %s22 = scalar_lea.smem %s0, 11
  %s23 = sld [smem:[%s22]]
  %s24 = scalar_lea.smem %s0, 12
  %s25 = sld [smem:[%s24]]
  %s26 = scalar_lea.smem %s0, 13
  %s27 = sld [smem:[%s26]]
  %s28 = scalar_lea.smem %s0, 14
  %s29 = sld [smem:[%s28]]
  %s30 = scalar_lea.smem %s0, 15
  %s31 = sld [smem:[%s30]]
  %s32 = scalar_lea.smem %s0, 16
  %s33 = sld [smem:[%s32]]
  %s34 = scalar_lea.smem %s0, 17
  %s35 = sld [smem:[%s34]]
  %s36 = scalar_lea.smem %s0, 18
  %s37 = sld [smem:[%s36]]
  %s38 = scalar_lea.smem %s0, 19
  %s39 = sld [smem:[%s38]]
  %s40 = scalar_lea.smem %s0, 20
  %s41 = sld [smem:[%s40]]
  %s42 = scalar_lea.smem %s0, 21
  %s43 = sld [smem:[%s42]]
  %s44 = scalar_lea.smem %s0, 22
  %s45 = sld [smem:[%s44]]
  %s46 = scalar_lea.smem %s0, 23
  %s47 = sld [smem:[%s46]]
  %s48 = scalar_lea.smem %s0, 24
  %s49 = sld [smem:[%s48]]
  %s50 = scalar_lea.smem %s0, 25
  %s51 = sld [smem:[%s50]]
  %s52 = scalar_lea.smem %s0, 26
  %s53 = sld [smem:[%s52]]
  %s54 = scalar_lea.smem %s0, 27
  %s55 = sld [smem:[%s54]]
  %s56 = scalar_lea.smem %s0, 28
  %s57 = sld [smem:[%s56]]
  %s58 = scalar_lea.smem %s0, 29
  %s59 = sld [smem:[%s58]]
  %s60 = scalar_lea.smem %s0, 30
  %s61 = sld [smem:[%s60]]
  %s62 = scalar_lea.smem %s0, 31
  %s63 = sld [smem:[%s62]]
  %s64 = scalar_lea.smem %s0, 32
  %s65 = sld [smem:[%s64]]
  %s66 = sld [smem:[#allocation0]]
  $region138: #{_lambda_.1} parent=0
    _
  %s68 = ssub.s32 1, %s66
  %s69 = scalar_select 0, %s68, %s66
  %70 = sst [smem:[#allocation2]] %s63
  $region1: #{_lambda_.1} parent=0
    #allocation3 [shape = 'u8[1024]{0}', space=vmem, size = 0x400, scoped, tag = 'output window, operand 0, single buffered']
    #allocation4 [shape = 's32[1]{0}', space=sflag, size = 0x4, scoped, tag = 'scoped memory for _lambda_.1']
    %71 = vsyncpa [#allocation4], 0
    // Predicated region
    $region2: #{_lambda_.1} parent=1 // pred_check
      _
    $region3: #{_lambda_.1} parent=1 // pred_check_branch
      %73 = sbr.rel (0) target = $region5
    $region4: #{_lambda_.1} parent=1 // pred_region
      _
    $region5: #{_lambda_.1} parent=1 // pred_fallthru
      _
    // Predicated region
    $region6: #{_lambda_.1} parent=1 // pred_check
      _
    $region7: #{_lambda_.1} parent=1 // pred_check_branch
      %75 = sbr.rel (0) target = $region9
    $region8: #{_lambda_.1} parent=1 // pred_region
      _
    $region9: #{_lambda_.1} parent=1 // pred_fallthru
      _
    // Predicated region
    $region10: #{_lambda_.1} parent=1 // pred_check
      _
    $region11: #{_lambda_.1} parent=1 // pred_check_branch
      %77 = sbr.rel (0) target = $region13
    $region12: #{_lambda_.1} parent=1 // pred_region
      _
    $region13: #{_lambda_.1} parent=1 // pred_fallthru
      _
    // Predicated region
    $region14: #{_lambda_.1} parent=1 // pred_check
      _
    $region15: #{_lambda_.1} parent=1 // pred_check_branch
      %79 = sbr.rel (0) target = $region17
    $region16: #{_lambda_.1} parent=1 // pred_region
      _
    $region17: #{_lambda_.1} parent=1 // pred_fallthru
      _
    // Predicated region
    $region18: #{_lambda_.1} parent=1 // pred_check
      _
    $region19: #{_lambda_.1} parent=1 // pred_check_branch
      %81 = sbr.rel (0) target = $region21
    $region20: #{_lambda_.1} parent=1 // pred_region
      _
    $region21: #{_lambda_.1} parent=1 // pred_fallthru
      _
    // Predicated region
    $region22: #{_lambda_.1} parent=1 // pred_check
      _
    $region23: #{_lambda_.1} parent=1 // pred_check_branch
      %83 = sbr.rel (0) target = $region25
    $region24: #{_lambda_.1} parent=1 // pred_region
      _
    $region25: #{_lambda_.1} parent=1 // pred_fallthru
      _
    // Predicated region
    $region26: #{_lambda_.1} parent=1 // pred_check
      _
    $region27: #{_lambda_.1} parent=1 // pred_check_branch
      %85 = sbr.rel (0) target = $region29
    $region28: #{_lambda_.1} parent=1 // pred_region
      _
    $region29: #{_lambda_.1} parent=1 // pred_fallthru
      _
    // Predicated region
    $region30: #{_lambda_.1} parent=1 // pred_check
      _
    $region31: #{_lambda_.1} parent=1 // pred_check_branch
      %87 = sbr.rel (0) target = $region33
    $region32: #{_lambda_.1} parent=1 // pred_region
      _
    $region33: #{_lambda_.1} parent=1 // pred_fallthru
      _
    // Predicated region
    $region34: #{_lambda_.1} parent=1 // pred_check
      _
    $region35: #{_lambda_.1} parent=1 // pred_check_branch
      %89 = sbr.rel (0) target = $region37
    $region36: #{_lambda_.1} parent=1 // pred_region
      _
    $region37: #{_lambda_.1} parent=1 // pred_fallthru
      _
    // Predicated region
    $region38: #{_lambda_.1} parent=1 // pred_check
      _
    $region39: #{_lambda_.1} parent=1 // pred_check_branch
      %91 = sbr.rel (0) target = $region41
    $region40: #{_lambda_.1} parent=1 // pred_region
      _
    $region41: #{_lambda_.1} parent=1 // pred_fallthru
      _
    // Predicated region
    $region42: #{_lambda_.1} parent=1 // pred_check
      _
    $region43: #{_lambda_.1} parent=1 // pred_check_branch
      %93 = sbr.rel (0) target = $region45
    $region44: #{_lambda_.1} parent=1 // pred_region
      _
    $region45: #{_lambda_.1} parent=1 // pred_fallthru
      _
    // Predicated region
    $region46: #{_lambda_.1} parent=1 // pred_check
      _
    $region47: #{_lambda_.1} parent=1 // pred_check_branch
      %95 = sbr.rel (0) target = $region49
    $region48: #{_lambda_.1} parent=1 // pred_region
      _
    $region49: #{_lambda_.1} parent=1 // pred_fallthru
      _
    // Predicated region
    $region50: #{_lambda_.1} parent=1 // pred_check
      _
    $region51: #{_lambda_.1} parent=1 // pred_check_branch
      %97 = sbr.rel (0) target = $region53
    $region52: #{_lambda_.1} parent=1 // pred_region
      _
    $region53: #{_lambda_.1} parent=1 // pred_fallthru
      _
    // Predicated region
    $region54: #{_lambda_.1} parent=1 // pred_check
      _
    $region55: #{_lambda_.1} parent=1 // pred_check_branch
      %99 = sbr.rel (0) target = $region57
    $region56: #{_lambda_.1} parent=1 // pred_region
      _
    $region57: #{_lambda_.1} parent=1 // pred_fallthru
      _
    // Predicated region
    $region58: #{_lambda_.1} parent=1 // pred_check
      _
    $region59: #{_lambda_.1} parent=1 // pred_check_branch
      %101 = sbr.rel (0) target = $region61
    $region60: #{_lambda_.1} parent=1 // pred_region
      _
    $region61: #{_lambda_.1} parent=1 // pred_fallthru
      _
    // Predicated region
    $region62: #{_lambda_.1} parent=1 // pred_check
      _
    $region63: #{_lambda_.1} parent=1 // pred_check_branch
      %103 = sbr.rel (0) target = $region65
    $region64: #{_lambda_.1} parent=1 // pred_region
      _
    $region65: #{_lambda_.1} parent=1 // pred_fallthru
      _
    // Predicated region
    $region66: #{_lambda_.1} parent=1 // pred_check
      _
    $region67: #{_lambda_.1} parent=1 // pred_check_branch
      %105 = sbr.rel (0) target = $region69
    $region68: #{_lambda_.1} parent=1 // pred_region
      _
    $region69: #{_lambda_.1} parent=1 // pred_fallthru
      _
    // Predicated region
    $region70: #{_lambda_.1} parent=1 // pred_check
      _
    $region71: #{_lambda_.1} parent=1 // pred_check_branch
      %107 = sbr.rel (0) target = $region73
    $region72: #{_lambda_.1} parent=1 // pred_region
      _
    $region73: #{_lambda_.1} parent=1 // pred_fallthru
      _
    // Predicated region
    $region74: #{_lambda_.1} parent=1 // pred_check
      _
    $region75: #{_lambda_.1} parent=1 // pred_check_branch
      %109 = sbr.rel (0) target = $region77
    $region76: #{_lambda_.1} parent=1 // pred_region
      _
    $region77: #{_lambda_.1} parent=1 // pred_fallthru
      _
    // Predicated region
    $region78: #{_lambda_.1} parent=1 // pred_check
      _
    $region79: #{_lambda_.1} parent=1 // pred_check_branch
      %111 = sbr.rel (0) target = $region81
    $region80: #{_lambda_.1} parent=1 // pred_region
      _
    $region81: #{_lambda_.1} parent=1 // pred_fallthru
      _
    // Predicated region
    $region82: #{_lambda_.1} parent=1 // pred_check
      _
    $region83: #{_lambda_.1} parent=1 // pred_check_branch
      %113 = sbr.rel (0) target = $region85
    $region84: #{_lambda_.1} parent=1 // pred_region
      _
    $region85: #{_lambda_.1} parent=1 // pred_fallthru
      _
    // Predicated region
    $region86: #{_lambda_.1} parent=1 // pred_check
      _
    $region87: #{_lambda_.1} parent=1 // pred_check_branch
      %115 = sbr.rel (0) target = $region89
    $region88: #{_lambda_.1} parent=1 // pred_region
      _
    $region89: #{_lambda_.1} parent=1 // pred_fallthru
      _
    // Predicated region
    $region90: #{_lambda_.1} parent=1 // pred_check
      _
    $region91: #{_lambda_.1} parent=1 // pred_check_branch
      %117 = sbr.rel (0) target = $region93
    $region92: #{_lambda_.1} parent=1 // pred_region
      _
    $region93: #{_lambda_.1} parent=1 // pred_fallthru
      _
    // Predicated region
    $region94: #{_lambda_.1} parent=1 // pred_check
      _
    $region95: #{_lambda_.1} parent=1 // pred_check_branch
      %119 = sbr.rel (0) target = $region97
    $region96: #{_lambda_.1} parent=1 // pred_region
      _
    $region97: #{_lambda_.1} parent=1 // pred_fallthru
      _
    // Predicated region
    $region98: #{_lambda_.1} parent=1 // pred_check
      _
    $region99: #{_lambda_.1} parent=1 // pred_check_branch
      %121 = sbr.rel (0) target = $region101
    $region100: #{_lambda_.1} parent=1 // pred_region
      _
    $region101: #{_lambda_.1} parent=1 // pred_fallthru
      _
    // Predicated region
    $region102: #{_lambda_.1} parent=1 // pred_check
      _
    $region103: #{_lambda_.1} parent=1 // pred_check_branch
      %123 = sbr.rel (0) target = $region105
    $region104: #{_lambda_.1} parent=1 // pred_region
      _
    $region105: #{_lambda_.1} parent=1 // pred_fallthru
      _
    // Predicated region
    $region106: #{_lambda_.1} parent=1 // pred_check
      _
    $region107: #{_lambda_.1} parent=1 // pred_check_branch
      %125 = sbr.rel (0) target = $region109
    $region108: #{_lambda_.1} parent=1 // pred_region
      _
    $region109: #{_lambda_.1} parent=1 // pred_fallthru
      _
    // Predicated region
    $region110: #{_lambda_.1} parent=1 // pred_check
      _
    $region111: #{_lambda_.1} parent=1 // pred_check_branch
      %127 = sbr.rel (0) target = $region113
    $region112: #{_lambda_.1} parent=1 // pred_region
      _
    $region113: #{_lambda_.1} parent=1 // pred_fallthru
      _
    // Predicated region
    $region114: #{_lambda_.1} parent=1 // pred_check
      _
    $region115: #{_lambda_.1} parent=1 // pred_check_branch
      %129 = sbr.rel (0) target = $region117
    $region116: #{_lambda_.1} parent=1 // pred_region
      _
    $region117: #{_lambda_.1} parent=1 // pred_fallthru
      _
    // Predicated region
    $region118: #{_lambda_.1} parent=1 // pred_check
      _
    $region119: #{_lambda_.1} parent=1 // pred_check_branch
      %131 = sbr.rel (0) target = $region121
    $region120: #{_lambda_.1} parent=1 // pred_region
      _
    $region121: #{_lambda_.1} parent=1 // pred_fallthru
      _
    // Predicated region
    $region122: #{_lambda_.1} parent=1 // pred_check
      _
    $region123: #{_lambda_.1} parent=1 // pred_check_branch
      %133 = sbr.rel (0) target = $region125
    $region124: #{_lambda_.1} parent=1 // pred_region
      _
    $region125: #{_lambda_.1} parent=1 // pred_fallthru
      _
    // Predicated region
    $region126: #{_lambda_.1} parent=1 // pred_check
      _
    $region127: #{_lambda_.1} parent=1 // pred_check_branch
      %135 = sbr.rel (0) target = $region129
    $region128: #{_lambda_.1} parent=1 // pred_region
      _
    $region129: #{_lambda_.1} parent=1 // pred_fallthru
      _
    %v137 = vlaneseq
    %v138 = vshrl.u32 %v137, 7
    %v139 = vadd.s32 %v138, 8
    %v140 = vlaneseq
    %v141 = vand.u32 %v140, 127
    %v142 = vcvt.s32.f32 %v138
    %v143 = vcvt.s32.f32 %v139
    %v144 = vrcp.pop 5.0
    %v145 = vmul.f32 %v142, %v144
    %v146 = vmul.f32 %v143, %v144
    %v147 = vfloor.f32 %v145
    %v148 = vfloor.f32 %v146
    %v149 = vcvt.s32.f32 %v141
    %v150 = vmul.f32 %v149, %v144
    %v151 = vfloor.f32 %v150
    %vm152 = vcmp.eq.f32.partialorder %v147, %v151
    %vm153 = vcmp.eq.f32.partialorder %v148, %v151
    %v154 = vsel %vm152, 0.0, -1e+30
    %v155 = vsel %vm153, 0.0, -1e+30
    %v156 = vld [vmem:[%s1] sm:$0xff]
    %v157 = vld [vmem:[%s1 + $0x8] sm:$0xff]
    %v158 = vld [vmem:[%s1 + $0x10] sm:$0x3]
    %v159 = vld [vmem:[%s1 + $0x18] sm:$0x3]
    %v160 = vld [vmem:[%s3] sm:$0xf]
    %v161 = vld [vmem:[%s3 + $0x4] sm:$0xf]
    %v162 = vld [vmem:[%s3 + $0x8] sm:$0xf]
    %v163 = vld [vmem:[%s3 + $0xc] sm:$0xf]
    %v164 = vld [vmem:[%s3 + $0x10] sm:$0xf]
    %v165 = vld [vmem:[%s3 + $0x14] sm:$0xf]
    %v166 = vld [vmem:[%s3 + $0x18] sm:$0xf]
    %v167 = vld [vmem:[%s3 + $0x1c] sm:$0xf]
    %v168 = vld [vmem:[%s3 + $0x20] sm:$0xf]
    %v169 = vld [vmem:[%s3 + $0x24] sm:$0xf]
    %v170 = vld [vmem:[%s3 + $0x28] sm:$0xf]
    %v171 = vld [vmem:[%s3 + $0x2c] sm:$0xf]
    %v172 = vld [vmem:[%s3 + $0x30] sm:$0xf]
    %v173 = vld [vmem:[%s3 + $0x34] sm:$0xf]
    %v174 = vld [vmem:[%s3 + $0x38] sm:$0xf]
    %v175 = vld [vmem:[%s3 + $0x3c] sm:$0xf]
    %v176 = vld [vmem:[%s3 + $0x40] sm:$0xf]
    %v177 = vld [vmem:[%s3 + $0x44] sm:$0xf]
    %v178 = vld [vmem:[%s3 + $0x48] sm:$0xf]
    %v179 = vld [vmem:[%s3 + $0x4c] sm:$0xf]
    %v180 = vld [vmem:[%s3 + $0x50] sm:$0xf]
    %v181 = vld [vmem:[%s3 + $0x54] sm:$0xf]
    %v182 = vld [vmem:[%s3 + $0x58] sm:$0xf]
    %v183 = vld [vmem:[%s3 + $0x5c] sm:$0xf]
    %v184 = vpack.c.bf16 %v158, %v156
    %v185 = vpack.c.bf16 %v159, %v157
    %v186 = vld [vmem:[%s5] sm:$0xff]
    %v187 = vld [vmem:[%s5 + $0x8] sm:$0x3]
    %v212 = vunpack.c.l.b16 %v160
    %v213 = vunpack.c.l.b16 %v161
    %v214 = vunpack.c.l.b16 %v162
    %v215 = vunpack.c.l.b16 %v163
    %v216 = vunpack.c.l.b16 %v164
    %v217 = vunpack.c.l.b16 %v165
    %v218 = vunpack.c.l.b16 %v166
    %v219 = vunpack.c.l.b16 %v167
    %v220 = vunpack.c.l.b16 %v168
    %v221 = vunpack.c.l.b16 %v169
    %v222 = vunpack.c.l.b16 %v170
    %v223 = vunpack.c.l.b16 %v171
    %v224 = vunpack.c.l.b16 %v172
    %v225 = vunpack.c.l.b16 %v173
    %v226 = vunpack.c.l.b16 %v174
    %v227 = vunpack.c.l.b16 %v175
    %v228 = vunpack.c.l.b16 %v176
    %v229 = vunpack.c.l.b16 %v177
    %v230 = vunpack.c.l.b16 %v178
    %v231 = vunpack.c.l.b16 %v179
    %v232 = vunpack.c.l.b16 %v180
    %v233 = vunpack.c.l.b16 %v181
    %v234 = vunpack.c.l.b16 %v182
    %v235 = vunpack.c.l.b16 %v183
    %v236 = vpack.c.b16 %v213, %v212
    %v237 = vpack.c.b16 %v215, %v214
    %v238 = vpack.c.b16 %v217, %v216
    %v239 = vpack.c.b16 %v219, %v218
    %v240 = vpack.c.b16 %v221, %v220
    %v241 = vpack.c.b16 %v223, %v222
    %v242 = vpack.c.b16 %v225, %v224
    %v243 = vpack.c.b16 %v227, %v226
    %v244 = vpack.c.b16 %v229, %v228
    %v245 = vpack.c.b16 %v231, %v230
    %v246 = vpack.c.b16 %v233, %v232
    %v247 = vpack.c.b16 %v235, %v234
    %vm260 = vcmask 523264
    %v262 = vsel %vm260, %v185, 0
    %264 = vmatprep.subr.bf16.mxu0 0
    %265 = vmatpush1.bf16.msra.mxu0 %v236
    %266 = vmatprep.subr.bf16.mxu0 0
    %267 = vmatpush1.bf16.msra.mxu0 %v237
    %268 = vmatprep.subr.bf16.mxu0 0
    %269 = vmatpush1.bf16.msra.mxu0 %v238
    %270 = vmatprep.subr.bf16.mxu0 0
    %271 = vmatpush1.bf16.msra.mxu0 %v239
    %272 = vmatprep.subr.bf16.mxu0 0
    %273 = vmatpush1.bf16.msra.mxu0 %v240
    %274 = vmatprep.subr.bf16.mxu0 0
    %275 = vmatpush1.bf16.msra.mxu0 %v241
    %276 = vmatprep.subr.bf16.mxu0 0
    %277 = vmatpush1.bf16.msra.mxu0 %v242
    %278 = vmatprep.subr.bf16.mxu0 0
    %279 = vmatpush1.bf16.msra.mxu0 %v243
    %280 = vmatprep.subr.bf16.mxu0 0
    %281 = vmatpush1.bf16.msra.mxu0 %v244
    %282 = vmatprep.subr.bf16.mxu0 0
    %283 = vmatpush1.bf16.msra.mxu0 %v245
    %284 = vmatprep.subr.bf16.mxu0 0
    %285 = vmatpush1.bf16.msra.mxu0 %v246
    %286 = vmatprep.subr.bf16.mxu0 0
    %287 = vmatpush1.bf16.msra.mxu0 %v247
    %288 = vmatprep.subr.bf16.mxu0 0
    %289 = vmatpush1.bf16.msra.mxu0 0
    %290 = vmatprep.subr.bf16.mxu0 0
    %291 = vmatpush1.bf16.msra.mxu0 0
    %292 = vmatprep.subr.bf16.mxu0 0
    %293 = vmatpush1.bf16.msra.mxu0 0
    %294 = vmatprep.subr.bf16.mxu0 0
    %295 = vmatpush1.bf16.msra.mxu0 0
    %296 = vmatprep.mubr.bf16.mxu0 %v262
    %297 = vmatmul.mubr.bf16.gmra.mrb[0].mxu0 %v184
    %v298 = vpop.f32.mrb[0].mxu0
    %v299 = vadd.f32 %v186, %v298
    %v300 = vpop.f32.mrb[0].mxu0
    %v301 = vpop.f32.mrb[0].mxu0
    %v302 = vadd.f32 %v187, %v301
    %v303 = vpop.f32.mrb[0].mxu0
    %304 = vdwg.mxu0
    %v305 = vld [vmem:[%s7] sm:$0x3]
    %vm306 = vcmask 261120
    %v307 = vsel %vm306, %v299, 0.0
    %308 = vadd.xlane.f32.xlu0 %v307
    %v309 = vpop.xlane.xlu0 %308
    %vm310 = vcmask 254976
    %v311 = vsel %vm310, %v302, 0.0
    %312 = vadd.xlane.f32.xlu0 %v311
    %v313 = vpop.xlane.xlu0 %312
    %v314 = vrcp.pop 32.0
    %v315 = vmul.f32 %v309, %v314
    %v316 = vmul.f32 %v313, %v314
    %v317 = vsub.f32 %v299, %v315
    %v318 = vsub.f32 %v302, %v316
    %v319 = vmul.f32 %v317, %v317
    %v320 = vmul.f32 %v318, %v318
    %v321 = vsel %vm306, %v319, 0.0
    %322 = vadd.xlane.f32.xlu0 %v321
    %v323 = vpop.xlane.xlu0 %322
    %v324 = vsel %vm310, %v320, 0.0
    %325 = vadd.xlane.f32.xlu0 %v324
    %v326 = vpop.xlane.xlu0 %325
    %v327 = vmul.f32 %v323, %v314
    %v328 = vmul.f32 %v326, %v314
    %v329 = vadd.f32 %v327, 1e-05
    %v330 = vadd.f32 %v328, 1e-05
    %v331 = vrsqrt.pop %v329
    %v332 = vrsqrt.pop %v330
    %v333 = vmul.f32 %v317, %v331
    %v334 = vmul.f32 %v318, %v332
    %v335 = vlaneseq
    %v336 = vshrl.u32 %v335, 7
    %v337 = vsub.s32 0, %v336
    %v338 = vrot.slane %v305, %v337
    %v339 = vmul.f32 %v333, %v338
    %v340 = vmul.f32 %v334, %v338
    %v341 = vlaneseq
    %v342 = vshrl.u32 %v341, 7
    %v343 = vsub.s32 1, %v342
    %v344 = vrot.slane %v305, %v343
    %v345 = vadd.f32 %v339, %v344
    %v346 = vadd.f32 %v340, %v344
    %v347 = vld [vmem:[%s11] sm:$0x3]
    %v348 = vld [vmem:[%s13] sm:$0xf]
    %v349 = vld [vmem:[%s13 + $0x4] sm:$0xf]
    %v350 = vld [vmem:[%s13 + $0x8] sm:$0xf]
    %v351 = vld [vmem:[%s13 + $0xc] sm:$0xf]
    %v352 = vld [vmem:[%s15] sm:$0x1]
    %v353 = vld [vmem:[%s17] sm:$0xf]
    %v354 = vld [vmem:[%s17 + $0x4] sm:$0xf]
    %v355 = vld [vmem:[%s17 + $0x8] sm:$0xf]
    %v356 = vld [vmem:[%s17 + $0xc] sm:$0xf]
    %v357 = vld [vmem:[%s19] sm:$0x1]
    %v358 = vld [vmem:[%s21] sm:$0x3]
    %v359 = vld [vmem:[%s23] sm:$0xf]
    %v360 = vld [vmem:[%s23 + $0x4] sm:$0xf]
    %v361 = vld [vmem:[%s23 + $0x8] sm:$0xf]
    %v362 = vld [vmem:[%s23 + $0xc] sm:$0xf]
    %v363 = vld [vmem:[%s25] sm:$0x1]
    %v364 = vld [vmem:[%s27] sm:$0xf]
    %v365 = vld [vmem:[%s27 + $0x4] sm:$0xf]
    %v366 = vld [vmem:[%s27 + $0x8] sm:$0xf]
    %v367 = vld [vmem:[%s27 + $0xc] sm:$0xf]
    %v368 = vld [vmem:[%s27 + $0x10] sm:$0xf]
    %v369 = vld [vmem:[%s27 + $0x14] sm:$0xf]
    %v370 = vld [vmem:[%s27 + $0x18] sm:$0xf]
    %v371 = vld [vmem:[%s27 + $0x1c] sm:$0xf]
    %v372 = vld [vmem:[%s27 + $0x20] sm:$0xf]
    %v373 = vld [vmem:[%s27 + $0x24] sm:$0xf]
    %v374 = vld [vmem:[%s27 + $0x28] sm:$0xf]
    %v375 = vld [vmem:[%s27 + $0x2c] sm:$0xf]
    %v376 = vld [vmem:[%s27 + $0x30] sm:$0xf]
    %v377 = vld [vmem:[%s27 + $0x34] sm:$0xf]
    %v378 = vld [vmem:[%s27 + $0x38] sm:$0xf]
    %v379 = vld [vmem:[%s27 + $0x3c] sm:$0xf]
    %v380 = vld [vmem:[%s29] sm:$0x1]
    %v381 = vsel %vm306, %v345, 0.0
    %382 = vadd.xlane.f32.xlu0 %v381
    %v383 = vpop.xlane.xlu0 %382
    %v384 = vsel %vm310, %v346, 0.0
    %385 = vadd.xlane.f32.xlu0 %v384
    %v386 = vpop.xlane.xlu0 %385
    %v387 = vmul.f32 %v383, %v314
    %v388 = vmul.f32 %v386, %v314
    %v389 = vsub.f32 %v345, %v387
    %v390 = vsub.f32 %v346, %v388
    %v391 = vmul.f32 %v389, %v389
    %v392 = vmul.f32 %v390, %v390
    %v393 = vsel %vm306, %v391, 0.0
    %394 = vadd.xlane.f32.xlu0 %v393
    %v395 = vpop.xlane.xlu0 %394
    %v396 = vsel %vm310, %v392, 0.0
    %397 = vadd.xlane.f32.xlu0 %v396
    %v398 = vpop.xlane.xlu0 %397
    %v399 = vmul.f32 %v395, %v314
    %v400 = vmul.f32 %v398, %v314
    %v401 = vadd.f32 %v399, 1e-05
    %v402 = vadd.f32 %v400, 1e-05
    %v403 = vrsqrt.pop %v401
    %v404 = vrsqrt.pop %v402
    %v405 = vmul.f32 %v389, %v403
    %v406 = vmul.f32 %v390, %v404
    %v407 = vlaneseq
    %v408 = vshrl.u32 %v407, 7
    %v409 = vsub.s32 0, %v408
    %v410 = vrot.slane %v347, %v409
    %v411 = vmul.f32 %v405, %v410
    %v412 = vmul.f32 %v406, %v410
    %v413 = vlaneseq
    %v414 = vshrl.u32 %v413, 7
    %v415 = vsub.s32 1, %v414
    %v416 = vrot.slane %v347, %v415
    %v417 = vadd.f32 %v411, %v416
    %v418 = vadd.f32 %v412, %v416
    %v419 = vpack.c.bf16 %v418, %v417
    %v421 = vlaneseq
    %v422 = vshrl.u32 %v421, 7
    %v423 = vsub.s32 0, %v422
    %v424 = vrot.slane %v352, %v423
    %v430 = vunpack.c.l.b16 %v348
    %v431 = vunpack.c.l.b16 %v349
    %v432 = vunpack.c.l.b16 %v350
    %v433 = vunpack.c.l.b16 %v351
    %v434 = vpack.c.b16 %v431, %v430
    %v435 = vpack.c.b16 %v433, %v432
    %v439 = vsel %vm306, %v419, 0
    %441 = vmatprep.subr.bf16.mxu0 0
    %442 = vmatpush1.bf16.msra.mxu0 %v434
    %443 = vmatprep.subr.bf16.mxu0 0
    %444 = vmatpush1.bf16.msra.mxu0 %v435
    %445 = vmatprep.subr.bf16.mxu0 0
    %446 = vmatpush1.bf16.msra.mxu0 0
    %447 = vmatprep.subr.bf16.mxu0 0
    %448 = vmatpush1.bf16.msra.mxu0 0
    %449 = vmatprep.subr.bf16.mxu0 0
    %450 = vmatpush1.bf16.msra.mxu0 0
    %451 = vmatprep.subr.bf16.mxu0 0
    %452 = vmatpush1.bf16.msra.mxu0 0
    %453 = vmatprep.subr.bf16.mxu0 0
    %454 = vmatpush1.bf16.msra.mxu0 0
    %455 = vmatprep.subr.bf16.mxu0 0
    %456 = vmatpush1.bf16.msra.mxu0 0
    %457 = vmatprep.subr.bf16.mxu0 0
    %458 = vmatpush1.bf16.msra.mxu0 0
    %459 = vmatprep.subr.bf16.mxu0 0
    %460 = vmatpush1.bf16.msra.mxu0 0
    %461 = vmatprep.subr.bf16.mxu0 0
    %462 = vmatpush1.bf16.msra.mxu0 0
    %463 = vmatprep.subr.bf16.mxu0 0
    %464 = vmatpush1.bf16.msra.mxu0 0
    %465 = vmatprep.subr.bf16.mxu0 0
    %466 = vmatpush1.bf16.msra.mxu0 0
    %467 = vmatprep.subr.bf16.mxu0 0
    %468 = vmatpush1.bf16.msra.mxu0 0
    %469 = vmatprep.subr.bf16.mxu0 0
    %470 = vmatpush1.bf16.msra.mxu0 0
    %471 = vmatprep.subr.bf16.mxu0 0
    %472 = vmatpush1.bf16.msra.mxu0 0
    %473 = vmatprep.mubr.bf16.mxu0 0
    %474 = vmatmul.mubr.bf16.gmra.mrb[0].mxu0 %v439
    %v475 = vpop.f32.mrb[0].mxu0
    %v476 = vadd.f32 %v424, %v475
    %v477 = vpop.f32.mrb[0].mxu0
    %v478 = vpop.f32.mrb[0].mxu0
    %v479 = vadd.f32 %v424, %v478
    %v480 = vpop.f32.mrb[0].mxu0
    %481 = vdwg.mxu0
    %v482 = vpack.c.bf16 %v479, %v476
    %484 = vrot.lane.b32.xlu0 %v482, 96
    %v485 = vpop.permute.xlu0 %484
    %vm486 = vcmask 130048
    %v488 = vsel %vm486, %v482, 0
    %v491 = vsel %vm486, %v485, 0
    %493 = vmatprep.subr.bf16.mxu0 0
    %494 = vmatpush1.bf16.xpose.msra.mxu0 %v491
    %495 = vmatprep.subr.bf16.mxu0 0
    %496 = vmatpush1.bf16.xpose.msra.mxu0 0
    %497 = vmatprep.subr.bf16.mxu0 0
    %498 = vmatpush1.bf16.xpose.msra.mxu0 0
    %499 = vmatprep.subr.bf16.mxu0 0
    %500 = vmatpush1.bf16.xpose.msra.mxu0 0
    %501 = vmatprep.subr.bf16.mxu0 0
    %502 = vmatpush1.bf16.xpose.msra.mxu0 0
    %503 = vmatprep.subr.bf16.mxu0 0
    %504 = vmatpush1.bf16.xpose.msra.mxu0 0
    %505 = vmatprep.subr.bf16.mxu0 0
    %506 = vmatpush1.bf16.xpose.msra.mxu0 0
    %507 = vmatprep.subr.bf16.mxu0 0
    %508 = vmatpush1.bf16.xpose.msra.mxu0 0
    %509 = vmatprep.subr.bf16.mxu0 0
    %510 = vmatpush1.bf16.xpose.msra.mxu0 0
    %511 = vmatprep.subr.bf16.mxu0 0
    %512 = vmatpush1.bf16.xpose.msra.mxu0 0
    %513 = vmatprep.subr.bf16.mxu0 0
    %514 = vmatpush1.bf16.xpose.msra.mxu0 0
    %515 = vmatprep.subr.bf16.mxu0 0
    %516 = vmatpush1.bf16.xpose.msra.mxu0 0
    %517 = vmatprep.subr.bf16.mxu0 0
    %518 = vmatpush1.bf16.xpose.msra.mxu0 0
    %519 = vmatprep.subr.bf16.mxu0 0
    %520 = vmatpush1.bf16.xpose.msra.mxu0 0
    %521 = vmatprep.subr.bf16.mxu0 0
    %522 = vmatpush1.bf16.xpose.msra.mxu0 0
    %523 = vmatprep.subr.bf16.mxu0 0
    %524 = vmatpush1.bf16.xpose.msra.mxu0 0
    %525 = vmatprep.mubr.bf16.mxu0 0
    %526 = vmatmul.mubr.bf16.gmra.mrb[0].mxu0 %v488
    %v527 = vpop.f32.mrb[0].mxu0
    %v528 = vadd.f32 0.0, %v527
    %v529 = vpop.f32.mrb[0].mxu0
    %v530 = vpop.f32.mrb[0].mxu0
    %v531 = vadd.f32 0.0, %v530
    %v532 = vpop.f32.mrb[0].mxu0
    %533 = vdwg.mxu0
    %v534 = vmul.f32 %v528, 0.25
    %v535 = vmul.f32 %v531, 0.25
    %v536 = vadd.f32 %v534, %v154
    %v537 = vadd.f32 %v535, %v155
    %vm538 = vcmask 80896
    %v539 = vsel %vm538, %v536, -inf
    %540 = vmax.xlane.f32.xlu0 %v539
    %v541 = vpop.xlane.xlu0 %540
    %vm542 = vcmask 74752
    %v543 = vsel %vm542, %v537, -inf
    %544 = vmax.xlane.f32.xlu0 %v543
    %v545 = vpop.xlane.xlu0 %544
    %v546 = vsub.f32 %v536, %v541
    %v547 = vsub.f32 %v537, %v545
    %v548 = vmul.f32 %v546, 1.442695
    %v549 = vpow.pop %v548
    %v550 = vmul.f32 %v547, 1.442695
    %v551 = vpow.pop %v550
    %v552 = vsel %vm538, %v549, 0.0
    %553 = vadd.xlane.f32.xlu0 %v552
    %v554 = vpop.xlane.xlu0 %553
    %v555 = vsel %vm542, %v551, 0.0
    %556 = vadd.xlane.f32.xlu0 %v555
    %v557 = vpop.xlane.xlu0 %556
    %v558 = vrcp.pop %v554
    %v559 = vrcp.pop %v557
    %v560 = vmul.f32 %v549, %v558
    %v561 = vmul.f32 %v551, %v559
    %v562 = vpack.c.bf16 %v561, %v560
    %563 = vrot.lane.b32.xlu0 %v482, 64
    %v564 = vpop.permute.xlu0 %563
    %v566 = vsel %vm538, %v562, 0
    %vm568 = vcmask 1044480
    %v570 = vsel %vm568, %v564, 0
    %572 = vmatprep.subr.bf16.mxu0 0
    %573 = vmatpush1.bf16.msra.mxu0 %v570
    %574 = vmatprep.subr.bf16.mxu0 0
    %575 = vmatpush1.bf16.msra.mxu0 0
    %576 = vmatprep.subr.bf16.mxu0 0
    %577 = vmatpush1.bf16.msra.mxu0 0
    %578 = vmatprep.subr.bf16.mxu0 0
    %579 = vmatpush1.bf16.msra.mxu0 0
    %580 = vmatprep.subr.bf16.mxu0 0
    %581 = vmatpush1.bf16.msra.mxu0 0
    %582 = vmatprep.subr.bf16.mxu0 0
    %583 = vmatpush1.bf16.msra.mxu0 0
    %584 = vmatprep.subr.bf16.mxu0 0
    %585 = vmatpush1.bf16.msra.mxu0 0
    %586 = vmatprep.subr.bf16.mxu0 0
    %587 = vmatpush1.bf16.msra.mxu0 0
    %588 = vmatprep.subr.bf16.mxu0 0
    %589 = vmatpush1.bf16.msra.mxu0 0
    %590 = vmatprep.subr.bf16.mxu0 0
    %591 = vmatpush1.bf16.msra.mxu0 0
    %592 = vmatprep.subr.bf16.mxu0 0
    %593 = vmatpush1.bf16.msra.mxu0 0
    %594 = vmatprep.subr.bf16.mxu0 0
    %595 = vmatpush1.bf16.msra.mxu0 0
    %596 = vmatprep.subr.bf16.mxu0 0
    %597 = vmatpush1.bf16.msra.mxu0 0
    %598 = vmatprep.subr.bf16.mxu0 0
    %599 = vmatpush1.bf16.msra.mxu0 0
    %600 = vmatprep.subr.bf16.mxu0 0
    %601 = vmatpush1.bf16.msra.mxu0 0
    %602 = vmatprep.subr.bf16.mxu0 0
    %603 = vmatpush1.bf16.msra.mxu0 0
    %604 = vmatprep.mubr.bf16.mxu0 0
    %605 = vmatmul.mubr.bf16.gmra.mrb[0].mxu0 %v566
    %v606 = vpop.f32.mrb[0].mxu0
    %v607 = vadd.f32 0.0, %v606
    %v608 = vpop.f32.mrb[0].mxu0
    %v609 = vpop.f32.mrb[0].mxu0
    %v610 = vadd.f32 0.0, %v609
    %v611 = vpop.f32.mrb[0].mxu0
    %612 = vdwg.mxu0
    %613 = vrot.lane.b32.xlu0 %v482, 112
    %v614 = vpop.permute.xlu0 %613
    %615 = vrot.lane.b32.xlu0 %v482, 80
    %v616 = vpop.permute.xlu0 %615
    %v618 = vsel %vm486, %v614, 0
    %v621 = vsel %vm486, %v616, 0
    %623 = vmatprep.subr.bf16.mxu0 0
    %624 = vmatpush1.bf16.xpose.msra.mxu0 %v621
    %625 = vmatprep.subr.bf16.mxu0 0
    %626 = vmatpush1.bf16.xpose.msra.mxu0 0
    %627 = vmatprep.subr.bf16.mxu0 0
    %628 = vmatpush1.bf16.xpose.msra.mxu0 0
    %629 = vmatprep.subr.bf16.mxu0 0
    %630 = vmatpush1.bf16.xpose.msra.mxu0 0
    %631 = vmatprep.subr.bf16.mxu0 0
    %632 = vmatpush1.bf16.xpose.msra.mxu0 0
    %633 = vmatprep.subr.bf16.mxu0 0
    %634 = vmatpush1.bf16.xpose.msra.mxu0 0
    %635 = vmatprep.subr.bf16.mxu0 0
    %636 = vmatpush1.bf16.xpose.msra.mxu0 0
    %637 = vmatprep.subr.bf16.mxu0 0
    %638 = vmatpush1.bf16.xpose.msra.mxu0 0
    %639 = vmatprep.subr.bf16.mxu0 0
    %640 = vmatpush1.bf16.xpose.msra.mxu0 0
    %641 = vmatprep.subr.bf16.mxu0 0
    %642 = vmatpush1.bf16.xpose.msra.mxu0 0
    %643 = vmatprep.subr.bf16.mxu0 0
    %644 = vmatpush1.bf16.xpose.msra.mxu0 0
    %645 = vmatprep.subr.bf16.mxu0 0
    %646 = vmatpush1.bf16.xpose.msra.mxu0 0
    %647 = vmatprep.subr.bf16.mxu0 0
    %648 = vmatpush1.bf16.xpose.msra.mxu0 0
    %649 = vmatprep.subr.bf16.mxu0 0
    %650 = vmatpush1.bf16.xpose.msra.mxu0 0
    %651 = vmatprep.subr.bf16.mxu0 0
    %652 = vmatpush1.bf16.xpose.msra.mxu0 0
    %653 = vmatprep.subr.bf16.mxu0 0
    %654 = vmatpush1.bf16.xpose.msra.mxu0 0
    %655 = vmatprep.mubr.bf16.mxu0 0
    %656 = vmatmul.mubr.bf16.gmra.mrb[0].mxu0 %v618
    %v657 = vpop.f32.mrb[0].mxu0
    %v658 = vadd.f32 0.0, %v657
    %v659 = vpop.f32.mrb[0].mxu0
    %v660 = vpop.f32.mrb[0].mxu0
    %v661 = vadd.f32 0.0, %v660
    %v662 = vpop.f32.mrb[0].mxu0
    %663 = vdwg.mxu0
    %v664 = vmul.f32 %v658, 0.25
    %v665 = vmul.f32 %v661, 0.25
    %v666 = vadd.f32 %v664, %v154
    %v667 = vadd.f32 %v665, %v155
    %v668 = vsel %vm538, %v666, -inf
    %669 = vmax.xlane.f32.xlu0 %v668
    %v670 = vpop.xlane.xlu0 %669
    %v671 = vsel %vm542, %v667, -inf
    %672 = vmax.xlane.f32.xlu0 %v671
    %v673 = vpop.xlane.xlu0 %672
    %v674 = vsub.f32 %v666, %v670
    %v675 = vsub.f32 %v667, %v673
    %v676 = vmul.f32 %v674, 1.442695
    %v677 = vpow.pop %v676
    %v678 = vmul.f32 %v675, 1.442695
    %v679 = vpow.pop %v678
    %v680 = vsel %vm538, %v677, 0.0
    %681 = vadd.xlane.f32.xlu0 %v680
    %v682 = vpop.xlane.xlu0 %681
    %v683 = vsel %vm542, %v679, 0.0
    %684 = vadd.xlane.f32.xlu0 %v683
    %v685 = vpop.xlane.xlu0 %684
    %v686 = vrcp.pop %v682
    %v687 = vrcp.pop %v685
    %v688 = vmul.f32 %v677, %v686
    %v689 = vmul.f32 %v679, %v687
    %v690 = vpack.c.bf16 %v689, %v688
    %691 = vrot.lane.b32.xlu0 %v482, 48
    %v692 = vpop.permute.xlu0 %691
    %v694 = vsel %vm538, %v690, 0
    %v697 = vsel %vm568, %v692, 0
    %699 = vmatprep.subr.bf16.mxu0 0
    %700 = vmatpush1.bf16.msra.mxu0 %v697
    %701 = vmatprep.subr.bf16.mxu0 0
    %702 = vmatpush1.bf16.msra.mxu0 0
    %703 = vmatprep.subr.bf16.mxu0 0
    %704 = vmatpush1.bf16.msra.mxu0 0
    %705 = vmatprep.subr.bf16.mxu0 0
    %706 = vmatpush1.bf16.msra.mxu0 0
    %707 = vmatprep.subr.bf16.mxu0 0
    %708 = vmatpush1.bf16.msra.mxu0 0
    %709 = vmatprep.subr.bf16.mxu0 0
    %710 = vmatpush1.bf16.msra.mxu0 0
    %711 = vmatprep.subr.bf16.mxu0 0
    %712 = vmatpush1.bf16.msra.mxu0 0
    %713 = vmatprep.subr.bf16.mxu0 0
    %714 = vmatpush1.bf16.msra.mxu0 0
    %715 = vmatprep.subr.bf16.mxu0 0
    %716 = vmatpush1.bf16.msra.mxu0 0
    %717 = vmatprep.subr.bf16.mxu0 0
    %718 = vmatpush1.bf16.msra.mxu0 0
    %719 = vmatprep.subr.bf16.mxu0 0
    %720 = vmatpush1.bf16.msra.mxu0 0
    %721 = vmatprep.subr.bf16.mxu0 0
    %722 = vmatpush1.bf16.msra.mxu0 0
    %723 = vmatprep.subr.bf16.mxu0 0
    %724 = vmatpush1.bf16.msra.mxu0 0
    %725 = vmatprep.subr.bf16.mxu0 0
    %726 = vmatpush1.bf16.msra.mxu0 0
    %727 = vmatprep.subr.bf16.mxu0 0
    %728 = vmatpush1.bf16.msra.mxu0 0
    %729 = vmatprep.subr.bf16.mxu0 0
    %730 = vmatpush1.bf16.msra.mxu0 0
    %731 = vmatprep.mubr.bf16.mxu0 0
    %732 = vmatmul.mubr.bf16.gmra.mrb[0].mxu0 %v694
    %v733 = vpop.f32.mrb[0].mxu0
    %v734 = vadd.f32 0.0, %v733
    %v735 = vpop.f32.mrb[0].mxu0
    %v736 = vpop.f32.mrb[0].mxu0
    %v737 = vadd.f32 0.0, %v736
    %v738 = vpop.f32.mrb[0].mxu0
    %739 = vdwg.mxu0
    %742 = vrot.lane.b32.xlu0 %v734, 16
    %v743 = vpop.permute.xlu0 %742
    %744 = vrot.lane.b32.xlu0 %v737, 16
    %v745 = vpop.permute.xlu0 %744
    %v748 = vsel %vm486, %v607, %v743
    %v749 = vsel %vm486, %v610, %v745
    %v750 = vpack.c.bf16 %v749, %v748
    %v755 = vunpack.c.l.b16 %v353
    %v756 = vunpack.c.l.b16 %v354
    %v757 = vunpack.c.l.b16 %v355
    %v758 = vunpack.c.l.b16 %v356
    %v759 = vpack.c.b16 %v756, %v755
    %v760 = vpack.c.b16 %v758, %v757
    %v764 = vsel %vm306, %v750, 0
    %766 = vmatprep.subr.bf16.mxu0 0
    %767 = vmatpush1.bf16.msra.mxu0 %v759
    %768 = vmatprep.subr.bf16.mxu0 0
    %769 = vmatpush1.bf16.msra.mxu0 %v760
    %770 = vmatprep.subr.bf16.mxu0 0
    %771 = vmatpush1.bf16.msra.mxu0 0
    %772 = vmatprep.subr.bf16.mxu0 0
    %773 = vmatpush1.bf16.msra.mxu0 0
    %774 = vmatprep.subr.bf16.mxu0 0
    %775 = vmatpush1.bf16.msra.mxu0 0
    %776 = vmatprep.subr.bf16.mxu0 0
    %777 = vmatpush1.bf16.msra.mxu0 0
    %778 = vmatprep.subr.bf16.mxu0 0
    %779 = vmatpush1.bf16.msra.mxu0 0
    %780 = vmatprep.subr.bf16.mxu0 0
    %781 = vmatpush1.bf16.msra.mxu0 0
    %782 = vmatprep.subr.bf16.mxu0 0
    %783 = vmatpush1.bf16.msra.mxu0 0
    %784 = vmatprep.subr.bf16.mxu0 0
    %785 = vmatpush1.bf16.msra.mxu0 0
    %786 = vmatprep.subr.bf16.mxu0 0
    %787 = vmatpush1.bf16.msra.mxu0 0
    %788 = vmatprep.subr.bf16.mxu0 0
    %789 = vmatpush1.bf16.msra.mxu0 0
    %790 = vmatprep.subr.bf16.mxu0 0
    %791 = vmatpush1.bf16.msra.mxu0 0
    %792 = vmatprep.subr.bf16.mxu0 0
    %793 = vmatpush1.bf16.msra.mxu0 0
    %794 = vmatprep.subr.bf16.mxu0 0
    %795 = vmatpush1.bf16.msra.mxu0 0
    %796 = vmatprep.subr.bf16.mxu0 0
    %797 = vmatpush1.bf16.msra.mxu0 0
    %798 = vmatprep.mubr.bf16.mxu0 0
    %799 = vmatmul.mubr.bf16.gmra.mrb[0].mxu0 %v764
    %v800 = vpop.f32.mrb[0].mxu0
    %v801 = vadd.f32 0.0, %v800
    %v802 = vpop.f32.mrb[0].mxu0
    %v803 = vpop.f32.mrb[0].mxu0
    %v804 = vadd.f32 0.0, %v803
    %v805 = vpop.f32.mrb[0].mxu0
    %806 = vdwg.mxu0
    %v807 = vadd.f32 %v345, %v801
    %v808 = vadd.f32 %v346, %v804
    %v810 = vlaneseq
    %v811 = vshrl.u32 %v810, 7
    %v812 = vsub.s32 0, %v811
    %v813 = vrot.slane %v357, %v812
    %v815 = vadd.f32 %v807, %v813
    %v816 = vadd.f32 %v808, %v813
    %v817 = vsel %vm306, %v815, 0.0
    %818 = vadd.xlane.f32.xlu0 %v817
    %v819 = vpop.xlane.xlu0 %818
    %v820 = vsel %vm310, %v816, 0.0
    %821 = vadd.xlane.f32.xlu0 %v820
    %v822 = vpop.xlane.xlu0 %821
    %v823 = vmul.f32 %v819, %v314
    %v824 = vmul.f32 %v822, %v314
    %v825 = vsub.f32 %v815, %v823
    %v826 = vsub.f32 %v816, %v824
    %v827 = vmul.f32 %v825, %v825
    %v828 = vmul.f32 %v826, %v826
    %v829 = vsel %vm306, %v827, 0.0
    %830 = vadd.xlane.f32.xlu0 %v829
    %v831 = vpop.xlane.xlu0 %830
    %v832 = vsel %vm310, %v828, 0.0
    %833 = vadd.xlane.f32.xlu0 %v832
    %v834 = vpop.xlane.xlu0 %833
    %v835 = vmul.f32 %v831, %v314
    %v836 = vmul.f32 %v834, %v314
    %v837 = vadd.f32 %v835, 1e-05
    %v838 = vadd.f32 %v836, 1e-05
    %v839 = vrsqrt.pop %v837
    %v840 = vrsqrt.pop %v838
    %v841 = vmul.f32 %v825, %v839
    %v842 = vmul.f32 %v826, %v840
    %v843 = vlaneseq
    %v844 = vshrl.u32 %v843, 7
    %v845 = vsub.s32 0, %v844
    %v846 = vrot.slane %v358, %v845
    %v847 = vmul.f32 %v841, %v846
    %v848 = vmul.f32 %v842, %v846
    %v849 = vlaneseq
    %v850 = vshrl.u32 %v849, 7
    %v851 = vsub.s32 1, %v850
    %v852 = vrot.slane %v358, %v851
    %v853 = vadd.f32 %v847, %v852
    %v854 = vadd.f32 %v848, %v852
    %v855 = vpack.c.bf16 %v854, %v853
    %v857 = vlaneseq
    %v858 = vshrl.u32 %v857, 7
    %v859 = vsub.s32 0, %v858
    %v860 = vrot.slane %v363, %v859
    %v866 = vunpack.c.l.b16 %v359
    %v867 = vunpack.c.l.b16 %v360
    %v868 = vunpack.c.l.b16 %v361
    %v869 = vunpack.c.l.b16 %v362
    %v870 = vpack.c.b16 %v867, %v866
    %v871 = vpack.c.b16 %v869, %v868
    %v875 = vsel %vm306, %v855, 0
    %877 = vmatprep.subr.bf16.mxu0 0
    %878 = vmatpush1.bf16.msra.mxu0 %v870
    %879 = vmatprep.subr.bf16.mxu0 0
    %880 = vmatpush1.bf16.msra.mxu0 %v871
    %881 = vmatprep.subr.bf16.mxu0 0
    %882 = vmatpush1.bf16.msra.mxu0 0
    %883 = vmatprep.subr.bf16.mxu0 0
    %884 = vmatpush1.bf16.msra.mxu0 0
    %885 = vmatprep.subr.bf16.mxu0 0
    %886 = vmatpush1.bf16.msra.mxu0 0
    %887 = vmatprep.subr.bf16.mxu0 0
    %888 = vmatpush1.bf16.msra.mxu0 0
    %889 = vmatprep.subr.bf16.mxu0 0
    %890 = vmatpush1.bf16.msra.mxu0 0
    %891 = vmatprep.subr.bf16.mxu0 0
    %892 = vmatpush1.bf16.msra.mxu0 0
    %893 = vmatprep.subr.bf16.mxu0 0
    %894 = vmatpush1.bf16.msra.mxu0 0
    %895 = vmatprep.subr.bf16.mxu0 0
    %896 = vmatpush1.bf16.msra.mxu0 0
    %897 = vmatprep.subr.bf16.mxu0 0
    %898 = vmatpush1.bf16.msra.mxu0 0
    %899 = vmatprep.subr.bf16.mxu0 0
    %900 = vmatpush1.bf16.msra.mxu0 0
    %901 = vmatprep.subr.bf16.mxu0 0
    %902 = vmatpush1.bf16.msra.mxu0 0
    %903 = vmatprep.subr.bf16.mxu0 0
    %904 = vmatpush1.bf16.msra.mxu0 0
    %905 = vmatprep.subr.bf16.mxu0 0
    %906 = vmatpush1.bf16.msra.mxu0 0
    %907 = vmatprep.subr.bf16.mxu0 0
    %908 = vmatpush1.bf16.msra.mxu0 0
    %909 = vmatprep.mubr.bf16.mxu0 0
    %910 = vmatmul.mubr.bf16.gmra.mrb[0].mxu0 %v875
    %v911 = vpop.f32.mrb[0].mxu0
    %v912 = vadd.f32 %v860, %v911
    %v913 = vpop.f32.mrb[0].mxu0
    %v914 = vpop.f32.mrb[0].mxu0
    %v915 = vadd.f32 %v860, %v914
    %v916 = vpop.f32.mrb[0].mxu0
    %917 = vdwg.mxu0
    %v918 = vmul.f32 %v912, 1.702
    %v919 = vmul.f32 %v915, 1.702
    %v920 = vxor.u32 %v918, 2147483648
    %v921 = vxor.u32 %v919, 2147483648
    %v922 = vmul.f32 %v920, 1.442695
    %v923 = vpow.pop %v922
    %v924 = vmul.f32 %v921, 1.442695
    %v925 = vpow.pop %v924
    %v926 = vadd.f32 %v923, 1.0
    %v927 = vadd.f32 %v925, 1.0
    %v928 = vrcp.pop %v926
    %v929 = vmul.f32 1.0, %v928
    %v930 = vrcp.pop %v927
    %v931 = vmul.f32 1.0, %v930
    %v932 = vmul.f32 %v912, %v929
    %v933 = vmul.f32 %v915, %v931
    %v934 = vpack.c.bf16 %v933, %v932
    %v951 = vunpack.c.l.b16 %v364
    %v952 = vunpack.c.l.b16 %v365
    %v953 = vunpack.c.l.b16 %v366
    %v954 = vunpack.c.l.b16 %v367
    %v955 = vunpack.c.l.b16 %v368
    %v956 = vunpack.c.l.b16 %v369
    %v957 = vunpack.c.l.b16 %v370
    %v958 = vunpack.c.l.b16 %v371
    %v959 = vunpack.c.l.b16 %v372
    %v960 = vunpack.c.l.b16 %v373
    %v961 = vunpack.c.l.b16 %v374
    %v962 = vunpack.c.l.b16 %v375
    %v963 = vunpack.c.l.b16 %v376
    %v964 = vunpack.c.l.b16 %v377
    %v965 = vunpack.c.l.b16 %v378
    %v966 = vunpack.c.l.b16 %v379
    %v967 = vpack.c.b16 %v952, %v951
    %v968 = vpack.c.b16 %v954, %v953
    %v969 = vpack.c.b16 %v956, %v955
    %v970 = vpack.c.b16 %v958, %v957
    %v971 = vpack.c.b16 %v960, %v959
    %v972 = vpack.c.b16 %v962, %v961
    %v973 = vpack.c.b16 %v964, %v963
    %v974 = vpack.c.b16 %v966, %v965
    %983 = vmatprep.subr.bf16.mxu0 0
    %984 = vmatpush1.bf16.msra.mxu0 %v967
    %985 = vmatprep.subr.bf16.mxu0 0
    %986 = vmatpush1.bf16.msra.mxu0 %v968
    %987 = vmatprep.subr.bf16.mxu0 0
    %988 = vmatpush1.bf16.msra.mxu0 %v969
    %989 = vmatprep.subr.bf16.mxu0 0
    %990 = vmatpush1.bf16.msra.mxu0 %v970
    %991 = vmatprep.subr.bf16.mxu0 0
    %992 = vmatpush1.bf16.msra.mxu0 %v971
    %993 = vmatprep.subr.bf16.mxu0 0
    %994 = vmatpush1.bf16.msra.mxu0 %v972
    %995 = vmatprep.subr.bf16.mxu0 0
    %996 = vmatpush1.bf16.msra.mxu0 %v973
    %997 = vmatprep.subr.bf16.mxu0 0
    %998 = vmatpush1.bf16.msra.mxu0 %v974
    %999 = vmatprep.subr.bf16.mxu0 0
    %1000 = vmatpush1.bf16.msra.mxu0 0
    %1001 = vmatprep.subr.bf16.mxu0 0
    %1002 = vmatpush1.bf16.msra.mxu0 0
    %1003 = vmatprep.subr.bf16.mxu0 0
    %1004 = vmatpush1.bf16.msra.mxu0 0
    %1005 = vmatprep.subr.bf16.mxu0 0
    %1006 = vmatpush1.bf16.msra.mxu0 0
    %1007 = vmatprep.subr.bf16.mxu0 0
    %1008 = vmatpush1.bf16.msra.mxu0 0
    %1009 = vmatprep.subr.bf16.mxu0 0
    %1010 = vmatpush1.bf16.msra.mxu0 0
    %1011 = vmatprep.subr.bf16.mxu0 0
    %1012 = vmatpush1.bf16.msra.mxu0 0
    %1013 = vmatprep.subr.bf16.mxu0 0
    %1014 = vmatpush1.bf16.msra.mxu0 0
    %1015 = vmatprep.mubr.bf16.mxu0 0
    %1016 = vmatmul.mubr.bf16.gmra.mrb[0].mxu0 %v934
    %v1017 = vpop.f32.mrb[0].mxu0
    %v1018 = vadd.f32 0.0, %v1017
    %v1019 = vpop.f32.mrb[0].mxu0
    %v1020 = vpop.f32.mrb[0].mxu0
    %v1021 = vadd.f32 0.0, %v1020
    %v1022 = vpop.f32.mrb[0].mxu0
    %1023 = vdwg.mxu0
    %v1024 = vadd.f32 %v815, %v1018
    %v1025 = vadd.f32 %v816, %v1021
    %v1027 = vlaneseq
    %v1028 = vshrl.u32 %v1027, 7
    %v1029 = vsub.s32 0, %v1028
    %v1030 = vrot.slane %v380, %v1029
    %v1032 = vadd.f32 %v1024, %v1030
    %v1033 = vadd.f32 %v1025, %v1030
    %s1034 = scalar_lea.vmem %s11, 2
    %v1035 = vld [vmem:[%s1034] sm:$0x3]
    %s1036 = scalar_lea.vmem %s13, 16
    %v1037 = vld [vmem:[%s1036] sm:$0xf]
    %v1038 = vld [vmem:[%s1036 + $0x4] sm:$0xf]
    %v1039 = vld [vmem:[%s1036 + $0x8] sm:$0xf]
    %v1040 = vld [vmem:[%s1036 + $0xc] sm:$0xf]
    %s1041 = scalar_lea.vmem %s15, 1
    %v1042 = vld [vmem:[%s1041] sm:$0x1]
    %s1043 = scalar_lea.vmem %s17, 16
    %v1044 = vld [vmem:[%s1043] sm:$0xf]
    %v1045 = vld [vmem:[%s1043 + $0x4] sm:$0xf]
    %v1046 = vld [vmem:[%s1043 + $0x8] sm:$0xf]
    %v1047 = vld [vmem:[%s1043 + $0xc] sm:$0xf]
    %s1048 = scalar_lea.vmem %s19, 1
    %v1049 = vld [vmem:[%s1048] sm:$0x1]
    %s1050 = scalar_lea.vmem %s21, 2
    %v1051 = vld [vmem:[%s1050] sm:$0x3]
    %s1052 = scalar_lea.vmem %s23, 16
    %v1053 = vld [vmem:[%s1052] sm:$0xf]
    %v1054 = vld [vmem:[%s1052 + $0x4] sm:$0xf]
    %v1055 = vld [vmem:[%s1052 + $0x8] sm:$0xf]
    %v1056 = vld [vmem:[%s1052 + $0xc] sm:$0xf]
    %s1057 = scalar_lea.vmem %s25, 1
    %v1058 = vld [vmem:[%s1057] sm:$0x1]
    %s1059 = scalar_lea.vmem %s27, 64
    %v1060 = vld [vmem:[%s1059] sm:$0xf]
    %v1061 = vld [vmem:[%s1059 + $0x4] sm:$0xf]
    %v1062 = vld [vmem:[%s1059 + $0x8] sm:$0xf]
    %v1063 = vld [vmem:[%s1059 + $0xc] sm:$0xf]
    %v1064 = vld [vmem:[%s1059 + $0x10] sm:$0xf]
    %v1065 = vld [vmem:[%s1059 + $0x14] sm:$0xf]
    %v1066 = vld [vmem:[%s1059 + $0x18] sm:$0xf]
    %v1067 = vld [vmem:[%s1059 + $0x1c] sm:$0xf]
    %v1068 = vld [vmem:[%s1059 + $0x20] sm:$0xf]
    %v1069 = vld [vmem:[%s1059 + $0x24] sm:$0xf]
    %v1070 = vld [vmem:[%s1059 + $0x28] sm:$0xf]
    %v1071 = vld [vmem:[%s1059 + $0x2c] sm:$0xf]
    %v1072 = vld [vmem:[%s1059 + $0x30] sm:$0xf]
    %v1073 = vld [vmem:[%s1059 + $0x34] sm:$0xf]
    %v1074 = vld [vmem:[%s1059 + $0x38] sm:$0xf]
    %v1075 = vld [vmem:[%s1059 + $0x3c] sm:$0xf]
    %s1076 = scalar_lea.vmem %s29, 1
    %v1077 = vld [vmem:[%s1076] sm:$0x1]
    %v1078 = vsel %vm306, %v1032, 0.0
    %1079 = vadd.xlane.f32.xlu0 %v1078
    %v1080 = vpop.xlane.xlu0 %1079
    %v1081 = vsel %vm310, %v1033, 0.0
    %1082 = vadd.xlane.f32.xlu0 %v1081
    %v1083 = vpop.xlane.xlu0 %1082
    %v1084 = vmul.f32 %v1080, %v314
    %v1085 = vmul.f32 %v1083, %v314
    %v1086 = vsub.f32 %v1032, %v1084
    %v1087 = vsub.f32 %v1033, %v1085
    %v1088 = vmul.f32 %v1086, %v1086
    %v1089 = vmul.f32 %v1087, %v1087
    %v1090 = vsel %vm306, %v1088, 0.0
    %1091 = vadd.xlane.f32.xlu0 %v1090
    %v1092 = vpop.xlane.xlu0 %1091
    %v1093 = vsel %vm310, %v1089, 0.0
    %1094 = vadd.xlane.f32.xlu0 %v1093
    %v1095 = vpop.xlane.xlu0 %1094
    %v1096 = vmul.f32 %v1092, %v314
    %v1097 = vmul.f32 %v1095, %v314
    %v1098 = vadd.f32 %v1096, 1e-05
    %v1099 = vadd.f32 %v1097, 1e-05
    %v1100 = vrsqrt.pop %v1098
    %v1101 = vrsqrt.pop %v1099
    %v1102 = vmul.f32 %v1086, %v1100
    %v1103 = vmul.f32 %v1087, %v1101
    %v1104 = vlaneseq
    %v1105 = vshrl.u32 %v1104, 7
    %v1106 = vsub.s32 0, %v1105
    %v1107 = vrot.slane %v1035, %v1106
    %v1108 = vmul.f32 %v1102, %v1107
    %v1109 = vmul.f32 %v1103, %v1107
    %v1110 = vlaneseq
    %v1111 = vshrl.u32 %v1110, 7
    %v1112 = vsub.s32 1, %v1111
    %v1113 = vrot.slane %v1035, %v1112
    %v1114 = vadd.f32 %v1108, %v1113
    %v1115 = vadd.f32 %v1109, %v1113
    %v1116 = vpack.c.bf16 %v1115, %v1114
    %v1118 = vlaneseq
    %v1119 = vshrl.u32 %v1118, 7
    %v1120 = vsub.s32 0, %v1119
    %v1121 = vrot.slane %v1042, %v1120
    %v1127 = vunpack.c.l.b16 %v1037
    %v1128 = vunpack.c.l.b16 %v1038
    %v1129 = vunpack.c.l.b16 %v1039
    %v1130 = vunpack.c.l.b16 %v1040
    %v1131 = vpack.c.b16 %v1128, %v1127
    %v1132 = vpack.c.b16 %v1130, %v1129
    %v1136 = vsel %vm306, %v1116, 0
    %1138 = vmatprep.subr.bf16.mxu0 0
    %1139 = vmatpush1.bf16.msra.mxu0 %v1131
    %1140 = vmatprep.subr.bf16.mxu0 0
    %1141 = vmatpush1.bf16.msra.mxu0 %v1132
    %1142 = vmatprep.subr.bf16.mxu0 0
    %1143 = vmatpush1.bf16.msra.mxu0 0
    %1144 = vmatprep.subr.bf16.mxu0 0
    %1145 = vmatpush1.bf16.msra.mxu0 0
    %1146 = vmatprep.subr.bf16.mxu0 0
    %1147 = vmatpush1.bf16.msra.mxu0 0
    %1148 = vmatprep.subr.bf16.mxu0 0
    %1149 = vmatpush1.bf16.msra.mxu0 0
    %1150 = vmatprep.subr.bf16.mxu0 0
    %1151 = vmatpush1.bf16.msra.mxu0 0
    %1152 = vmatprep.subr.bf16.mxu0 0
    %1153 = vmatpush1.bf16.msra.mxu0 0
    %1154 = vmatprep.subr.bf16.mxu0 0
    %1155 = vmatpush1.bf16.msra.mxu0 0
    %1156 = vmatprep.subr.bf16.mxu0 0
    %1157 = vmatpush1.bf16.msra.mxu0 0
    %1158 = vmatprep.subr.bf16.mxu0 0
    %1159 = vmatpush1.bf16.msra.mxu0 0
    %1160 = vmatprep.subr.bf16.mxu0 0
    %1161 = vmatpush1.bf16.msra.mxu0 0
    %1162 = vmatprep.subr.bf16.mxu0 0
    %1163 = vmatpush1.bf16.msra.mxu0 0
    %1164 = vmatprep.subr.bf16.mxu0 0
    %1165 = vmatpush1.bf16.msra.mxu0 0
    %1166 = vmatprep.subr.bf16.mxu0 0
    %1167 = vmatpush1.bf16.msra.mxu0 0
    %1168 = vmatprep.subr.bf16.mxu0 0
    %1169 = vmatpush1.bf16.msra.mxu0 0
    %1170 = vmatprep.mubr.bf16.mxu0 0
    %1171 = vmatmul.mubr.bf16.gmra.mrb[0].mxu0 %v1136
    %v1172 = vpop.f32.mrb[0].mxu0
    %v1173 = vadd.f32 %v1121, %v1172
    %v1174 = vpop.f32.mrb[0].mxu0
    %v1175 = vpop.f32.mrb[0].mxu0
    %v1176 = vadd.f32 %v1121, %v1175
    %v1177 = vpop.f32.mrb[0].mxu0
    %1178 = vdwg.mxu0
    %v1179 = vpack.c.bf16 %v1176, %v1173
    %1181 = vrot.lane.b32.xlu0 %v1179, 96
    %v1182 = vpop.permute.xlu0 %1181
    %v1184 = vsel %vm486, %v1179, 0
    %v1187 = vsel %vm486, %v1182, 0
    %1189 = vmatprep.subr.bf16.mxu0 0
    %1190 = vmatpush1.bf16.xpose.msra.mxu0 %v1187
    %1191 = vmatprep.subr.bf16.mxu0 0
    %1192 = vmatpush1.bf16.xpose.msra.mxu0 0
    %1193 = vmatprep.subr.bf16.mxu0 0
    %1194 = vmatpush1.bf16.xpose.msra.mxu0 0
    %1195 = vmatprep.subr.bf16.mxu0 0
    %1196 = vmatpush1.bf16.xpose.msra.mxu0 0
    %1197 = vmatprep.subr.bf16.mxu0 0
    %1198 = vmatpush1.bf16.xpose.msra.mxu0 0
    %1199 = vmatprep.subr.bf16.mxu0 0
    %1200 = vmatpush1.bf16.xpose.msra.mxu0 0
    %1201 = vmatprep.subr.bf16.mxu0 0
    %1202 = vmatpush1.bf16.xpose.msra.mxu0 0
    %1203 = vmatprep.subr.bf16.mxu0 0
    %1204 = vmatpush1.bf16.xpose.msra.mxu0 0
    %1205 = vmatprep.subr.bf16.mxu0 0
    %1206 = vmatpush1.bf16.xpose.msra.mxu0 0
    %1207 = vmatprep.subr.bf16.mxu0 0
    %1208 = vmatpush1.bf16.xpose.msra.mxu0 0
    %1209 = vmatprep.subr.bf16.mxu0 0
    %1210 = vmatpush1.bf16.xpose.msra.mxu0 0
    %1211 = vmatprep.subr.bf16.mxu0 0
    %1212 = vmatpush1.bf16.xpose.msra.mxu0 0
    %1213 = vmatprep.subr.bf16.mxu0 0
    %1214 = vmatpush1.bf16.xpose.msra.mxu0 0
    %1215 = vmatprep.subr.bf16.mxu0 0
    %1216 = vmatpush1.bf16.xpose.msra.mxu0 0
    %1217 = vmatprep.subr.bf16.mxu0 0
    %1218 = vmatpush1.bf16.xpose.msra.mxu0 0
    %1219 = vmatprep.subr.bf16.mxu0 0
    %1220 = vmatpush1.bf16.xpose.msra.mxu0 0
    %1221 = vmatprep.mubr.bf16.mxu0 0
    %1222 = vmatmul.mubr.bf16.gmra.mrb[0].mxu0 %v1184
    %v1223 = vpop.f32.mrb[0].mxu0
    %v1224 = vadd.f32 0.0, %v1223
    %v1225 = vpop.f32.mrb[0].mxu0
    %v1226 = vpop.f32.mrb[0].mxu0
    %v1227 = vadd.f32 0.0, %v1226
    %v1228 = vpop.f32.mrb[0].mxu0
    %1229 = vdwg.mxu0
    %v1230 = vmul.f32 %v1224, 0.25
    %v1231 = vmul.f32 %v1227, 0.25
    %v1232 = vadd.f32 %v1230, %v154
    %v1233 = vadd.f32 %v1231, %v155
    %v1234 = vsel %vm538, %v1232, -inf
    %1235 = vmax.xlane.f32.xlu0 %v1234
    %v1236 = vpop.xlane.xlu0 %1235
    %v1237 = vsel %vm542, %v1233, -inf
    %1238 = vmax.xlane.f32.xlu0 %v1237
    %v1239 = vpop.xlane.xlu0 %1238
    %v1240 = vsub.f32 %v1232, %v1236
    %v1241 = vsub.f32 %v1233, %v1239
    %v1242 = vmul.f32 %v1240, 1.442695
    %v1243 = vpow.pop %v1242
    %v1244 = vmul.f32 %v1241, 1.442695
    %v1245 = vpow.pop %v1244
    %v1246 = vsel %vm538, %v1243, 0.0
    %1247 = vadd.xlane.f32.xlu0 %v1246
    %v1248 = vpop.xlane.xlu0 %1247
    %v1249 = vsel %vm542, %v1245, 0.0
    %1250 = vadd.xlane.f32.xlu0 %v1249
    %v1251 = vpop.xlane.xlu0 %1250
    %v1252 = vrcp.pop %v1248
    %v1253 = vrcp.pop %v1251
    %v1254 = vmul.f32 %v1243, %v1252
    %v1255 = vmul.f32 %v1245, %v1253
    %v1256 = vpack.c.bf16 %v1255, %v1254
    %1257 = vrot.lane.b32.xlu0 %v1179, 64
    %v1258 = vpop.permute.xlu0 %1257
    %v1260 = vsel %vm538, %v1256, 0
    %v1263 = vsel %vm568, %v1258, 0
    %1265 = vmatprep.subr.bf16.mxu0 0
    %1266 = vmatpush1.bf16.msra.mxu0 %v1263
    %1267 = vmatprep.subr.bf16.mxu0 0
    %1268 = vmatpush1.bf16.msra.mxu0 0
    %1269 = vmatprep.subr.bf16.mxu0 0
    %1270 = vmatpush1.bf16.msra.mxu0 0
    %1271 = vmatprep.subr.bf16.mxu0 0
    %1272 = vmatpush1.bf16.msra.mxu0 0
    %1273 = vmatprep.subr.bf16.mxu0 0
    %1274 = vmatpush1.bf16.msra.mxu0 0
    %1275 = vmatprep.subr.bf16.mxu0 0
    %1276 = vmatpush1.bf16.msra.mxu0 0
    %1277 = vmatprep.subr.bf16.mxu0 0
    %1278 = vmatpush1.bf16.msra.mxu0 0
    %1279 = vmatprep.subr.bf16.mxu0 0
    %1280 = vmatpush1.bf16.msra.mxu0 0
    %1281 = vmatprep.subr.bf16.mxu0 0
    %1282 = vmatpush1.bf16.msra.mxu0 0
    %1283 = vmatprep.subr.bf16.mxu0 0
    %1284 = vmatpush1.bf16.msra.mxu0 0
    %1285 = vmatprep.subr.bf16.mxu0 0
    %1286 = vmatpush1.bf16.msra.mxu0 0
    %1287 = vmatprep.subr.bf16.mxu0 0
    %1288 = vmatpush1.bf16.msra.mxu0 0
    %1289 = vmatprep.subr.bf16.mxu0 0
    %1290 = vmatpush1.bf16.msra.mxu0 0
    %1291 = vmatprep.subr.bf16.mxu0 0
    %1292 = vmatpush1.bf16.msra.mxu0 0
    %1293 = vmatprep.subr.bf16.mxu0 0
    %1294 = vmatpush1.bf16.msra.mxu0 0
    %1295 = vmatprep.subr.bf16.mxu0 0
    %1296 = vmatpush1.bf16.msra.mxu0 0
    %1297 = vmatprep.mubr.bf16.mxu0 0
    %1298 = vmatmul.mubr.bf16.gmra.mrb[0].mxu0 %v1260
    %v1299 = vpop.f32.mrb[0].mxu0
    %v1300 = vadd.f32 0.0, %v1299
    %v1301 = vpop.f32.mrb[0].mxu0
    %v1302 = vpop.f32.mrb[0].mxu0
    %v1303 = vadd.f32 0.0, %v1302
    %v1304 = vpop.f32.mrb[0].mxu0
    %1305 = vdwg.mxu0
    %1306 = vrot.lane.b32.xlu0 %v1179, 112
    %v1307 = vpop.permute.xlu0 %1306
    %1308 = vrot.lane.b32.xlu0 %v1179, 80
    %v1309 = vpop.permute.xlu0 %1308
    %v1311 = vsel %vm486, %v1307, 0
    %v1314 = vsel %vm486, %v1309, 0
    %1316 = vmatprep.subr.bf16.mxu0 0
    %1317 = vmatpush1.bf16.xpose.msra.mxu0 %v1314
    %1318 = vmatprep.subr.bf16.mxu0 0
    %1319 = vmatpush1.bf16.xpose.msra.mxu0 0
    %1320 = vmatprep.subr.bf16.mxu0 0
    %1321 = vmatpush1.bf16.xpose.msra.mxu0 0
    %1322 = vmatprep.subr.bf16.mxu0 0
    %1323 = vmatpush1.bf16.xpose.msra.mxu0 0
    %1324 = vmatprep.subr.bf16.mxu0 0
    %1325 = vmatpush1.bf16.xpose.msra.mxu0 0
    %1326 = vmatprep.subr.bf16.mxu0 0
    %1327 = vmatpush1.bf16.xpose.msra.mxu0 0
    %1328 = vmatprep.subr.bf16.mxu0 0
    %1329 = vmatpush1.bf16.xpose.msra.mxu0 0
    %1330 = vmatprep.subr.bf16.mxu0 0
    %1331 = vmatpush1.bf16.xpose.msra.mxu0 0
    %1332 = vmatprep.subr.bf16.mxu0 0
    %1333 = vmatpush1.bf16.xpose.msra.mxu0 0
    %1334 = vmatprep.subr.bf16.mxu0 0
    %1335 = vmatpush1.bf16.xpose.msra.mxu0 0
    %1336 = vmatprep.subr.bf16.mxu0 0
    %1337 = vmatpush1.bf16.xpose.msra.mxu0 0
    %1338 = vmatprep.subr.bf16.mxu0 0
    %1339 = vmatpush1.bf16.xpose.msra.mxu0 0
    %1340 = vmatprep.subr.bf16.mxu0 0
    %1341 = vmatpush1.bf16.xpose.msra.mxu0 0
    %1342 = vmatprep.subr.bf16.mxu0 0
    %1343 = vmatpush1.bf16.xpose.msra.mxu0 0
    %1344 = vmatprep.subr.bf16.mxu0 0
    %1345 = vmatpush1.bf16.xpose.msra.mxu0 0
    %1346 = vmatprep.subr.bf16.mxu0 0
    %1347 = vmatpush1.bf16.xpose.msra.mxu0 0
    %1348 = vmatprep.mubr.bf16.mxu0 0
    %1349 = vmatmul.mubr.bf16.gmra.mrb[0].mxu0 %v1311
    %v1350 = vpop.f32.mrb[0].mxu0
    %v1351 = vadd.f32 0.0, %v1350
    %v1352 = vpop.f32.mrb[0].mxu0
    %v1353 = vpop.f32.mrb[0].mxu0
    %v1354 = vadd.f32 0.0, %v1353
    %v1355 = vpop.f32.mrb[0].mxu0
    %1356 = vdwg.mxu0
    %v1357 = vmul.f32 %v1351, 0.25
    %v1358 = vmul.f32 %v1354, 0.25
    %v1359 = vadd.f32 %v1357, %v154
    %v1360 = vadd.f32 %v1358, %v155
    %v1361 = vsel %vm538, %v1359, -inf
    %1362 = vmax.xlane.f32.xlu0 %v1361
    %v1363 = vpop.xlane.xlu0 %1362
    %v1364 = vsel %vm542, %v1360, -inf
    %1365 = vmax.xlane.f32.xlu0 %v1364
    %v1366 = vpop.xlane.xlu0 %1365
    %v1367 = vsub.f32 %v1359, %v1363
    %v1368 = vsub.f32 %v1360, %v1366
    %v1369 = vmul.f32 %v1367, 1.442695
    %v1370 = vpow.pop %v1369
    %v1371 = vmul.f32 %v1368, 1.442695
    %v1372 = vpow.pop %v1371
    %v1373 = vsel %vm538, %v1370, 0.0
    %1374 = vadd.xlane.f32.xlu0 %v1373
    %v1375 = vpop.xlane.xlu0 %1374
    %v1376 = vsel %vm542, %v1372, 0.0
    %1377 = vadd.xlane.f32.xlu0 %v1376
    %v1378 = vpop.xlane.xlu0 %1377
    %v1379 = vrcp.pop %v1375
    %v1380 = vrcp.pop %v1378
    %v1381 = vmul.f32 %v1370, %v1379
    %v1382 = vmul.f32 %v1372, %v1380
    %v1383 = vpack.c.bf16 %v1382, %v1381
    %1384 = vrot.lane.b32.xlu0 %v1179, 48
    %v1385 = vpop.permute.xlu0 %1384
    %v1387 = vsel %vm538, %v1383, 0
    %v1390 = vsel %vm568, %v1385, 0
    %1392 = vmatprep.subr.bf16.mxu0 0
    %1393 = vmatpush1.bf16.msra.mxu0 %v1390
    %1394 = vmatprep.subr.bf16.mxu0 0
    %1395 = vmatpush1.bf16.msra.mxu0 0
    %1396 = vmatprep.subr.bf16.mxu0 0
    %1397 = vmatpush1.bf16.msra.mxu0 0
    %1398 = vmatprep.subr.bf16.mxu0 0
    %1399 = vmatpush1.bf16.msra.mxu0 0
    %1400 = vmatprep.subr.bf16.mxu0 0
    %1401 = vmatpush1.bf16.msra.mxu0 0
    %1402 = vmatprep.subr.bf16.mxu0 0
    %1403 = vmatpush1.bf16.msra.mxu0 0
    %1404 = vmatprep.subr.bf16.mxu0 0
    %1405 = vmatpush1.bf16.msra.mxu0 0
    %1406 = vmatprep.subr.bf16.mxu0 0
    %1407 = vmatpush1.bf16.msra.mxu0 0
    %1408 = vmatprep.subr.bf16.mxu0 0
    %1409 = vmatpush1.bf16.msra.mxu0 0
    %1410 = vmatprep.subr.bf16.mxu0 0
    %1411 = vmatpush1.bf16.msra.mxu0 0
    %1412 = vmatprep.subr.bf16.mxu0 0
    %1413 = vmatpush1.bf16.msra.mxu0 0
    %1414 = vmatprep.subr.bf16.mxu0 0
    %1415 = vmatpush1.bf16.msra.mxu0 0
    %1416 = vmatprep.subr.bf16.mxu0 0
    %1417 = vmatpush1.bf16.msra.mxu0 0
    %1418 = vmatprep.subr.bf16.mxu0 0
    %1419 = vmatpush1.bf16.msra.mxu0 0
    %1420 = vmatprep.subr.bf16.mxu0 0
    %1421 = vmatpush1.bf16.msra.mxu0 0
    %1422 = vmatprep.subr.bf16.mxu0 0
    %1423 = vmatpush1.bf16.msra.mxu0 0
    %1424 = vmatprep.mubr.bf16.mxu0 0
    %1425 = vmatmul.mubr.bf16.gmra.mrb[0].mxu0 %v1387
    %v1426 = vpop.f32.mrb[0].mxu0
    %v1427 = vadd.f32 0.0, %v1426
    %v1428 = vpop.f32.mrb[0].mxu0
    %v1429 = vpop.f32.mrb[0].mxu0
    %v1430 = vadd.f32 0.0, %v1429
    %v1431 = vpop.f32.mrb[0].mxu0
    %1432 = vdwg.mxu0
    %1435 = vrot.lane.b32.xlu0 %v1427, 16
    %v1436 = vpop.permute.xlu0 %1435
    %1437 = vrot.lane.b32.xlu0 %v1430, 16
    %v1438 = vpop.permute.xlu0 %1437
    %v1441 = vsel %vm486, %v1300, %v1436
    %v1442 = vsel %vm486, %v1303, %v1438
    %v1443 = vpack.c.bf16 %v1442, %v1441
    %v1448 = vunpack.c.l.b16 %v1044
    %v1449 = vunpack.c.l.b16 %v1045
    %v1450 = vunpack.c.l.b16 %v1046
    %v1451 = vunpack.c.l.b16 %v1047
    %v1452 = vpack.c.b16 %v1449, %v1448
    %v1453 = vpack.c.b16 %v1451, %v1450
    %v1457 = vsel %vm306, %v1443, 0
    %1459 = vmatprep.subr.bf16.mxu0 0
    %1460 = vmatpush1.bf16.msra.mxu0 %v1452
    %1461 = vmatprep.subr.bf16.mxu0 0
    %1462 = vmatpush1.bf16.msra.mxu0 %v1453
    %1463 = vmatprep.subr.bf16.mxu0 0
    %1464 = vmatpush1.bf16.msra.mxu0 0
    %1465 = vmatprep.subr.bf16.mxu0 0
    %1466 = vmatpush1.bf16.msra.mxu0 0
    %1467 = vmatprep.subr.bf16.mxu0 0
    %1468 = vmatpush1.bf16.msra.mxu0 0
    %1469 = vmatprep.subr.bf16.mxu0 0
    %1470 = vmatpush1.bf16.msra.mxu0 0
    %1471 = vmatprep.subr.bf16.mxu0 0
    %1472 = vmatpush1.bf16.msra.mxu0 0
    %1473 = vmatprep.subr.bf16.mxu0 0
    %1474 = vmatpush1.bf16.msra.mxu0 0
    %1475 = vmatprep.subr.bf16.mxu0 0
    %1476 = vmatpush1.bf16.msra.mxu0 0
    %1477 = vmatprep.subr.bf16.mxu0 0
    %1478 = vmatpush1.bf16.msra.mxu0 0
    %1479 = vmatprep.subr.bf16.mxu0 0
    %1480 = vmatpush1.bf16.msra.mxu0 0
    %1481 = vmatprep.subr.bf16.mxu0 0
    %1482 = vmatpush1.bf16.msra.mxu0 0
    %1483 = vmatprep.subr.bf16.mxu0 0
    %1484 = vmatpush1.bf16.msra.mxu0 0
    %1485 = vmatprep.subr.bf16.mxu0 0
    %1486 = vmatpush1.bf16.msra.mxu0 0
    %1487 = vmatprep.subr.bf16.mxu0 0
    %1488 = vmatpush1.bf16.msra.mxu0 0
    %1489 = vmatprep.subr.bf16.mxu0 0
    %1490 = vmatpush1.bf16.msra.mxu0 0
    %1491 = vmatprep.mubr.bf16.mxu0 0
    %1492 = vmatmul.mubr.bf16.gmra.mrb[0].mxu0 %v1457
    %v1493 = vpop.f32.mrb[0].mxu0
    %v1494 = vadd.f32 0.0, %v1493
    %v1495 = vpop.f32.mrb[0].mxu0
    %v1496 = vpop.f32.mrb[0].mxu0
    %v1497 = vadd.f32 0.0, %v1496
    %v1498 = vpop.f32.mrb[0].mxu0
    %1499 = vdwg.mxu0
    %v1500 = vadd.f32 %v1032, %v1494
    %v1501 = vadd.f32 %v1033, %v1497
    %v1503 = vlaneseq
    %v1504 = vshrl.u32 %v1503, 7
    %v1505 = vsub.s32 0, %v1504
    %v1506 = vrot.slane %v1049, %v1505
    %v1508 = vadd.f32 %v1500, %v1506
    %v1509 = vadd.f32 %v1501, %v1506
    %v1510 = vsel %vm306, %v1508, 0.0
    %1511 = vadd.xlane.f32.xlu0 %v1510
    %v1512 = vpop.xlane.xlu0 %1511
    %v1513 = vsel %vm310, %v1509, 0.0
    %1514 = vadd.xlane.f32.xlu0 %v1513
    %v1515 = vpop.xlane.xlu0 %1514
    %v1516 = vmul.f32 %v1512, %v314
    %v1517 = vmul.f32 %v1515, %v314
    %v1518 = vsub.f32 %v1508, %v1516
    %v1519 = vsub.f32 %v1509, %v1517
    %v1520 = vmul.f32 %v1518, %v1518
    %v1521 = vmul.f32 %v1519, %v1519
    %v1522 = vsel %vm306, %v1520, 0.0
    %1523 = vadd.xlane.f32.xlu0 %v1522
    %v1524 = vpop.xlane.xlu0 %1523
    %v1525 = vsel %vm310, %v1521, 0.0
    %1526 = vadd.xlane.f32.xlu0 %v1525
    %v1527 = vpop.xlane.xlu0 %1526
    %v1528 = vmul.f32 %v1524, %v314
    %v1529 = vmul.f32 %v1527, %v314
    %v1530 = vadd.f32 %v1528, 1e-05
    %v1531 = vadd.f32 %v1529, 1e-05
    %v1532 = vrsqrt.pop %v1530
    %v1533 = vrsqrt.pop %v1531
    %v1534 = vmul.f32 %v1518, %v1532
    %v1535 = vmul.f32 %v1519, %v1533
    %v1536 = vlaneseq
    %v1537 = vshrl.u32 %v1536, 7
    %v1538 = vsub.s32 0, %v1537
    %v1539 = vrot.slane %v1051, %v1538
    %v1540 = vmul.f32 %v1534, %v1539
    %v1541 = vmul.f32 %v1535, %v1539
    %v1542 = vlaneseq
    %v1543 = vshrl.u32 %v1542, 7
    %v1544 = vsub.s32 1, %v1543
    %v1545 = vrot.slane %v1051, %v1544
    %v1546 = vadd.f32 %v1540, %v1545
    %v1547 = vadd.f32 %v1541, %v1545
    %v1548 = vpack.c.bf16 %v1547, %v1546
    %v1550 = vlaneseq
    %v1551 = vshrl.u32 %v1550, 7
    %v1552 = vsub.s32 0, %v1551
    %v1553 = vrot.slane %v1058, %v1552
    %v1559 = vunpack.c.l.b16 %v1053
    %v1560 = vunpack.c.l.b16 %v1054
    %v1561 = vunpack.c.l.b16 %v1055
    %v1562 = vunpack.c.l.b16 %v1056
    %v1563 = vpack.c.b16 %v1560, %v1559
    %v1564 = vpack.c.b16 %v1562, %v1561
    %v1568 = vsel %vm306, %v1548, 0
    %1570 = vmatprep.subr.bf16.mxu0 0
    %1571 = vmatpush1.bf16.msra.mxu0 %v1563
    %1572 = vmatprep.subr.bf16.mxu0 0
    %1573 = vmatpush1.bf16.msra.mxu0 %v1564
    %1574 = vmatprep.subr.bf16.mxu0 0
    %1575 = vmatpush1.bf16.msra.mxu0 0
    %1576 = vmatprep.subr.bf16.mxu0 0
    %1577 = vmatpush1.bf16.msra.mxu0 0
    %1578 = vmatprep.subr.bf16.mxu0 0
    %1579 = vmatpush1.bf16.msra.mxu0 0
    %1580 = vmatprep.subr.bf16.mxu0 0
    %1581 = vmatpush1.bf16.msra.mxu0 0
    %1582 = vmatprep.subr.bf16.mxu0 0
    %1583 = vmatpush1.bf16.msra.mxu0 0
    %1584 = vmatprep.subr.bf16.mxu0 0
    %1585 = vmatpush1.bf16.msra.mxu0 0
    %1586 = vmatprep.subr.bf16.mxu0 0
    %1587 = vmatpush1.bf16.msra.mxu0 0
    %1588 = vmatprep.subr.bf16.mxu0 0
    %1589 = vmatpush1.bf16.msra.mxu0 0
    %1590 = vmatprep.subr.bf16.mxu0 0
    %1591 = vmatpush1.bf16.msra.mxu0 0
    %1592 = vmatprep.subr.bf16.mxu0 0
    %1593 = vmatpush1.bf16.msra.mxu0 0
    %1594 = vmatprep.subr.bf16.mxu0 0
    %1595 = vmatpush1.bf16.msra.mxu0 0
    %1596 = vmatprep.subr.bf16.mxu0 0
    %1597 = vmatpush1.bf16.msra.mxu0 0
    %1598 = vmatprep.subr.bf16.mxu0 0
    %1599 = vmatpush1.bf16.msra.mxu0 0
    %1600 = vmatprep.subr.bf16.mxu0 0
    %1601 = vmatpush1.bf16.msra.mxu0 0
    %1602 = vmatprep.mubr.bf16.mxu0 0
    %1603 = vmatmul.mubr.bf16.gmra.mrb[0].mxu0 %v1568
    %v1604 = vpop.f32.mrb[0].mxu0
    %v1605 = vadd.f32 %v1553, %v1604
    %v1606 = vpop.f32.mrb[0].mxu0
    %v1607 = vpop.f32.mrb[0].mxu0
    %v1608 = vadd.f32 %v1553, %v1607
    %v1609 = vpop.f32.mrb[0].mxu0
    %1610 = vdwg.mxu0
    %v1611 = vmul.f32 %v1605, 1.702
    %v1612 = vmul.f32 %v1608, 1.702
    %v1613 = vxor.u32 %v1611, 2147483648
    %v1614 = vxor.u32 %v1612, 2147483648
    %v1615 = vmul.f32 %v1613, 1.442695
    %v1616 = vpow.pop %v1615
    %v1617 = vmul.f32 %v1614, 1.442695
    %v1618 = vpow.pop %v1617
    %v1619 = vadd.f32 %v1616, 1.0
    %v1620 = vadd.f32 %v1618, 1.0
    %v1621 = vrcp.pop %v1619
    %v1622 = vmul.f32 1.0, %v1621
    %v1623 = vrcp.pop %v1620
    %v1624 = vmul.f32 1.0, %v1623
    %v1625 = vmul.f32 %v1605, %v1622
    %v1626 = vmul.f32 %v1608, %v1624
    %v1627 = vpack.c.bf16 %v1626, %v1625
    %v1644 = vunpack.c.l.b16 %v1060
    %v1645 = vunpack.c.l.b16 %v1061
    %v1646 = vunpack.c.l.b16 %v1062
    %v1647 = vunpack.c.l.b16 %v1063
    %v1648 = vunpack.c.l.b16 %v1064
    %v1649 = vunpack.c.l.b16 %v1065
    %v1650 = vunpack.c.l.b16 %v1066
    %v1651 = vunpack.c.l.b16 %v1067
    %v1652 = vunpack.c.l.b16 %v1068
    %v1653 = vunpack.c.l.b16 %v1069
    %v1654 = vunpack.c.l.b16 %v1070
    %v1655 = vunpack.c.l.b16 %v1071
    %v1656 = vunpack.c.l.b16 %v1072
    %v1657 = vunpack.c.l.b16 %v1073
    %v1658 = vunpack.c.l.b16 %v1074
    %v1659 = vunpack.c.l.b16 %v1075
    %v1660 = vpack.c.b16 %v1645, %v1644
    %v1661 = vpack.c.b16 %v1647, %v1646
    %v1662 = vpack.c.b16 %v1649, %v1648
    %v1663 = vpack.c.b16 %v1651, %v1650
    %v1664 = vpack.c.b16 %v1653, %v1652
    %v1665 = vpack.c.b16 %v1655, %v1654
    %v1666 = vpack.c.b16 %v1657, %v1656
    %v1667 = vpack.c.b16 %v1659, %v1658
    %1676 = vmatprep.subr.bf16.mxu0 0
    %1677 = vmatpush1.bf16.msra.mxu0 %v1660
    %1678 = vmatprep.subr.bf16.mxu0 0
    %1679 = vmatpush1.bf16.msra.mxu0 %v1661
    %1680 = vmatprep.subr.bf16.mxu0 0
    %1681 = vmatpush1.bf16.msra.mxu0 %v1662
    %1682 = vmatprep.subr.bf16.mxu0 0
    %1683 = vmatpush1.bf16.msra.mxu0 %v1663
    %1684 = vmatprep.subr.bf16.mxu0 0
    %1685 = vmatpush1.bf16.msra.mxu0 %v1664
    %1686 = vmatprep.subr.bf16.mxu0 0
    %1687 = vmatpush1.bf16.msra.mxu0 %v1665
    %1688 = vmatprep.subr.bf16.mxu0 0
    %1689 = vmatpush1.bf16.msra.mxu0 %v1666
    %1690 = vmatprep.subr.bf16.mxu0 0
    %1691 = vmatpush1.bf16.msra.mxu0 %v1667
    %1692 = vmatprep.subr.bf16.mxu0 0
    %1693 = vmatpush1.bf16.msra.mxu0 0
    %1694 = vmatprep.subr.bf16.mxu0 0
    %1695 = vmatpush1.bf16.msra.mxu0 0
    %1696 = vmatprep.subr.bf16.mxu0 0
    %1697 = vmatpush1.bf16.msra.mxu0 0
    %1698 = vmatprep.subr.bf16.mxu0 0
    %1699 = vmatpush1.bf16.msra.mxu0 0
    %1700 = vmatprep.subr.bf16.mxu0 0
    %1701 = vmatpush1.bf16.msra.mxu0 0
    %1702 = vmatprep.subr.bf16.mxu0 0
    %1703 = vmatpush1.bf16.msra.mxu0 0
    %1704 = vmatprep.subr.bf16.mxu0 0
    %1705 = vmatpush1.bf16.msra.mxu0 0
    %1706 = vmatprep.subr.bf16.mxu0 0
    %1707 = vmatpush1.bf16.msra.mxu0 0
    %1708 = vmatprep.mubr.bf16.mxu0 0
    %1709 = vmatmul.mubr.bf16.gmra.mrb[0].mxu0 %v1627
    %v1710 = vpop.f32.mrb[0].mxu0
    %v1711 = vadd.f32 0.0, %v1710
    %v1712 = vpop.f32.mrb[0].mxu0
    %v1713 = vpop.f32.mrb[0].mxu0
    %v1714 = vadd.f32 0.0, %v1713
    %v1715 = vpop.f32.mrb[0].mxu0
    %1716 = vdwg.mxu0
    %v1717 = vadd.f32 %v1508, %v1711
    %v1718 = vadd.f32 %v1509, %v1714
    %v1720 = vlaneseq
    %v1721 = vshrl.u32 %v1720, 7
    %v1722 = vsub.s32 0, %v1721
    %v1723 = vrot.slane %v1077, %v1722
    %v1725 = vadd.f32 %v1717, %v1723
    %v1726 = vadd.f32 %v1718, %v1723
    %v1727 = vld [vmem:[%s9] sm:$0x3]
    %v1729 = vsel %vm538, %v1727, 0
    %vm1731 = vcmask 1041408
    %v1733 = vsel %vm1731, %v1726, 0
    %1735 = vmatprep.subr.mxu0 0.0
    %1736 = vmatpush1.msra.mxu0 %v1725
    %1737 = vmatprep.subr.mxu0 0.0
    %1738 = vmatpush1.msra.mxu0 %v1733
    %1739 = vmatprep.subr.mxu0 0.0
    %1740 = vmatpush1.msra.mxu0 0.0
    %1741 = vmatprep.subr.mxu0 0.0
    %1742 = vmatpush1.msra.mxu0 0.0
    %1743 = vmatprep.subr.mxu0 0.0
    %1744 = vmatpush1.msra.mxu0 0.0
    %1745 = vmatprep.subr.mxu0 0.0
    %1746 = vmatpush1.msra.mxu0 0.0
    %1747 = vmatprep.subr.mxu0 0.0
    %1748 = vmatpush1.msra.mxu0 0.0
    %1749 = vmatprep.subr.mxu0 0.0
    %1750 = vmatpush1.msra.mxu0 0.0
    %1751 = vmatprep.subr.mxu0 0.0
    %1752 = vmatpush1.msra.mxu0 0.0
    %1753 = vmatprep.subr.mxu0 0.0
    %1754 = vmatpush1.msra.mxu0 0.0
    %1755 = vmatprep.subr.mxu0 0.0
    %1756 = vmatpush1.msra.mxu0 0.0
    %1757 = vmatprep.subr.mxu0 0.0
    %1758 = vmatpush1.msra.mxu0 0.0
    %1759 = vmatprep.subr.mxu0 0.0
    %1760 = vmatpush1.msra.mxu0 0.0
    %1761 = vmatprep.subr.mxu0 0.0
    %1762 = vmatpush1.msra.mxu0 0.0
    %1763 = vmatprep.subr.mxu0 0.0
    %1764 = vmatpush1.msra.mxu0 0.0
    %1765 = vmatprep.subr.mxu0 0.0
    %1766 = vmatpush1.msra.mxu0 0.0
    %1767 = vmatprep.subr.mxu0 0.0
    %1768 = vmatpush1.msra.mxu0 0.0
    %1769 = vmatprep.subr.mxu0 0.0
    %1770 = vmatpush1.msra.mxu0 0.0
    %1771 = vmatprep.subr.mxu0 0.0
    %1772 = vmatpush1.msra.mxu0 0.0
    %1773 = vmatprep.subr.mxu0 0.0
    %1774 = vmatpush1.msra.mxu0 0.0
    %1775 = vmatprep.subr.mxu0 0.0
    %1776 = vmatpush1.msra.mxu0 0.0
    %1777 = vmatprep.subr.mxu0 0.0
    %1778 = vmatpush1.msra.mxu0 0.0
    %1779 = vmatprep.subr.mxu0 0.0
    %1780 = vmatpush1.msra.mxu0 0.0
    %1781 = vmatprep.subr.mxu0 0.0
    %1782 = vmatpush1.msra.mxu0 0.0
    %1783 = vmatprep.subr.mxu0 0.0
    %1784 = vmatpush1.msra.mxu0 0.0
    %1785 = vmatprep.subr.mxu0 0.0
    %1786 = vmatpush1.msra.mxu0 0.0
    %1787 = vmatprep.subr.mxu0 0.0
    %1788 = vmatpush1.msra.mxu0 0.0
    %1789 = vmatprep.subr.mxu0 0.0
    %1790 = vmatpush1.msra.mxu0 0.0
    %1791 = vmatprep.subr.mxu0 0.0
    %1792 = vmatpush1.msra.mxu0 0.0
    %1793 = vmatprep.subr.mxu0 0.0
    %1794 = vmatpush1.msra.mxu0 0.0
    %1795 = vmatprep.subr.mxu0 0.0
    %1796 = vmatpush1.msra.mxu0 0.0
    %1797 = vmatprep.subr.mxu0 0.0
    %1798 = vmatpush1.msra.mxu0 0.0
    %1799 = vmatprep.mubr.f32.mxu0 0.0
    %1800 = vmatmul.mubr.f32.gmra.mrb[0].mxu0 %v1729
    %v1801 = vpop.f32.mrb[0].mxu0
    %v1802 = vadd.f32 0.0, %v1801
    %v1803 = vpop.f32.mrb[0].mxu0
    %1804 = vdwg.mxu0
    %v1805 = vld [vmem:[%s31] sm:$0x3]
    %v1806 = vsel %vm310, %v1802, 0.0
    %1807 = vadd.xlane.f32.xlu0 %v1806
    %v1808 = vpop.xlane.xlu0 %1807
    %v1809 = vmul.f32 %v1808, %v314
    %v1810 = vsub.f32 %v1802, %v1809
    %v1811 = vmul.f32 %v1810, %v1810
    %v1812 = vsel %vm310, %v1811, 0.0
    %1813 = vadd.xlane.f32.xlu0 %v1812
    %v1814 = vpop.xlane.xlu0 %1813
    %v1815 = vmul.f32 %v1814, %v314
    %v1816 = vadd.f32 %v1815, 1e-05
    %v1817 = vrsqrt.pop %v1816
    %v1818 = vmul.f32 %v1810, %v1817
    %v1819 = vlaneseq
    %v1820 = vshrl.u32 %v1819, 7
    %v1821 = vsub.s32 0, %v1820
    %v1822 = vrot.slane %v1805, %v1821
    %v1823 = vmul.f32 %v1818, %v1822
    %v1824 = vlaneseq
    %v1825 = vshrl.u32 %v1824, 7
    %v1826 = vsub.s32 1, %v1825
    %v1827 = vrot.slane %v1805, %v1826
    %v1828 = vadd.f32 %v1823, %v1827
    %v1829 = vld [vmem:[%s33] sm:$0xf]
    %v1830 = vld [vmem:[%s33 + $0x4] sm:$0xf]
    %v1831 = vld [vmem:[%s33 + $0x8] sm:$0xf]
    %v1832 = vld [vmem:[%s33 + $0xc] sm:$0xf]
    %v1833 = vpack.c.bf16 %v1828, %v1828
    %v1838 = vunpack.c.l.b16 %v1829
    %v1839 = vunpack.c.l.b16 %v1830
    %v1840 = vunpack.c.l.b16 %v1831
    %v1841 = vunpack.c.l.b16 %v1832
    %v1842 = vpack.c.b16 %v1839, %v1838
    %v1843 = vpack.c.b16 %v1841, %v1840
    %v1847 = vsel %vm306, %v1833, 0
    %1849 = vmatprep.subr.bf16.mxu0 0
    %1850 = vmatpush1.bf16.msra.mxu0 %v1842
    %1851 = vmatprep.subr.bf16.mxu0 0
    %1852 = vmatpush1.bf16.msra.mxu0 %v1843
    %1853 = vmatprep.subr.bf16.mxu0 0
    %1854 = vmatpush1.bf16.msra.mxu0 0
    %1855 = vmatprep.subr.bf16.mxu0 0
    %1856 = vmatpush1.bf16.msra.mxu0 0
    %1857 = vmatprep.subr.bf16.mxu0 0
    %1858 = vmatpush1.bf16.msra.mxu0 0
    %1859 = vmatprep.subr.bf16.mxu0 0
    %1860 = vmatpush1.bf16.msra.mxu0 0
    %1861 = vmatprep.subr.bf16.mxu0 0
    %1862 = vmatpush1.bf16.msra.mxu0 0
    %1863 = vmatprep.subr.bf16.mxu0 0
    %1864 = vmatpush1.bf16.msra.mxu0 0
    %1865 = vmatprep.subr.bf16.mxu0 0
    %1866 = vmatpush1.bf16.msra.mxu0 0
    %1867 = vmatprep.subr.bf16.mxu0 0
    %1868 = vmatpush1.bf16.msra.mxu0 0
    %1869 = vmatprep.subr.bf16.mxu0 0
    %1870 = vmatpush1.bf16.msra.mxu0 0
    %1871 = vmatprep.subr.bf16.mxu0 0
    %1872 = vmatpush1.bf16.msra.mxu0 0
    %1873 = vmatprep.subr.bf16.mxu0 0
    %1874 = vmatpush1.bf16.msra.mxu0 0
    %1875 = vmatprep.subr.bf16.mxu0 0
    %1876 = vmatpush1.bf16.msra.mxu0 0
    %1877 = vmatprep.subr.bf16.mxu0 0
    %1878 = vmatpush1.bf16.msra.mxu0 0
    %1879 = vmatprep.subr.bf16.mxu0 0
    %1880 = vmatpush1.bf16.msra.mxu0 0
    %1881 = vmatprep.mubr.bf16.mxu0 0
    %1882 = vmatmul.mubr.bf16.gmra.mrb[0].mxu0 %v1847
    %v1883 = vpop.f32.mrb[0].mxu0
    %v1884 = vadd.f32 0.0, %v1883
    %v1885 = vpop.f32.mrb[0].mxu0
    %v1886 = vpop.f32.mrb[0].mxu0
    %v1887 = vpop.f32.mrb[0].mxu0
    %1888 = vdwg.mxu0
    %v1889 = vadd.s32 %v138, 16
    %v1890 = vadd.s32 %v138, 24
    %v1891 = vcvt.s32.f32 %v1889
    %v1892 = vcvt.s32.f32 %v1890
    %v1893 = vrcp.pop 8.0
    %v1894 = vmul.f32 %v142, %v1893
    %v1895 = vmul.f32 %v143, %v1893
    %v1896 = vmul.f32 %v1891, %v1893
    %v1897 = vmul.f32 %v1892, %v1893
    %v1898 = vfloor.f32 %v1894
    %v1899 = vfloor.f32 %v1895
    %v1900 = vfloor.f32 %v1896
    %v1901 = vfloor.f32 %v1897
    %v1902 = vmul.f32 %v149, %v1893
    %v1903 = vfloor.f32 %v1902
    %vm1904 = vcmp.eq.f32.partialorder %v1898, %v1903
    %vm1905 = vcmp.eq.f32.partialorder %v1899, %v1903
    %vm1906 = vcmp.eq.f32.partialorder %v1900, %v1903
    %vm1907 = vcmp.eq.f32.partialorder %v1901, %v1903
    %vm1908 = vcmp.le.s32.totalorder %v141, %v138
    %vm1909 = vcmp.le.s32.totalorder %v141, %v139
    %vm1910 = vcmp.le.s32.totalorder %v141, %v1889
    %vm1911 = vcmp.le.s32.totalorder %v141, %v1890
    %vm1912 = vmand %vm1904, %vm1908
    %vm1913 = vmand %vm1905, %vm1909
    %vm1914 = vmand %vm1906, %vm1910
    %vm1915 = vmand %vm1907, %vm1911
    %v1916 = vsel %vm1912, 0.0, -1e+30
    %v1917 = vsel %vm1913, 0.0, -1e+30
    %v1918 = vsel %vm1914, 0.0, -1e+30
    %v1919 = vsel %vm1915, 0.0, -1e+30
    %v1920 = vld [vmem:[%s35] sm:$0xff]
    %v1921 = vld [vmem:[%s35 + $0x8] sm:$0xff]
    %v1922 = vld [vmem:[%s35 + $0x10] sm:$0xff]
    %v1923 = vld [vmem:[%s35 + $0x18] sm:$0xff]
    %v1924 = vld [vmem:[%s37] sm:$0x3]
    %v1925 = vld [vmem:[%s39] sm:$0xf]
    %v1926 = vld [vmem:[%s39 + $0x4] sm:$0xf]
    %v1927 = vld [vmem:[%s39 + $0x8] sm:$0xf]
    %v1928 = vld [vmem:[%s39 + $0xc] sm:$0xf]
    %v1929 = vld [vmem:[%s41] sm:$0x1]
    %v1930 = vld [vmem:[%s43] sm:$0xf]
    %v1931 = vld [vmem:[%s43 + $0x4] sm:$0xf]
    %v1932 = vld [vmem:[%s43 + $0x8] sm:$0xf]
    %v1933 = vld [vmem:[%s43 + $0xc] sm:$0xf]
    %v1934 = vld [vmem:[%s45] sm:$0x1]
    %v1935 = vld [vmem:[%s47] sm:$0x3]
    %v1936 = vld [vmem:[%s49] sm:$0xf]
    %v1937 = vld [vmem:[%s49 + $0x4] sm:$0xf]
    %v1938 = vld [vmem:[%s49 + $0x8] sm:$0xf]
    %v1939 = vld [vmem:[%s49 + $0xc] sm:$0xf]
    %v1940 = vld [vmem:[%s51] sm:$0x1]
    %v1941 = vld [vmem:[%s53] sm:$0xf]
    %v1942 = vld [vmem:[%s53 + $0x4] sm:$0xf]
    %v1943 = vld [vmem:[%s53 + $0x8] sm:$0xf]
    %v1944 = vld [vmem:[%s53 + $0xc] sm:$0xf]
    %v1945 = vld [vmem:[%s53 + $0x10] sm:$0xf]
    %v1946 = vld [vmem:[%s53 + $0x14] sm:$0xf]
    %v1947 = vld [vmem:[%s53 + $0x18] sm:$0xf]
    %v1948 = vld [vmem:[%s53 + $0x1c] sm:$0xf]
    %v1949 = vld [vmem:[%s53 + $0x20] sm:$0xf]
    %v1950 = vld [vmem:[%s53 + $0x24] sm:$0xf]
    %v1951 = vld [vmem:[%s53 + $0x28] sm:$0xf]
    %v1952 = vld [vmem:[%s53 + $0x2c] sm:$0xf]
    %v1953 = vld [vmem:[%s53 + $0x30] sm:$0xf]
    %v1954 = vld [vmem:[%s53 + $0x34] sm:$0xf]
    %v1955 = vld [vmem:[%s53 + $0x38] sm:$0xf]
    %v1956 = vld [vmem:[%s53 + $0x3c] sm:$0xf]
    %v1957 = vld [vmem:[%s55] sm:$0x1]
    %v1958 = vsel %vm306, %v1920, 0.0
    %1959 = vadd.xlane.f32.xlu0 %v1958
    %v1960 = vpop.xlane.xlu0 %1959
    %v1961 = vsel %vm306, %v1921, 0.0
    %1962 = vadd.xlane.f32.xlu0 %v1961
    %v1963 = vpop.xlane.xlu0 %1962
    %v1964 = vsel %vm306, %v1922, 0.0
    %1965 = vadd.xlane.f32.xlu0 %v1964
    %v1966 = vpop.xlane.xlu0 %1965
    %v1967 = vsel %vm306, %v1923, 0.0
    %1968 = vadd.xlane.f32.xlu0 %v1967
    %v1969 = vpop.xlane.xlu0 %1968
    %v1970 = vmul.f32 %v1960, %v314
    %v1971 = vmul.f32 %v1963, %v314
    %v1972 = vmul.f32 %v1966, %v314
    %v1973 = vmul.f32 %v1969, %v314
    %v1974 = vsub.f32 %v1920, %v1970
    %v1975 = vsub.f32 %v1921, %v1971
    %v1976 = vsub.f32 %v1922, %v1972
    %v1977 = vsub.f32 %v1923, %v1973
    %v1978 = vmul.f32 %v1974, %v1974
    %v1979 = vmul.f32 %v1975, %v1975
    %v1980 = vmul.f32 %v1976, %v1976
    %v1981 = vmul.f32 %v1977, %v1977
    %v1982 = vsel %vm306, %v1978, 0.0
    %1983 = vadd.xlane.f32.xlu0 %v1982
    %v1984 = vpop.xlane.xlu0 %1983
    %v1985 = vsel %vm306, %v1979, 0.0
    %1986 = vadd.xlane.f32.xlu0 %v1985
    %v1987 = vpop.xlane.xlu0 %1986
    %v1988 = vsel %vm306, %v1980, 0.0
    %1989 = vadd.xlane.f32.xlu0 %v1988
    %v1990 = vpop.xlane.xlu0 %1989
    %v1991 = vsel %vm306, %v1981, 0.0
    %1992 = vadd.xlane.f32.xlu0 %v1991
    %v1993 = vpop.xlane.xlu0 %1992
    %v1994 = vmul.f32 %v1984, %v314
    %v1995 = vmul.f32 %v1987, %v314
    %v1996 = vmul.f32 %v1990, %v314
    %v1997 = vmul.f32 %v1993, %v314
    %v1998 = vadd.f32 %v1994, 1e-05
    %v1999 = vadd.f32 %v1995, 1e-05
    %v2000 = vadd.f32 %v1996, 1e-05
    %v2001 = vadd.f32 %v1997, 1e-05
    %v2002 = vrsqrt.pop %v1998
    %v2003 = vrsqrt.pop %v1999
    %v2004 = vrsqrt.pop %v2000
    %v2005 = vrsqrt.pop %v2001
    %v2006 = vmul.f32 %v1974, %v2002
    %v2007 = vmul.f32 %v1975, %v2003
    %v2008 = vmul.f32 %v1976, %v2004
    %v2009 = vmul.f32 %v1977, %v2005
    %v2010 = vlaneseq
    %v2011 = vshrl.u32 %v2010, 7
    %v2012 = vsub.s32 0, %v2011
    %v2013 = vrot.slane %v1924, %v2012
    %v2014 = vmul.f32 %v2006, %v2013
    %v2015 = vmul.f32 %v2007, %v2013
    %v2016 = vmul.f32 %v2008, %v2013
    %v2017 = vmul.f32 %v2009, %v2013
    %v2018 = vlaneseq
    %v2019 = vshrl.u32 %v2018, 7
    %v2020 = vsub.s32 1, %v2019
    %v2021 = vrot.slane %v1924, %v2020
    %v2022 = vadd.f32 %v2014, %v2021
    %v2023 = vadd.f32 %v2015, %v2021
    %v2024 = vadd.f32 %v2016, %v2021
    %v2025 = vadd.f32 %v2017, %v2021
    %v2026 = vpack.c.bf16 %v2023, %v2022
    %v2027 = vpack.c.bf16 %v2025, %v2024
    %v2029 = vlaneseq
    %v2030 = vshrl.u32 %v2029, 7
    %v2031 = vsub.s32 0, %v2030
    %v2032 = vrot.slane %v1929, %v2031
    %v2038 = vunpack.c.l.b16 %v1925
    %v2039 = vunpack.c.l.b16 %v1926
    %v2040 = vunpack.c.l.b16 %v1927
    %v2041 = vunpack.c.l.b16 %v1928
    %v2042 = vpack.c.b16 %v2039, %v2038
    %v2043 = vpack.c.b16 %v2041, %v2040
    %v2047 = vsel %vm306, %v2026, 0
    %v2050 = vsel %vm306, %v2027, 0
    %2052 = vmatprep.subr.bf16.mxu0 0
    %2053 = vmatpush1.bf16.msra.mxu0 %v2042
    %2054 = vmatprep.subr.bf16.mxu0 0
    %2055 = vmatpush1.bf16.msra.mxu0 %v2043
    %2056 = vmatprep.subr.bf16.mxu0 0
    %2057 = vmatpush1.bf16.msra.mxu0 0
    %2058 = vmatprep.subr.bf16.mxu0 0
    %2059 = vmatpush1.bf16.msra.mxu0 0
    %2060 = vmatprep.subr.bf16.mxu0 0
    %2061 = vmatpush1.bf16.msra.mxu0 0
    %2062 = vmatprep.subr.bf16.mxu0 0
    %2063 = vmatpush1.bf16.msra.mxu0 0
    %2064 = vmatprep.subr.bf16.mxu0 0
    %2065 = vmatpush1.bf16.msra.mxu0 0
    %2066 = vmatprep.subr.bf16.mxu0 0
    %2067 = vmatpush1.bf16.msra.mxu0 0
    %2068 = vmatprep.subr.bf16.mxu0 0
    %2069 = vmatpush1.bf16.msra.mxu0 0
    %2070 = vmatprep.subr.bf16.mxu0 0
    %2071 = vmatpush1.bf16.msra.mxu0 0
    %2072 = vmatprep.subr.bf16.mxu0 0
    %2073 = vmatpush1.bf16.msra.mxu0 0
    %2074 = vmatprep.subr.bf16.mxu0 0
    %2075 = vmatpush1.bf16.msra.mxu0 0
    %2076 = vmatprep.subr.bf16.mxu0 0
    %2077 = vmatpush1.bf16.msra.mxu0 0
    %2078 = vmatprep.subr.bf16.mxu0 0
    %2079 = vmatpush1.bf16.msra.mxu0 0
    %2080 = vmatprep.subr.bf16.mxu0 0
    %2081 = vmatpush1.bf16.msra.mxu0 0
    %2082 = vmatprep.subr.bf16.mxu0 0
    %2083 = vmatpush1.bf16.msra.mxu0 0
    %2084 = vmatprep.mubr.bf16.mxu0 0
    %2085 = vmatmul.mubr.bf16.gmra.mrb[0].mxu0 %v2047
    %v2086 = vpop.f32.mrb[0].mxu0
    %v2087 = vadd.f32 %v2032, %v2086
    %v2088 = vpop.f32.mrb[0].mxu0
    %v2089 = vpop.f32.mrb[0].mxu0
    %v2090 = vadd.f32 %v2032, %v2089
    %v2091 = vpop.f32.mrb[0].mxu0
    %2092 = vmatprep.mubr.bf16.mxu0 0
    %2093 = vmatmul.mubr.bf16.gmra.mrb[0].mxu0 %v2050
    %v2094 = vpop.f32.mrb[0].mxu0
    %v2095 = vadd.f32 %v2032, %v2094
    %v2096 = vpop.f32.mrb[0].mxu0
    %v2097 = vpop.f32.mrb[0].mxu0
    %v2098 = vadd.f32 %v2032, %v2097
    %v2099 = vpop.f32.mrb[0].mxu0
    %2100 = vdwg.mxu0
    %v2101 = vpack.c.bf16 %v2090, %v2087
    %v2102 = vpack.c.bf16 %v2098, %v2095
    %2105 = vrot.lane.b32.xlu0 %v2101, 96
    %v2106 = vpop.permute.xlu0 %2105
    %2107 = vrot.lane.b32.xlu0 %v2102, 96
    %v2108 = vpop.permute.xlu0 %2107
    %v2110 = vsel %vm486, %v2101, 0
    %v2113 = vsel %vm486, %v2102, 0
    %v2116 = vsel %vm486, %v2106, 0
    %v2119 = vsel %vm486, %v2108, 0
    %2121 = vmatprep.subr.bf16.mxu0 0
    %2122 = vmatpush1.bf16.xpose.msra.mxu0 %v2116
    %2123 = vmatprep.subr.bf16.mxu0 0
    %2124 = vmatpush1.bf16.xpose.msra.mxu0 %v2119
    %2125 = vmatprep.subr.bf16.mxu0 0
    %2126 = vmatpush1.bf16.xpose.msra.mxu0 0
    %2127 = vmatprep.subr.bf16.mxu0 0
    %2128 = vmatpush1.bf16.xpose.msra.mxu0 0
    %2129 = vmatprep.subr.bf16.mxu0 0
    %2130 = vmatpush1.bf16.xpose.msra.mxu0 0
    %2131 = vmatprep.subr.bf16.mxu0 0
    %2132 = vmatpush1.bf16.xpose.msra.mxu0 0
    %2133 = vmatprep.subr.bf16.mxu0 0
    %2134 = vmatpush1.bf16.xpose.msra.mxu0 0
    %2135 = vmatprep.subr.bf16.mxu0 0
    %2136 = vmatpush1.bf16.xpose.msra.mxu0 0
    %2137 = vmatprep.subr.bf16.mxu0 0
    %2138 = vmatpush1.bf16.xpose.msra.mxu0 0
    %2139 = vmatprep.subr.bf16.mxu0 0
    %2140 = vmatpush1.bf16.xpose.msra.mxu0 0
    %2141 = vmatprep.subr.bf16.mxu0 0
    %2142 = vmatpush1.bf16.xpose.msra.mxu0 0
    %2143 = vmatprep.subr.bf16.mxu0 0
    %2144 = vmatpush1.bf16.xpose.msra.mxu0 0
    %2145 = vmatprep.subr.bf16.mxu0 0
    %2146 = vmatpush1.bf16.xpose.msra.mxu0 0
    %2147 = vmatprep.subr.bf16.mxu0 0
    %2148 = vmatpush1.bf16.xpose.msra.mxu0 0
    %2149 = vmatprep.subr.bf16.mxu0 0
    %2150 = vmatpush1.bf16.xpose.msra.mxu0 0
    %2151 = vmatprep.subr.bf16.mxu0 0
    %2152 = vmatpush1.bf16.xpose.msra.mxu0 0
    %2153 = vmatprep.mubr.bf16.mxu0 0
    %2154 = vmatmul.mubr.bf16.gmra.mrb[0].mxu0 %v2110
    %v2155 = vpop.f32.mrb[0].mxu0
    %v2156 = vadd.f32 0.0, %v2155
    %v2157 = vpop.f32.mrb[0].mxu0
    %v2158 = vpop.f32.mrb[0].mxu0
    %v2159 = vadd.f32 0.0, %v2158
    %v2160 = vpop.f32.mrb[0].mxu0
    %2161 = vmatprep.mubr.bf16.mxu0 0
    %2162 = vmatmul.mubr.bf16.gmra.mrb[0].mxu0 %v2113
    %v2163 = vpop.f32.mrb[0].mxu0
    %v2164 = vadd.f32 0.0, %v2163
    %v2165 = vpop.f32.mrb[0].mxu0
    %v2166 = vpop.f32.mrb[0].mxu0
    %v2167 = vadd.f32 0.0, %v2166
    %v2168 = vpop.f32.mrb[0].mxu0
    %2169 = vdwg.mxu0
    %v2170 = vmul.f32 %v2156, 0.25
    %v2171 = vmul.f32 %v2159, 0.25
    %v2172 = vmul.f32 %v2164, 0.25
    %v2173 = vmul.f32 %v2167, 0.25
    %v2174 = vadd.f32 %v2170, %v1916
    %v2175 = vadd.f32 %v2171, %v1917
    %v2176 = vadd.f32 %v2172, %v1918
    %v2177 = vadd.f32 %v2173, %v1919
    %v2178 = vsel %vm306, %v2174, -inf
    %2179 = vmax.xlane.f32.xlu0 %v2178
    %v2180 = vpop.xlane.xlu0 %2179
    %v2181 = vsel %vm306, %v2175, -inf
    %2182 = vmax.xlane.f32.xlu0 %v2181
    %v2183 = vpop.xlane.xlu0 %2182
    %v2184 = vsel %vm306, %v2176, -inf
    %2185 = vmax.xlane.f32.xlu0 %v2184
    %v2186 = vpop.xlane.xlu0 %2185
    %v2187 = vsel %vm306, %v2177, -inf
    %2188 = vmax.xlane.f32.xlu0 %v2187
    %v2189 = vpop.xlane.xlu0 %2188
    %v2190 = vsub.f32 %v2174, %v2180
    %v2191 = vsub.f32 %v2175, %v2183
    %v2192 = vsub.f32 %v2176, %v2186
    %v2193 = vsub.f32 %v2177, %v2189
    %v2194 = vmul.f32 %v2190, 1.442695
    %v2195 = vpow.pop %v2194
    %v2196 = vmul.f32 %v2191, 1.442695
    %v2197 = vpow.pop %v2196
    %v2198 = vmul.f32 %v2192, 1.442695
    %v2199 = vpow.pop %v2198
    %v2200 = vmul.f32 %v2193, 1.442695
    %v2201 = vpow.pop %v2200
    %v2202 = vsel %vm306, %v2195, 0.0
    %2203 = vadd.xlane.f32.xlu0 %v2202
    %v2204 = vpop.xlane.xlu0 %2203
    %v2205 = vsel %vm306, %v2197, 0.0
    %2206 = vadd.xlane.f32.xlu0 %v2205
    %v2207 = vpop.xlane.xlu0 %2206
    %v2208 = vsel %vm306, %v2199, 0.0
    %2209 = vadd.xlane.f32.xlu0 %v2208
    %v2210 = vpop.xlane.xlu0 %2209
    %v2211 = vsel %vm306, %v2201, 0.0
    %2212 = vadd.xlane.f32.xlu0 %v2211
    %v2213 = vpop.xlane.xlu0 %2212
    %v2214 = vrcp.pop %v2204
    %v2215 = vrcp.pop %v2207
    %v2216 = vrcp.pop %v2210
    %v2217 = vrcp.pop %v2213
    %v2218 = vmul.f32 %v2195, %v2214
    %v2219 = vmul.f32 %v2197, %v2215
    %v2220 = vmul.f32 %v2199, %v2216
    %v2221 = vmul.f32 %v2201, %v2217
    %v2222 = vpack.c.bf16 %v2219, %v2218
    %v2223 = vpack.c.bf16 %v2221, %v2220
    %2224 = vrot.lane.b32.xlu0 %v2101, 64
    %v2225 = vpop.permute.xlu0 %2224
    %2226 = vrot.lane.b32.xlu0 %v2102, 64
    %v2227 = vpop.permute.xlu0 %2226
    %v2231 = vsel %vm306, %v2222, 0
    %v2234 = vsel %vm306, %v2223, 0
    %2236 = vmatprep.subr.bf16.mxu0 0
    %2237 = vmatpush1.bf16.msra.mxu0 %v2225
    %2238 = vmatprep.subr.bf16.mxu0 0
    %2239 = vmatpush1.bf16.msra.mxu0 %v2227
    %2240 = vmatprep.subr.bf16.mxu0 0
    %2241 = vmatpush1.bf16.msra.mxu0 0
    %2242 = vmatprep.subr.bf16.mxu0 0
    %2243 = vmatpush1.bf16.msra.mxu0 0
    %2244 = vmatprep.subr.bf16.mxu0 0
    %2245 = vmatpush1.bf16.msra.mxu0 0
    %2246 = vmatprep.subr.bf16.mxu0 0
    %2247 = vmatpush1.bf16.msra.mxu0 0
    %2248 = vmatprep.subr.bf16.mxu0 0
    %2249 = vmatpush1.bf16.msra.mxu0 0
    %2250 = vmatprep.subr.bf16.mxu0 0
    %2251 = vmatpush1.bf16.msra.mxu0 0
    %2252 = vmatprep.subr.bf16.mxu0 0
    %2253 = vmatpush1.bf16.msra.mxu0 0
    %2254 = vmatprep.subr.bf16.mxu0 0
    %2255 = vmatpush1.bf16.msra.mxu0 0
    %2256 = vmatprep.subr.bf16.mxu0 0
    %2257 = vmatpush1.bf16.msra.mxu0 0
    %2258 = vmatprep.subr.bf16.mxu0 0
    %2259 = vmatpush1.bf16.msra.mxu0 0
    %2260 = vmatprep.subr.bf16.mxu0 0
    %2261 = vmatpush1.bf16.msra.mxu0 0
    %2262 = vmatprep.subr.bf16.mxu0 0
    %2263 = vmatpush1.bf16.msra.mxu0 0
    %2264 = vmatprep.subr.bf16.mxu0 0
    %2265 = vmatpush1.bf16.msra.mxu0 0
    %2266 = vmatprep.subr.bf16.mxu0 0
    %2267 = vmatpush1.bf16.msra.mxu0 0
    %2268 = vmatprep.mubr.bf16.mxu0 0
    %2269 = vmatmul.mubr.bf16.gmra.mrb[0].mxu0 %v2231
    %v2270 = vpop.f32.mrb[0].mxu0
    %v2271 = vadd.f32 0.0, %v2270
    %v2272 = vpop.f32.mrb[0].mxu0
    %v2273 = vpop.f32.mrb[0].mxu0
    %v2274 = vadd.f32 0.0, %v2273
    %v2275 = vpop.f32.mrb[0].mxu0
    %2276 = vmatprep.mubr.bf16.mxu0 0
    %2277 = vmatmul.mubr.bf16.gmra.mrb[0].mxu0 %v2234
    %v2278 = vpop.f32.mrb[0].mxu0
    %v2279 = vadd.f32 0.0, %v2278
    %v2280 = vpop.f32.mrb[0].mxu0
    %v2281 = vpop.f32.mrb[0].mxu0
    %v2282 = vadd.f32 0.0, %v2281
    %v2283 = vpop.f32.mrb[0].mxu0
    %2284 = vdwg.mxu0
    %2285 = vrot.lane.b32.xlu0 %v2101, 112
    %v2286 = vpop.permute.xlu0 %2285
    %2287 = vrot.lane.b32.xlu0 %v2102, 112
    %v2288 = vpop.permute.xlu0 %2287
    %2289 = vrot.lane.b32.xlu0 %v2101, 80
    %v2290 = vpop.permute.xlu0 %2289
    %2291 = vrot.lane.b32.xlu0 %v2102, 80
    %v2292 = vpop.permute.xlu0 %2291
    %v2294 = vsel %vm486, %v2286, 0
    %v2297 = vsel %vm486, %v2288, 0
    %v2300 = vsel %vm486, %v2290, 0
    %v2303 = vsel %vm486, %v2292, 0
    %2305 = vmatprep.subr.bf16.mxu0 0
    %2306 = vmatpush1.bf16.xpose.msra.mxu0 %v2300
    %2307 = vmatprep.subr.bf16.mxu0 0
    %2308 = vmatpush1.bf16.xpose.msra.mxu0 %v2303
    %2309 = vmatprep.subr.bf16.mxu0 0
    %2310 = vmatpush1.bf16.xpose.msra.mxu0 0
    %2311 = vmatprep.subr.bf16.mxu0 0
    %2312 = vmatpush1.bf16.xpose.msra.mxu0 0
    %2313 = vmatprep.subr.bf16.mxu0 0
    %2314 = vmatpush1.bf16.xpose.msra.mxu0 0
    %2315 = vmatprep.subr.bf16.mxu0 0
    %2316 = vmatpush1.bf16.xpose.msra.mxu0 0
    %2317 = vmatprep.subr.bf16.mxu0 0
    %2318 = vmatpush1.bf16.xpose.msra.mxu0 0
    %2319 = vmatprep.subr.bf16.mxu0 0
    %2320 = vmatpush1.bf16.xpose.msra.mxu0 0
    %2321 = vmatprep.subr.bf16.mxu0 0
    %2322 = vmatpush1.bf16.xpose.msra.mxu0 0
    %2323 = vmatprep.subr.bf16.mxu0 0
    %2324 = vmatpush1.bf16.xpose.msra.mxu0 0
    %2325 = vmatprep.subr.bf16.mxu0 0
    %2326 = vmatpush1.bf16.xpose.msra.mxu0 0
    %2327 = vmatprep.subr.bf16.mxu0 0
    %2328 = vmatpush1.bf16.xpose.msra.mxu0 0
    %2329 = vmatprep.subr.bf16.mxu0 0
    %2330 = vmatpush1.bf16.xpose.msra.mxu0 0
    %2331 = vmatprep.subr.bf16.mxu0 0
    %2332 = vmatpush1.bf16.xpose.msra.mxu0 0
    %2333 = vmatprep.subr.bf16.mxu0 0
    %2334 = vmatpush1.bf16.xpose.msra.mxu0 0
    %2335 = vmatprep.subr.bf16.mxu0 0
    %2336 = vmatpush1.bf16.xpose.msra.mxu0 0
    %2337 = vmatprep.mubr.bf16.mxu0 0
    %2338 = vmatmul.mubr.bf16.gmra.mrb[0].mxu0 %v2294
    %v2339 = vpop.f32.mrb[0].mxu0
    %v2340 = vadd.f32 0.0, %v2339
    %v2341 = vpop.f32.mrb[0].mxu0
    %v2342 = vpop.f32.mrb[0].mxu0
    %v2343 = vadd.f32 0.0, %v2342
    %v2344 = vpop.f32.mrb[0].mxu0
    %2345 = vmatprep.mubr.bf16.mxu0 0
    %2346 = vmatmul.mubr.bf16.gmra.mrb[0].mxu0 %v2297
    %v2347 = vpop.f32.mrb[0].mxu0
    %v2348 = vadd.f32 0.0, %v2347
    %v2349 = vpop.f32.mrb[0].mxu0
    %v2350 = vpop.f32.mrb[0].mxu0
    %v2351 = vadd.f32 0.0, %v2350
    %v2352 = vpop.f32.mrb[0].mxu0
    %2353 = vdwg.mxu0
    %v2354 = vmul.f32 %v2340, 0.25
    %v2355 = vmul.f32 %v2343, 0.25
    %v2356 = vmul.f32 %v2348, 0.25
    %v2357 = vmul.f32 %v2351, 0.25
    %v2358 = vadd.f32 %v2354, %v1916
    %v2359 = vadd.f32 %v2355, %v1917
    %v2360 = vadd.f32 %v2356, %v1918
    %v2361 = vadd.f32 %v2357, %v1919
    %v2362 = vsel %vm306, %v2358, -inf
    %2363 = vmax.xlane.f32.xlu0 %v2362
    %v2364 = vpop.xlane.xlu0 %2363
    %v2365 = vsel %vm306, %v2359, -inf
    %2366 = vmax.xlane.f32.xlu0 %v2365
    %v2367 = vpop.xlane.xlu0 %2366
    %v2368 = vsel %vm306, %v2360, -inf
    %2369 = vmax.xlane.f32.xlu0 %v2368
    %v2370 = vpop.xlane.xlu0 %2369
    %v2371 = vsel %vm306, %v2361, -inf
    %2372 = vmax.xlane.f32.xlu0 %v2371
    %v2373 = vpop.xlane.xlu0 %2372
    %v2374 = vsub.f32 %v2358, %v2364
    %v2375 = vsub.f32 %v2359, %v2367
    %v2376 = vsub.f32 %v2360, %v2370
    %v2377 = vsub.f32 %v2361, %v2373
    %v2378 = vmul.f32 %v2374, 1.442695
    %v2379 = vpow.pop %v2378
    %v2380 = vmul.f32 %v2375, 1.442695
    %v2381 = vpow.pop %v2380
    %v2382 = vmul.f32 %v2376, 1.442695
    %v2383 = vpow.pop %v2382
    %v2384 = vmul.f32 %v2377, 1.442695
    %v2385 = vpow.pop %v2384
    %v2386 = vsel %vm306, %v2379, 0.0
    %2387 = vadd.xlane.f32.xlu0 %v2386
    %v2388 = vpop.xlane.xlu0 %2387
    %v2389 = vsel %vm306, %v2381, 0.0
    %2390 = vadd.xlane.f32.xlu0 %v2389
    %v2391 = vpop.xlane.xlu0 %2390
    %v2392 = vsel %vm306, %v2383, 0.0
    %2393 = vadd.xlane.f32.xlu0 %v2392
    %v2394 = vpop.xlane.xlu0 %2393
    %v2395 = vsel %vm306, %v2385, 0.0
    %2396 = vadd.xlane.f32.xlu0 %v2395
    %v2397 = vpop.xlane.xlu0 %2396
    %v2398 = vrcp.pop %v2388
    %v2399 = vrcp.pop %v2391
    %v2400 = vrcp.pop %v2394
    %v2401 = vrcp.pop %v2397
    %v2402 = vmul.f32 %v2379, %v2398
    %v2403 = vmul.f32 %v2381, %v2399
    %v2404 = vmul.f32 %v2383, %v2400
    %v2405 = vmul.f32 %v2385, %v2401
    %v2406 = vpack.c.bf16 %v2403, %v2402
    %v2407 = vpack.c.bf16 %v2405, %v2404
    %2408 = vrot.lane.b32.xlu0 %v2101, 48
    %v2409 = vpop.permute.xlu0 %2408
    %2410 = vrot.lane.b32.xlu0 %v2102, 48
    %v2411 = vpop.permute.xlu0 %2410
    %v2415 = vsel %vm306, %v2406, 0
    %v2418 = vsel %vm306, %v2407, 0
    %2420 = vmatprep.subr.bf16.mxu0 0
    %2421 = vmatpush1.bf16.msra.mxu0 %v2409
    %2422 = vmatprep.subr.bf16.mxu0 0
    %2423 = vmatpush1.bf16.msra.mxu0 %v2411
    %2424 = vmatprep.subr.bf16.mxu0 0
    %2425 = vmatpush1.bf16.msra.mxu0 0
    %2426 = vmatprep.subr.bf16.mxu0 0
    %2427 = vmatpush1.bf16.msra.mxu0 0
    %2428 = vmatprep.subr.bf16.mxu0 0
    %2429 = vmatpush1.bf16.msra.mxu0 0
    %2430 = vmatprep.subr.bf16.mxu0 0
    %2431 = vmatpush1.bf16.msra.mxu0 0
    %2432 = vmatprep.subr.bf16.mxu0 0
    %2433 = vmatpush1.bf16.msra.mxu0 0
    %2434 = vmatprep.subr.bf16.mxu0 0
    %2435 = vmatpush1.bf16.msra.mxu0 0
    %2436 = vmatprep.subr.bf16.mxu0 0
    %2437 = vmatpush1.bf16.msra.mxu0 0
    %2438 = vmatprep.subr.bf16.mxu0 0
    %2439 = vmatpush1.bf16.msra.mxu0 0
    %2440 = vmatprep.subr.bf16.mxu0 0
    %2441 = vmatpush1.bf16.msra.mxu0 0
    %2442 = vmatprep.subr.bf16.mxu0 0
    %2443 = vmatpush1.bf16.msra.mxu0 0
    %2444 = vmatprep.subr.bf16.mxu0 0
    %2445 = vmatpush1.bf16.msra.mxu0 0
    %2446 = vmatprep.subr.bf16.mxu0 0
    %2447 = vmatpush1.bf16.msra.mxu0 0
    %2448 = vmatprep.subr.bf16.mxu0 0
    %2449 = vmatpush1.bf16.msra.mxu0 0
    %2450 = vmatprep.subr.bf16.mxu0 0
    %2451 = vmatpush1.bf16.msra.mxu0 0
    %2452 = vmatprep.mubr.bf16.mxu0 0
    %2453 = vmatmul.mubr.bf16.gmra.mrb[0].mxu0 %v2415
    %v2454 = vpop.f32.mrb[0].mxu0
    %v2455 = vadd.f32 0.0, %v2454
    %v2456 = vpop.f32.mrb[0].mxu0
    %v2457 = vpop.f32.mrb[0].mxu0
    %v2458 = vadd.f32 0.0, %v2457
    %v2459 = vpop.f32.mrb[0].mxu0
    %2460 = vmatprep.mubr.bf16.mxu0 0
    %2461 = vmatmul.mubr.bf16.gmra.mrb[0].mxu0 %v2418
    %v2462 = vpop.f32.mrb[0].mxu0
    %v2463 = vadd.f32 0.0, %v2462
    %v2464 = vpop.f32.mrb[0].mxu0
    %v2465 = vpop.f32.mrb[0].mxu0
    %v2466 = vadd.f32 0.0, %v2465
    %v2467 = vpop.f32.mrb[0].mxu0
    %2468 = vdwg.mxu0
    %2473 = vrot.lane.b32.xlu0 %v2455, 16
    %v2474 = vpop.permute.xlu0 %2473
    %2475 = vrot.lane.b32.xlu0 %v2458, 16
    %v2476 = vpop.permute.xlu0 %2475
    %2477 = vrot.lane.b32.xlu0 %v2463, 16
    %v2478 = vpop.permute.xlu0 %2477
    %2479 = vrot.lane.b32.xlu0 %v2466, 16
    %v2480 = vpop.permute.xlu0 %2479
    %v2485 = vsel %vm486, %v2271, %v2474
    %v2486 = vsel %vm486, %v2274, %v2476
    %v2487 = vsel %vm486, %v2279, %v2478
    %v2488 = vsel %vm486, %v2282, %v2480
    %v2489 = vpack.c.bf16 %v2486, %v2485
    %v2490 = vpack.c.bf16 %v2488, %v2487
    %v2495 = vunpack.c.l.b16 %v1930
    %v2496 = vunpack.c.l.b16 %v1931
    %v2497 = vunpack.c.l.b16 %v1932
    %v2498 = vunpack.c.l.b16 %v1933
    %v2499 = vpack.c.b16 %v2496, %v2495
    %v2500 = vpack.c.b16 %v2498, %v2497
    %v2504 = vsel %vm306, %v2489, 0
    %v2507 = vsel %vm306, %v2490, 0
    %2509 = vmatprep.subr.bf16.mxu0 0
    %2510 = vmatpush1.bf16.msra.mxu0 %v2499
    %2511 = vmatprep.subr.bf16.mxu0 0
    %2512 = vmatpush1.bf16.msra.mxu0 %v2500
    %2513 = vmatprep.subr.bf16.mxu0 0
    %2514 = vmatpush1.bf16.msra.mxu0 0
    %2515 = vmatprep.subr.bf16.mxu0 0
    %2516 = vmatpush1.bf16.msra.mxu0 0
    %2517 = vmatprep.subr.bf16.mxu0 0
    %2518 = vmatpush1.bf16.msra.mxu0 0
    %2519 = vmatprep.subr.bf16.mxu0 0
    %2520 = vmatpush1.bf16.msra.mxu0 0
    %2521 = vmatprep.subr.bf16.mxu0 0
    %2522 = vmatpush1.bf16.msra.mxu0 0
    %2523 = vmatprep.subr.bf16.mxu0 0
    %2524 = vmatpush1.bf16.msra.mxu0 0
    %2525 = vmatprep.subr.bf16.mxu0 0
    %2526 = vmatpush1.bf16.msra.mxu0 0
    %2527 = vmatprep.subr.bf16.mxu0 0
    %2528 = vmatpush1.bf16.msra.mxu0 0
    %2529 = vmatprep.subr.bf16.mxu0 0
    %2530 = vmatpush1.bf16.msra.mxu0 0
    %2531 = vmatprep.subr.bf16.mxu0 0
    %2532 = vmatpush1.bf16.msra.mxu0 0
    %2533 = vmatprep.subr.bf16.mxu0 0
    %2534 = vmatpush1.bf16.msra.mxu0 0
    %2535 = vmatprep.subr.bf16.mxu0 0
    %2536 = vmatpush1.bf16.msra.mxu0 0
    %2537 = vmatprep.subr.bf16.mxu0 0
    %2538 = vmatpush1.bf16.msra.mxu0 0
    %2539 = vmatprep.subr.bf16.mxu0 0
    %2540 = vmatpush1.bf16.msra.mxu0 0
    %2541 = vmatprep.mubr.bf16.mxu0 0
    %2542 = vmatmul.mubr.bf16.gmra.mrb[0].mxu0 %v2504
    %v2543 = vpop.f32.mrb[0].mxu0
    %v2544 = vadd.f32 0.0, %v2543
    %v2545 = vpop.f32.mrb[0].mxu0
    %v2546 = vpop.f32.mrb[0].mxu0
    %v2547 = vadd.f32 0.0, %v2546
    %v2548 = vpop.f32.mrb[0].mxu0
    %2549 = vmatprep.mubr.bf16.mxu0 0
    %2550 = vmatmul.mubr.bf16.gmra.mrb[0].mxu0 %v2507
    %v2551 = vpop.f32.mrb[0].mxu0
    %v2552 = vadd.f32 0.0, %v2551
    %v2553 = vpop.f32.mrb[0].mxu0
    %v2554 = vpop.f32.mrb[0].mxu0
    %v2555 = vadd.f32 0.0, %v2554
    %v2556 = vpop.f32.mrb[0].mxu0
    %2557 = vdwg.mxu0
    %v2558 = vadd.f32 %v1920, %v2544
    %v2559 = vadd.f32 %v1921, %v2547
    %v2560 = vadd.f32 %v1922, %v2552
    %v2561 = vadd.f32 %v1923, %v2555
    %v2563 = vlaneseq
    %v2564 = vshrl.u32 %v2563, 7
    %v2565 = vsub.s32 0, %v2564
    %v2566 = vrot.slane %v1934, %v2565
    %v2568 = vadd.f32 %v2558, %v2566
    %v2569 = vadd.f32 %v2559, %v2566
    %v2570 = vadd.f32 %v2560, %v2566
    %v2571 = vadd.f32 %v2561, %v2566
    %v2572 = vsel %vm306, %v2568, 0.0
    %2573 = vadd.xlane.f32.xlu0 %v2572
    %v2574 = vpop.xlane.xlu0 %2573
    %v2575 = vsel %vm306, %v2569, 0.0
    %2576 = vadd.xlane.f32.xlu0 %v2575
    %v2577 = vpop.xlane.xlu0 %2576
    %v2578 = vsel %vm306, %v2570, 0.0
    %2579 = vadd.xlane.f32.xlu0 %v2578
    %v2580 = vpop.xlane.xlu0 %2579
    %v2581 = vsel %vm306, %v2571, 0.0
    %2582 = vadd.xlane.f32.xlu0 %v2581
    %v2583 = vpop.xlane.xlu0 %2582
    %v2584 = vmul.f32 %v2574, %v314
    %v2585 = vmul.f32 %v2577, %v314
    %v2586 = vmul.f32 %v2580, %v314
    %v2587 = vmul.f32 %v2583, %v314
    %v2588 = vsub.f32 %v2568, %v2584
    %v2589 = vsub.f32 %v2569, %v2585
    %v2590 = vsub.f32 %v2570, %v2586
    %v2591 = vsub.f32 %v2571, %v2587
    %v2592 = vmul.f32 %v2588, %v2588
    %v2593 = vmul.f32 %v2589, %v2589
    %v2594 = vmul.f32 %v2590, %v2590
    %v2595 = vmul.f32 %v2591, %v2591
    %v2596 = vsel %vm306, %v2592, 0.0
    %2597 = vadd.xlane.f32.xlu0 %v2596
    %v2598 = vpop.xlane.xlu0 %2597
    %v2599 = vsel %vm306, %v2593, 0.0
    %2600 = vadd.xlane.f32.xlu0 %v2599
    %v2601 = vpop.xlane.xlu0 %2600
    %v2602 = vsel %vm306, %v2594, 0.0
    %2603 = vadd.xlane.f32.xlu0 %v2602
    %v2604 = vpop.xlane.xlu0 %2603
    %v2605 = vsel %vm306, %v2595, 0.0
    %2606 = vadd.xlane.f32.xlu0 %v2605
    %v2607 = vpop.xlane.xlu0 %2606
    %v2608 = vmul.f32 %v2598, %v314
    %v2609 = vmul.f32 %v2601, %v314
    %v2610 = vmul.f32 %v2604, %v314
    %v2611 = vmul.f32 %v2607, %v314
    %v2612 = vadd.f32 %v2608, 1e-05
    %v2613 = vadd.f32 %v2609, 1e-05
    %v2614 = vadd.f32 %v2610, 1e-05
    %v2615 = vadd.f32 %v2611, 1e-05
    %v2616 = vrsqrt.pop %v2612
    %v2617 = vrsqrt.pop %v2613
    %v2618 = vrsqrt.pop %v2614
    %v2619 = vrsqrt.pop %v2615
    %v2620 = vmul.f32 %v2588, %v2616
    %v2621 = vmul.f32 %v2589, %v2617
    %v2622 = vmul.f32 %v2590, %v2618
    %v2623 = vmul.f32 %v2591, %v2619
    %v2624 = vlaneseq
    %v2625 = vshrl.u32 %v2624, 7
    %v2626 = vsub.s32 0, %v2625
    %v2627 = vrot.slane %v1935, %v2626
    %v2628 = vmul.f32 %v2620, %v2627
    %v2629 = vmul.f32 %v2621, %v2627
    %v2630 = vmul.f32 %v2622, %v2627
    %v2631 = vmul.f32 %v2623, %v2627
    %v2632 = vlaneseq
    %v2633 = vshrl.u32 %v2632, 7
    %v2634 = vsub.s32 1, %v2633
    %v2635 = vrot.slane %v1935, %v2634
    %v2636 = vadd.f32 %v2628, %v2635
    %v2637 = vadd.f32 %v2629, %v2635
    %v2638 = vadd.f32 %v2630, %v2635
    %v2639 = vadd.f32 %v2631, %v2635
    %v2640 = vpack.c.bf16 %v2637, %v2636
    %v2641 = vpack.c.bf16 %v2639, %v2638
    %v2643 = vlaneseq
    %v2644 = vshrl.u32 %v2643, 7
    %v2645 = vsub.s32 0, %v2644
    %v2646 = vrot.slane %v1940, %v2645
    %v2652 = vunpack.c.l.b16 %v1936
    %v2653 = vunpack.c.l.b16 %v1937
    %v2654 = vunpack.c.l.b16 %v1938
    %v2655 = vunpack.c.l.b16 %v1939
    %v2656 = vpack.c.b16 %v2653, %v2652
    %v2657 = vpack.c.b16 %v2655, %v2654
    %v2661 = vsel %vm306, %v2640, 0
    %v2664 = vsel %vm306, %v2641, 0
    %2666 = vmatprep.subr.bf16.mxu0 0
    %2667 = vmatpush1.bf16.msra.mxu0 %v2656
    %2668 = vmatprep.subr.bf16.mxu0 0
    %2669 = vmatpush1.bf16.msra.mxu0 %v2657
    %2670 = vmatprep.subr.bf16.mxu0 0
    %2671 = vmatpush1.bf16.msra.mxu0 0
    %2672 = vmatprep.subr.bf16.mxu0 0
    %2673 = vmatpush1.bf16.msra.mxu0 0
    %2674 = vmatprep.subr.bf16.mxu0 0
    %2675 = vmatpush1.bf16.msra.mxu0 0
    %2676 = vmatprep.subr.bf16.mxu0 0
    %2677 = vmatpush1.bf16.msra.mxu0 0
    %2678 = vmatprep.subr.bf16.mxu0 0
    %2679 = vmatpush1.bf16.msra.mxu0 0
    %2680 = vmatprep.subr.bf16.mxu0 0
    %2681 = vmatpush1.bf16.msra.mxu0 0
    %2682 = vmatprep.subr.bf16.mxu0 0
    %2683 = vmatpush1.bf16.msra.mxu0 0
    %2684 = vmatprep.subr.bf16.mxu0 0
    %2685 = vmatpush1.bf16.msra.mxu0 0
    %2686 = vmatprep.subr.bf16.mxu0 0
    %2687 = vmatpush1.bf16.msra.mxu0 0
    %2688 = vmatprep.subr.bf16.mxu0 0
    %2689 = vmatpush1.bf16.msra.mxu0 0
    %2690 = vmatprep.subr.bf16.mxu0 0
    %2691 = vmatpush1.bf16.msra.mxu0 0
    %2692 = vmatprep.subr.bf16.mxu0 0
    %2693 = vmatpush1.bf16.msra.mxu0 0
    %2694 = vmatprep.subr.bf16.mxu0 0
    %2695 = vmatpush1.bf16.msra.mxu0 0
    %2696 = vmatprep.subr.bf16.mxu0 0
    %2697 = vmatpush1.bf16.msra.mxu0 0
    %2698 = vmatprep.mubr.bf16.mxu0 0
    %2699 = vmatmul.mubr.bf16.gmra.mrb[0].mxu0 %v2661
    %v2700 = vpop.f32.mrb[0].mxu0
    %v2701 = vadd.f32 %v2646, %v2700
    %v2702 = vpop.f32.mrb[0].mxu0
    %v2703 = vpop.f32.mrb[0].mxu0
    %v2704 = vadd.f32 %v2646, %v2703
    %v2705 = vpop.f32.mrb[0].mxu0
    %2706 = vmatprep.mubr.bf16.mxu0 0
    %2707 = vmatmul.mubr.bf16.gmra.mrb[0].mxu0 %v2664
    %v2708 = vpop.f32.mrb[0].mxu0
    %v2709 = vadd.f32 %v2646, %v2708
    %v2710 = vpop.f32.mrb[0].mxu0
    %v2711 = vpop.f32.mrb[0].mxu0
    %v2712 = vadd.f32 %v2646, %v2711
    %v2713 = vpop.f32.mrb[0].mxu0
    %2714 = vdwg.mxu0
    %v2715 = vmul.f32 %v2701, 1.702
    %v2716 = vmul.f32 %v2704, 1.702
    %v2717 = vmul.f32 %v2709, 1.702
    %v2718 = vmul.f32 %v2712, 1.702
    %v2719 = vxor.u32 %v2715, 2147483648
    %v2720 = vxor.u32 %v2716, 2147483648
    %v2721 = vxor.u32 %v2717, 2147483648
    %v2722 = vxor.u32 %v2718, 2147483648
    %v2723 = vmul.f32 %v2719, 1.442695
    %v2724 = vpow.pop %v2723
    %v2725 = vmul.f32 %v2720, 1.442695
    %v2726 = vpow.pop %v2725
    %v2727 = vmul.f32 %v2721, 1.442695
    %v2728 = vpow.pop %v2727
    %v2729 = vmul.f32 %v2722, 1.442695
    %v2730 = vpow.pop %v2729
    %v2731 = vadd.f32 %v2724, 1.0
    %v2732 = vadd.f32 %v2726, 1.0
    %v2733 = vadd.f32 %v2728, 1.0
    %v2734 = vadd.f32 %v2730, 1.0
    %v2735 = vrcp.pop %v2731
    %v2736 = vmul.f32 1.0, %v2735
    %v2737 = vrcp.pop %v2732
    %v2738 = vmul.f32 1.0, %v2737
    %v2739 = vrcp.pop %v2733
    %v2740 = vmul.f32 1.0, %v2739
    %v2741 = vrcp.pop %v2734
    %v2742 = vmul.f32 1.0, %v2741
    %v2743 = vmul.f32 %v2701, %v2736
    %v2744 = vmul.f32 %v2704, %v2738
    %v2745 = vmul.f32 %v2709, %v2740
    %v2746 = vmul.f32 %v2712, %v2742
    %v2747 = vpack.c.bf16 %v2744, %v2743
    %v2748 = vpack.c.bf16 %v2746, %v2745
    %v2765 = vunpack.c.l.b16 %v1941
    %v2766 = vunpack.c.l.b16 %v1942
    %v2767 = vunpack.c.l.b16 %v1943
    %v2768 = vunpack.c.l.b16 %v1944
    %v2769 = vunpack.c.l.b16 %v1945
    %v2770 = vunpack.c.l.b16 %v1946
    %v2771 = vunpack.c.l.b16 %v1947
    %v2772 = vunpack.c.l.b16 %v1948
    %v2773 = vunpack.c.l.b16 %v1949
    %v2774 = vunpack.c.l.b16 %v1950
    %v2775 = vunpack.c.l.b16 %v1951
    %v2776 = vunpack.c.l.b16 %v1952
    %v2777 = vunpack.c.l.b16 %v1953
    %v2778 = vunpack.c.l.b16 %v1954
    %v2779 = vunpack.c.l.b16 %v1955
    %v2780 = vunpack.c.l.b16 %v1956
    %v2781 = vpack.c.b16 %v2766, %v2765
    %v2782 = vpack.c.b16 %v2768, %v2767
    %v2783 = vpack.c.b16 %v2770, %v2769
    %v2784 = vpack.c.b16 %v2772, %v2771
    %v2785 = vpack.c.b16 %v2774, %v2773
    %v2786 = vpack.c.b16 %v2776, %v2775
    %v2787 = vpack.c.b16 %v2778, %v2777
    %v2788 = vpack.c.b16 %v2780, %v2779
    %2797 = vmatprep.subr.bf16.mxu0 0
    %2798 = vmatpush1.bf16.msra.mxu0 %v2781
    %2799 = vmatprep.subr.bf16.mxu0 0
    %2800 = vmatpush1.bf16.msra.mxu0 %v2782
    %2801 = vmatprep.subr.bf16.mxu0 0
    %2802 = vmatpush1.bf16.msra.mxu0 %v2783
    %2803 = vmatprep.subr.bf16.mxu0 0
    %2804 = vmatpush1.bf16.msra.mxu0 %v2784
    %2805 = vmatprep.subr.bf16.mxu0 0
    %2806 = vmatpush1.bf16.msra.mxu0 %v2785
    %2807 = vmatprep.subr.bf16.mxu0 0
    %2808 = vmatpush1.bf16.msra.mxu0 %v2786
    %2809 = vmatprep.subr.bf16.mxu0 0
    %2810 = vmatpush1.bf16.msra.mxu0 %v2787
    %2811 = vmatprep.subr.bf16.mxu0 0
    %2812 = vmatpush1.bf16.msra.mxu0 %v2788
    %2813 = vmatprep.subr.bf16.mxu0 0
    %2814 = vmatpush1.bf16.msra.mxu0 0
    %2815 = vmatprep.subr.bf16.mxu0 0
    %2816 = vmatpush1.bf16.msra.mxu0 0
    %2817 = vmatprep.subr.bf16.mxu0 0
    %2818 = vmatpush1.bf16.msra.mxu0 0
    %2819 = vmatprep.subr.bf16.mxu0 0
    %2820 = vmatpush1.bf16.msra.mxu0 0
    %2821 = vmatprep.subr.bf16.mxu0 0
    %2822 = vmatpush1.bf16.msra.mxu0 0
    %2823 = vmatprep.subr.bf16.mxu0 0
    %2824 = vmatpush1.bf16.msra.mxu0 0
    %2825 = vmatprep.subr.bf16.mxu0 0
    %2826 = vmatpush1.bf16.msra.mxu0 0
    %2827 = vmatprep.subr.bf16.mxu0 0
    %2828 = vmatpush1.bf16.msra.mxu0 0
    %2829 = vmatprep.mubr.bf16.mxu0 0
    %2830 = vmatmul.mubr.bf16.gmra.mrb[0].mxu0 %v2747
    %v2831 = vpop.f32.mrb[0].mxu0
    %v2832 = vadd.f32 0.0, %v2831
    %v2833 = vpop.f32.mrb[0].mxu0
    %v2834 = vpop.f32.mrb[0].mxu0
    %v2835 = vadd.f32 0.0, %v2834
    %v2836 = vpop.f32.mrb[0].mxu0
    %2837 = vmatprep.mubr.bf16.mxu0 0
    %2838 = vmatmul.mubr.bf16.gmra.mrb[0].mxu0 %v2748
    %v2839 = vpop.f32.mrb[0].mxu0
    %v2840 = vadd.f32 0.0, %v2839
    %v2841 = vpop.f32.mrb[0].mxu0
    %v2842 = vpop.f32.mrb[0].mxu0
    %v2843 = vadd.f32 0.0, %v2842
    %v2844 = vpop.f32.mrb[0].mxu0
    %2845 = vdwg.mxu0
    %v2846 = vadd.f32 %v2568, %v2832
    %v2847 = vadd.f32 %v2569, %v2835
    %v2848 = vadd.f32 %v2570, %v2840
    %v2849 = vadd.f32 %v2571, %v2843
    %v2851 = vlaneseq
    %v2852 = vshrl.u32 %v2851, 7
    %v2853 = vsub.s32 0, %v2852
    %v2854 = vrot.slane %v1957, %v2853
    %v2856 = vadd.f32 %v2846, %v2854
    %v2857 = vadd.f32 %v2847, %v2854
    %v2858 = vadd.f32 %v2848, %v2854
    %v2859 = vadd.f32 %v2849, %v2854
    %s2860 = scalar_lea.vmem %s37, 2
    %v2861 = vld [vmem:[%s2860] sm:$0x3]
    %s2862 = scalar_lea.vmem %s39, 16
    %v2863 = vld [vmem:[%s2862] sm:$0xf]
    %v2864 = vld [vmem:[%s2862 + $0x4] sm:$0xf]
    %v2865 = vld [vmem:[%s2862 + $0x8] sm:$0xf]
    %v2866 = vld [vmem:[%s2862 + $0xc] sm:$0xf]
    %s2867 = scalar_lea.vmem %s41, 1
    %v2868 = vld [vmem:[%s2867] sm:$0x1]
    %s2869 = scalar_lea.vmem %s43, 16
    %v2870 = vld [vmem:[%s2869] sm:$0xf]
    %v2871 = vld [vmem:[%s2869 + $0x4] sm:$0xf]
    %v2872 = vld [vmem:[%s2869 + $0x8] sm:$0xf]
    %v2873 = vld [vmem:[%s2869 + $0xc] sm:$0xf]
    %s2874 = scalar_lea.vmem %s45, 1
    %v2875 = vld [vmem:[%s2874] sm:$0x1]
    %s2876 = scalar_lea.vmem %s47, 2
    %v2877 = vld [vmem:[%s2876] sm:$0x3]
    %s2878 = scalar_lea.vmem %s49, 16
    %v2879 = vld [vmem:[%s2878] sm:$0xf]
    %v2880 = vld [vmem:[%s2878 + $0x4] sm:$0xf]
    %v2881 = vld [vmem:[%s2878 + $0x8] sm:$0xf]
    %v2882 = vld [vmem:[%s2878 + $0xc] sm:$0xf]
    %s2883 = scalar_lea.vmem %s51, 1
    %v2884 = vld [vmem:[%s2883] sm:$0x1]
    %s2885 = scalar_lea.vmem %s53, 64
    %v2886 = vld [vmem:[%s2885] sm:$0xf]
    %v2887 = vld [vmem:[%s2885 + $0x4] sm:$0xf]
    %v2888 = vld [vmem:[%s2885 + $0x8] sm:$0xf]
    %v2889 = vld [vmem:[%s2885 + $0xc] sm:$0xf]
    %v2890 = vld [vmem:[%s2885 + $0x10] sm:$0xf]
    %v2891 = vld [vmem:[%s2885 + $0x14] sm:$0xf]
    %v2892 = vld [vmem:[%s2885 + $0x18] sm:$0xf]
    %v2893 = vld [vmem:[%s2885 + $0x1c] sm:$0xf]
    %v2894 = vld [vmem:[%s2885 + $0x20] sm:$0xf]
    %v2895 = vld [vmem:[%s2885 + $0x24] sm:$0xf]
    %v2896 = vld [vmem:[%s2885 + $0x28] sm:$0xf]
    %v2897 = vld [vmem:[%s2885 + $0x2c] sm:$0xf]
    %v2898 = vld [vmem:[%s2885 + $0x30] sm:$0xf]
    %v2899 = vld [vmem:[%s2885 + $0x34] sm:$0xf]
    %v2900 = vld [vmem:[%s2885 + $0x38] sm:$0xf]
    %v2901 = vld [vmem:[%s2885 + $0x3c] sm:$0xf]
    %s2902 = scalar_lea.vmem %s55, 1
    %v2903 = vld [vmem:[%s2902] sm:$0x1]
    %v2904 = vsel %vm306, %v2856, 0.0
    %2905 = vadd.xlane.f32.xlu0 %v2904
    %v2906 = vpop.xlane.xlu0 %2905
    %v2907 = vsel %vm306, %v2857, 0.0
    %2908 = vadd.xlane.f32.xlu0 %v2907
    %v2909 = vpop.xlane.xlu0 %2908
    %v2910 = vsel %vm306, %v2858, 0.0
    %2911 = vadd.xlane.f32.xlu0 %v2910
    %v2912 = vpop.xlane.xlu0 %2911
    %v2913 = vsel %vm306, %v2859, 0.0
    %2914 = vadd.xlane.f32.xlu0 %v2913
    %v2915 = vpop.xlane.xlu0 %2914
    %v2916 = vmul.f32 %v2906, %v314
    %v2917 = vmul.f32 %v2909, %v314
    %v2918 = vmul.f32 %v2912, %v314
    %v2919 = vmul.f32 %v2915, %v314
    %v2920 = vsub.f32 %v2856, %v2916
    %v2921 = vsub.f32 %v2857, %v2917
    %v2922 = vsub.f32 %v2858, %v2918
    %v2923 = vsub.f32 %v2859, %v2919
    %v2924 = vmul.f32 %v2920, %v2920
    %v2925 = vmul.f32 %v2921, %v2921
    %v2926 = vmul.f32 %v2922, %v2922
    %v2927 = vmul.f32 %v2923, %v2923
    %v2928 = vsel %vm306, %v2924, 0.0
    %2929 = vadd.xlane.f32.xlu0 %v2928
    %v2930 = vpop.xlane.xlu0 %2929
    %v2931 = vsel %vm306, %v2925, 0.0
    %2932 = vadd.xlane.f32.xlu0 %v2931
    %v2933 = vpop.xlane.xlu0 %2932
    %v2934 = vsel %vm306, %v2926, 0.0
    %2935 = vadd.xlane.f32.xlu0 %v2934
    %v2936 = vpop.xlane.xlu0 %2935
    %v2937 = vsel %vm306, %v2927, 0.0
    %2938 = vadd.xlane.f32.xlu0 %v2937
    %v2939 = vpop.xlane.xlu0 %2938
    %v2940 = vmul.f32 %v2930, %v314
    %v2941 = vmul.f32 %v2933, %v314
    %v2942 = vmul.f32 %v2936, %v314
    %v2943 = vmul.f32 %v2939, %v314
    %v2944 = vadd.f32 %v2940, 1e-05
    %v2945 = vadd.f32 %v2941, 1e-05
    %v2946 = vadd.f32 %v2942, 1e-05
    %v2947 = vadd.f32 %v2943, 1e-05
    %v2948 = vrsqrt.pop %v2944
    %v2949 = vrsqrt.pop %v2945
    %v2950 = vrsqrt.pop %v2946
    %v2951 = vrsqrt.pop %v2947
    %v2952 = vmul.f32 %v2920, %v2948
    %v2953 = vmul.f32 %v2921, %v2949
    %v2954 = vmul.f32 %v2922, %v2950
    %v2955 = vmul.f32 %v2923, %v2951
    %v2956 = vlaneseq
    %v2957 = vshrl.u32 %v2956, 7
    %v2958 = vsub.s32 0, %v2957
    %v2959 = vrot.slane %v2861, %v2958
    %v2960 = vmul.f32 %v2952, %v2959
    %v2961 = vmul.f32 %v2953, %v2959
    %v2962 = vmul.f32 %v2954, %v2959
    %v2963 = vmul.f32 %v2955, %v2959
    %v2964 = vlaneseq
    %v2965 = vshrl.u32 %v2964, 7
    %v2966 = vsub.s32 1, %v2965
    %v2967 = vrot.slane %v2861, %v2966
    %v2968 = vadd.f32 %v2960, %v2967
    %v2969 = vadd.f32 %v2961, %v2967
    %v2970 = vadd.f32 %v2962, %v2967
    %v2971 = vadd.f32 %v2963, %v2967
    %v2972 = vpack.c.bf16 %v2969, %v2968
    %v2973 = vpack.c.bf16 %v2971, %v2970
    %v2975 = vlaneseq
    %v2976 = vshrl.u32 %v2975, 7
    %v2977 = vsub.s32 0, %v2976
    %v2978 = vrot.slane %v2868, %v2977
    %v2984 = vunpack.c.l.b16 %v2863
    %v2985 = vunpack.c.l.b16 %v2864
    %v2986 = vunpack.c.l.b16 %v2865
    %v2987 = vunpack.c.l.b16 %v2866
    %v2988 = vpack.c.b16 %v2985, %v2984
    %v2989 = vpack.c.b16 %v2987, %v2986
    %v2993 = vsel %vm306, %v2972, 0
    %v2996 = vsel %vm306, %v2973, 0
    %2998 = vmatprep.subr.bf16.mxu0 0
    %2999 = vmatpush1.bf16.msra.mxu0 %v2988
    %3000 = vmatprep.subr.bf16.mxu0 0
    %3001 = vmatpush1.bf16.msra.mxu0 %v2989
    %3002 = vmatprep.subr.bf16.mxu0 0
    %3003 = vmatpush1.bf16.msra.mxu0 0
    %3004 = vmatprep.subr.bf16.mxu0 0
    %3005 = vmatpush1.bf16.msra.mxu0 0
    %3006 = vmatprep.subr.bf16.mxu0 0
    %3007 = vmatpush1.bf16.msra.mxu0 0
    %3008 = vmatprep.subr.bf16.mxu0 0
    %3009 = vmatpush1.bf16.msra.mxu0 0
    %3010 = vmatprep.subr.bf16.mxu0 0
    %3011 = vmatpush1.bf16.msra.mxu0 0
    %3012 = vmatprep.subr.bf16.mxu0 0
    %3013 = vmatpush1.bf16.msra.mxu0 0
    %3014 = vmatprep.subr.bf16.mxu0 0
    %3015 = vmatpush1.bf16.msra.mxu0 0
    %3016 = vmatprep.subr.bf16.mxu0 0
    %3017 = vmatpush1.bf16.msra.mxu0 0
    %3018 = vmatprep.subr.bf16.mxu0 0
    %3019 = vmatpush1.bf16.msra.mxu0 0
    %3020 = vmatprep.subr.bf16.mxu0 0
    %3021 = vmatpush1.bf16.msra.mxu0 0
    %3022 = vmatprep.subr.bf16.mxu0 0
    %3023 = vmatpush1.bf16.msra.mxu0 0
    %3024 = vmatprep.subr.bf16.mxu0 0
    %3025 = vmatpush1.bf16.msra.mxu0 0
    %3026 = vmatprep.subr.bf16.mxu0 0
    %3027 = vmatpush1.bf16.msra.mxu0 0
    %3028 = vmatprep.subr.bf16.mxu0 0
    %3029 = vmatpush1.bf16.msra.mxu0 0
    %3030 = vmatprep.mubr.bf16.mxu0 0
    %3031 = vmatmul.mubr.bf16.gmra.mrb[0].mxu0 %v2993
    %v3032 = vpop.f32.mrb[0].mxu0
    %v3033 = vadd.f32 %v2978, %v3032
    %v3034 = vpop.f32.mrb[0].mxu0
    %v3035 = vpop.f32.mrb[0].mxu0
    %v3036 = vadd.f32 %v2978, %v3035
    %v3037 = vpop.f32.mrb[0].mxu0
    %3038 = vmatprep.mubr.bf16.mxu0 0
    %3039 = vmatmul.mubr.bf16.gmra.mrb[0].mxu0 %v2996
    %v3040 = vpop.f32.mrb[0].mxu0
    %v3041 = vadd.f32 %v2978, %v3040
    %v3042 = vpop.f32.mrb[0].mxu0
    %v3043 = vpop.f32.mrb[0].mxu0
    %v3044 = vadd.f32 %v2978, %v3043
    %v3045 = vpop.f32.mrb[0].mxu0
    %3046 = vdwg.mxu0
    %v3047 = vpack.c.bf16 %v3036, %v3033
    %v3048 = vpack.c.bf16 %v3044, %v3041
    %3051 = vrot.lane.b32.xlu0 %v3047, 96
    %v3052 = vpop.permute.xlu0 %3051
    %3053 = vrot.lane.b32.xlu0 %v3048, 96
    %v3054 = vpop.permute.xlu0 %3053
    %v3056 = vsel %vm486, %v3047, 0
    %v3059 = vsel %vm486, %v3048, 0
    %v3062 = vsel %vm486, %v3052, 0
    %v3065 = vsel %vm486, %v3054, 0
    %3067 = vmatprep.subr.bf16.mxu0 0
    %3068 = vmatpush1.bf16.xpose.msra.mxu0 %v3062
    %3069 = vmatprep.subr.bf16.mxu0 0
    %3070 = vmatpush1.bf16.xpose.msra.mxu0 %v3065
    %3071 = vmatprep.subr.bf16.mxu0 0
    %3072 = vmatpush1.bf16.xpose.msra.mxu0 0
    %3073 = vmatprep.subr.bf16.mxu0 0
    %3074 = vmatpush1.bf16.xpose.msra.mxu0 0
    %3075 = vmatprep.subr.bf16.mxu0 0
    %3076 = vmatpush1.bf16.xpose.msra.mxu0 0
    %3077 = vmatprep.subr.bf16.mxu0 0
    %3078 = vmatpush1.bf16.xpose.msra.mxu0 0
    %3079 = vmatprep.subr.bf16.mxu0 0
    %3080 = vmatpush1.bf16.xpose.msra.mxu0 0
    %3081 = vmatprep.subr.bf16.mxu0 0
    %3082 = vmatpush1.bf16.xpose.msra.mxu0 0
    %3083 = vmatprep.subr.bf16.mxu0 0
    %3084 = vmatpush1.bf16.xpose.msra.mxu0 0
    %3085 = vmatprep.subr.bf16.mxu0 0
    %3086 = vmatpush1.bf16.xpose.msra.mxu0 0
    %3087 = vmatprep.subr.bf16.mxu0 0
    %3088 = vmatpush1.bf16.xpose.msra.mxu0 0
    %3089 = vmatprep.subr.bf16.mxu0 0
    %3090 = vmatpush1.bf16.xpose.msra.mxu0 0
    %3091 = vmatprep.subr.bf16.mxu0 0
    %3092 = vmatpush1.bf16.xpose.msra.mxu0 0
    %3093 = vmatprep.subr.bf16.mxu0 0
    %3094 = vmatpush1.bf16.xpose.msra.mxu0 0
    %3095 = vmatprep.subr.bf16.mxu0 0
    %3096 = vmatpush1.bf16.xpose.msra.mxu0 0
    %3097 = vmatprep.subr.bf16.mxu0 0
    %3098 = vmatpush1.bf16.xpose.msra.mxu0 0
    %3099 = vmatprep.mubr.bf16.mxu0 0
    %3100 = vmatmul.mubr.bf16.gmra.mrb[0].mxu0 %v3056
    %v3101 = vpop.f32.mrb[0].mxu0
    %v3102 = vadd.f32 0.0, %v3101
    %v3103 = vpop.f32.mrb[0].mxu0
    %v3104 = vpop.f32.mrb[0].mxu0
    %v3105 = vadd.f32 0.0, %v3104
    %v3106 = vpop.f32.mrb[0].mxu0
    %3107 = vmatprep.mubr.bf16.mxu0 0
    %3108 = vmatmul.mubr.bf16.gmra.mrb[0].mxu0 %v3059
    %v3109 = vpop.f32.mrb[0].mxu0
    %v3110 = vadd.f32 0.0, %v3109
    %v3111 = vpop.f32.mrb[0].mxu0
    %v3112 = vpop.f32.mrb[0].mxu0
    %v3113 = vadd.f32 0.0, %v3112
    %v3114 = vpop.f32.mrb[0].mxu0
    %3115 = vdwg.mxu0
    %v3116 = vmul.f32 %v3102, 0.25
    %v3117 = vmul.f32 %v3105, 0.25
    %v3118 = vmul.f32 %v3110, 0.25
    %v3119 = vmul.f32 %v3113, 0.25
    %v3120 = vadd.f32 %v3116, %v1916
    %v3121 = vadd.f32 %v3117, %v1917
    %v3122 = vadd.f32 %v3118, %v1918
    %v3123 = vadd.f32 %v3119, %v1919
    %v3124 = vsel %vm306, %v3120, -inf
    %3125 = vmax.xlane.f32.xlu0 %v3124
    %v3126 = vpop.xlane.xlu0 %3125
    %v3127 = vsel %vm306, %v3121, -inf
    %3128 = vmax.xlane.f32.xlu0 %v3127
    %v3129 = vpop.xlane.xlu0 %3128
    %v3130 = vsel %vm306, %v3122, -inf
    %3131 = vmax.xlane.f32.xlu0 %v3130
    %v3132 = vpop.xlane.xlu0 %3131
    %v3133 = vsel %vm306, %v3123, -inf
    %3134 = vmax.xlane.f32.xlu0 %v3133
    %v3135 = vpop.xlane.xlu0 %3134
    %v3136 = vsub.f32 %v3120, %v3126
    %v3137 = vsub.f32 %v3121, %v3129
    %v3138 = vsub.f32 %v3122, %v3132
    %v3139 = vsub.f32 %v3123, %v3135
    %v3140 = vmul.f32 %v3136, 1.442695
    %v3141 = vpow.pop %v3140
    %v3142 = vmul.f32 %v3137, 1.442695
    %v3143 = vpow.pop %v3142
    %v3144 = vmul.f32 %v3138, 1.442695
    %v3145 = vpow.pop %v3144
    %v3146 = vmul.f32 %v3139, 1.442695
    %v3147 = vpow.pop %v3146
    %v3148 = vsel %vm306, %v3141, 0.0
    %3149 = vadd.xlane.f32.xlu0 %v3148
    %v3150 = vpop.xlane.xlu0 %3149
    %v3151 = vsel %vm306, %v3143, 0.0
    %3152 = vadd.xlane.f32.xlu0 %v3151
    %v3153 = vpop.xlane.xlu0 %3152
    %v3154 = vsel %vm306, %v3145, 0.0
    %3155 = vadd.xlane.f32.xlu0 %v3154
    %v3156 = vpop.xlane.xlu0 %3155
    %v3157 = vsel %vm306, %v3147, 0.0
    %3158 = vadd.xlane.f32.xlu0 %v3157
    %v3159 = vpop.xlane.xlu0 %3158
    %v3160 = vrcp.pop %v3150
    %v3161 = vrcp.pop %v3153
    %v3162 = vrcp.pop %v3156
    %v3163 = vrcp.pop %v3159
    %v3164 = vmul.f32 %v3141, %v3160
    %v3165 = vmul.f32 %v3143, %v3161
    %v3166 = vmul.f32 %v3145, %v3162
    %v3167 = vmul.f32 %v3147, %v3163
    %v3168 = vpack.c.bf16 %v3165, %v3164
    %v3169 = vpack.c.bf16 %v3167, %v3166
    %3170 = vrot.lane.b32.xlu0 %v3047, 64
    %v3171 = vpop.permute.xlu0 %3170
    %3172 = vrot.lane.b32.xlu0 %v3048, 64
    %v3173 = vpop.permute.xlu0 %3172
    %v3177 = vsel %vm306, %v3168, 0
    %v3180 = vsel %vm306, %v3169, 0
    %3182 = vmatprep.subr.bf16.mxu0 0
    %3183 = vmatpush1.bf16.msra.mxu0 %v3171
    %3184 = vmatprep.subr.bf16.mxu0 0
    %3185 = vmatpush1.bf16.msra.mxu0 %v3173
    %3186 = vmatprep.subr.bf16.mxu0 0
    %3187 = vmatpush1.bf16.msra.mxu0 0
    %3188 = vmatprep.subr.bf16.mxu0 0
    %3189 = vmatpush1.bf16.msra.mxu0 0
    %3190 = vmatprep.subr.bf16.mxu0 0
    %3191 = vmatpush1.bf16.msra.mxu0 0
    %3192 = vmatprep.subr.bf16.mxu0 0
    %3193 = vmatpush1.bf16.msra.mxu0 0
    %3194 = vmatprep.subr.bf16.mxu0 0
    %3195 = vmatpush1.bf16.msra.mxu0 0
    %3196 = vmatprep.subr.bf16.mxu0 0
    %3197 = vmatpush1.bf16.msra.mxu0 0
    %3198 = vmatprep.subr.bf16.mxu0 0
    %3199 = vmatpush1.bf16.msra.mxu0 0
    %3200 = vmatprep.subr.bf16.mxu0 0
    %3201 = vmatpush1.bf16.msra.mxu0 0
    %3202 = vmatprep.subr.bf16.mxu0 0
    %3203 = vmatpush1.bf16.msra.mxu0 0
    %3204 = vmatprep.subr.bf16.mxu0 0
    %3205 = vmatpush1.bf16.msra.mxu0 0
    %3206 = vmatprep.subr.bf16.mxu0 0
    %3207 = vmatpush1.bf16.msra.mxu0 0
    %3208 = vmatprep.subr.bf16.mxu0 0
    %3209 = vmatpush1.bf16.msra.mxu0 0
    %3210 = vmatprep.subr.bf16.mxu0 0
    %3211 = vmatpush1.bf16.msra.mxu0 0
    %3212 = vmatprep.subr.bf16.mxu0 0
    %3213 = vmatpush1.bf16.msra.mxu0 0
    %3214 = vmatprep.mubr.bf16.mxu0 0
    %3215 = vmatmul.mubr.bf16.gmra.mrb[0].mxu0 %v3177
    %v3216 = vpop.f32.mrb[0].mxu0
    %v3217 = vadd.f32 0.0, %v3216
    %v3218 = vpop.f32.mrb[0].mxu0
    %v3219 = vpop.f32.mrb[0].mxu0
    %v3220 = vadd.f32 0.0, %v3219
    %v3221 = vpop.f32.mrb[0].mxu0
    %3222 = vmatprep.mubr.bf16.mxu0 0
    %3223 = vmatmul.mubr.bf16.gmra.mrb[0].mxu0 %v3180
    %v3224 = vpop.f32.mrb[0].mxu0
    %v3225 = vadd.f32 0.0, %v3224
    %v3226 = vpop.f32.mrb[0].mxu0
    %v3227 = vpop.f32.mrb[0].mxu0
    %v3228 = vadd.f32 0.0, %v3227
    %v3229 = vpop.f32.mrb[0].mxu0
    %3230 = vdwg.mxu0
    %3231 = vrot.lane.b32.xlu0 %v3047, 112
    %v3232 = vpop.permute.xlu0 %3231
    %3233 = vrot.lane.b32.xlu0 %v3048, 112
    %v3234 = vpop.permute.xlu0 %3233
    %3235 = vrot.lane.b32.xlu0 %v3047, 80
    %v3236 = vpop.permute.xlu0 %3235
    %3237 = vrot.lane.b32.xlu0 %v3048, 80
    %v3238 = vpop.permute.xlu0 %3237
    %v3240 = vsel %vm486, %v3232, 0
    %v3243 = vsel %vm486, %v3234, 0
    %v3246 = vsel %vm486, %v3236, 0
    %v3249 = vsel %vm486, %v3238, 0
    %3251 = vmatprep.subr.bf16.mxu0 0
    %3252 = vmatpush1.bf16.xpose.msra.mxu0 %v3246
    %3253 = vmatprep.subr.bf16.mxu0 0
    %3254 = vmatpush1.bf16.xpose.msra.mxu0 %v3249
    %3255 = vmatprep.subr.bf16.mxu0 0
    %3256 = vmatpush1.bf16.xpose.msra.mxu0 0
    %3257 = vmatprep.subr.bf16.mxu0 0
    %3258 = vmatpush1.bf16.xpose.msra.mxu0 0
    %3259 = vmatprep.subr.bf16.mxu0 0
    %3260 = vmatpush1.bf16.xpose.msra.mxu0 0
    %3261 = vmatprep.subr.bf16.mxu0 0
    %3262 = vmatpush1.bf16.xpose.msra.mxu0 0
    %3263 = vmatprep.subr.bf16.mxu0 0
    %3264 = vmatpush1.bf16.xpose.msra.mxu0 0
    %3265 = vmatprep.subr.bf16.mxu0 0
    %3266 = vmatpush1.bf16.xpose.msra.mxu0 0
    %3267 = vmatprep.subr.bf16.mxu0 0
    %3268 = vmatpush1.bf16.xpose.msra.mxu0 0
    %3269 = vmatprep.subr.bf16.mxu0 0
    %3270 = vmatpush1.bf16.xpose.msra.mxu0 0
    %3271 = vmatprep.subr.bf16.mxu0 0
    %3272 = vmatpush1.bf16.xpose.msra.mxu0 0
    %3273 = vmatprep.subr.bf16.mxu0 0
    %3274 = vmatpush1.bf16.xpose.msra.mxu0 0
    %3275 = vmatprep.subr.bf16.mxu0 0
    %3276 = vmatpush1.bf16.xpose.msra.mxu0 0
    %3277 = vmatprep.subr.bf16.mxu0 0
    %3278 = vmatpush1.bf16.xpose.msra.mxu0 0
    %3279 = vmatprep.subr.bf16.mxu0 0
    %3280 = vmatpush1.bf16.xpose.msra.mxu0 0
    %3281 = vmatprep.subr.bf16.mxu0 0
    %3282 = vmatpush1.bf16.xpose.msra.mxu0 0
    %3283 = vmatprep.mubr.bf16.mxu0 0
    %3284 = vmatmul.mubr.bf16.gmra.mrb[0].mxu0 %v3240
    %v3285 = vpop.f32.mrb[0].mxu0
    %v3286 = vadd.f32 0.0, %v3285
    %v3287 = vpop.f32.mrb[0].mxu0
    %v3288 = vpop.f32.mrb[0].mxu0
    %v3289 = vadd.f32 0.0, %v3288
    %v3290 = vpop.f32.mrb[0].mxu0
    %3291 = vmatprep.mubr.bf16.mxu0 0
    %3292 = vmatmul.mubr.bf16.gmra.mrb[0].mxu0 %v3243
    %v3293 = vpop.f32.mrb[0].mxu0
    %v3294 = vadd.f32 0.0, %v3293
    %v3295 = vpop.f32.mrb[0].mxu0
    %v3296 = vpop.f32.mrb[0].mxu0
    %v3297 = vadd.f32 0.0, %v3296
    %v3298 = vpop.f32.mrb[0].mxu0
    %3299 = vdwg.mxu0
    %v3300 = vmul.f32 %v3286, 0.25
    %v3301 = vmul.f32 %v3289, 0.25
    %v3302 = vmul.f32 %v3294, 0.25
    %v3303 = vmul.f32 %v3297, 0.25
    %v3304 = vadd.f32 %v3300, %v1916
    %v3305 = vadd.f32 %v3301, %v1917
    %v3306 = vadd.f32 %v3302, %v1918
    %v3307 = vadd.f32 %v3303, %v1919
    %v3308 = vsel %vm306, %v3304, -inf
    %3309 = vmax.xlane.f32.xlu0 %v3308
    %v3310 = vpop.xlane.xlu0 %3309
    %v3311 = vsel %vm306, %v3305, -inf
    %3312 = vmax.xlane.f32.xlu0 %v3311
    %v3313 = vpop.xlane.xlu0 %3312
    %v3314 = vsel %vm306, %v3306, -inf
    %3315 = vmax.xlane.f32.xlu0 %v3314
    %v3316 = vpop.xlane.xlu0 %3315
    %v3317 = vsel %vm306, %v3307, -inf
    %3318 = vmax.xlane.f32.xlu0 %v3317
    %v3319 = vpop.xlane.xlu0 %3318
    %v3320 = vsub.f32 %v3304, %v3310
    %v3321 = vsub.f32 %v3305, %v3313
    %v3322 = vsub.f32 %v3306, %v3316
    %v3323 = vsub.f32 %v3307, %v3319
    %v3324 = vmul.f32 %v3320, 1.442695
    %v3325 = vpow.pop %v3324
    %v3326 = vmul.f32 %v3321, 1.442695
    %v3327 = vpow.pop %v3326
    %v3328 = vmul.f32 %v3322, 1.442695
    %v3329 = vpow.pop %v3328
    %v3330 = vmul.f32 %v3323, 1.442695
    %v3331 = vpow.pop %v3330
    %v3332 = vsel %vm306, %v3325, 0.0
    %3333 = vadd.xlane.f32.xlu0 %v3332
    %v3334 = vpop.xlane.xlu0 %3333
    %v3335 = vsel %vm306, %v3327, 0.0
    %3336 = vadd.xlane.f32.xlu0 %v3335
    %v3337 = vpop.xlane.xlu0 %3336
    %v3338 = vsel %vm306, %v3329, 0.0
    %3339 = vadd.xlane.f32.xlu0 %v3338
    %v3340 = vpop.xlane.xlu0 %3339
    %v3341 = vsel %vm306, %v3331, 0.0
    %3342 = vadd.xlane.f32.xlu0 %v3341
    %v3343 = vpop.xlane.xlu0 %3342
    %v3344 = vrcp.pop %v3334
    %v3345 = vrcp.pop %v3337
    %v3346 = vrcp.pop %v3340
    %v3347 = vrcp.pop %v3343
    %v3348 = vmul.f32 %v3325, %v3344
    %v3349 = vmul.f32 %v3327, %v3345
    %v3350 = vmul.f32 %v3329, %v3346
    %v3351 = vmul.f32 %v3331, %v3347
    %v3352 = vpack.c.bf16 %v3349, %v3348
    %v3353 = vpack.c.bf16 %v3351, %v3350
    %3354 = vrot.lane.b32.xlu0 %v3047, 48
    %v3355 = vpop.permute.xlu0 %3354
    %3356 = vrot.lane.b32.xlu0 %v3048, 48
    %v3357 = vpop.permute.xlu0 %3356
    %v3361 = vsel %vm306, %v3352, 0
    %v3364 = vsel %vm306, %v3353, 0
    %3366 = vmatprep.subr.bf16.mxu0 0
    %3367 = vmatpush1.bf16.msra.mxu0 %v3355
    %3368 = vmatprep.subr.bf16.mxu0 0
    %3369 = vmatpush1.bf16.msra.mxu0 %v3357
    %3370 = vmatprep.subr.bf16.mxu0 0
    %3371 = vmatpush1.bf16.msra.mxu0 0
    %3372 = vmatprep.subr.bf16.mxu0 0
    %3373 = vmatpush1.bf16.msra.mxu0 0
    %3374 = vmatprep.subr.bf16.mxu0 0
    %3375 = vmatpush1.bf16.msra.mxu0 0
    %3376 = vmatprep.subr.bf16.mxu0 0
    %3377 = vmatpush1.bf16.msra.mxu0 0
    %3378 = vmatprep.subr.bf16.mxu0 0
    %3379 = vmatpush1.bf16.msra.mxu0 0
    %3380 = vmatprep.subr.bf16.mxu0 0
    %3381 = vmatpush1.bf16.msra.mxu0 0
    %3382 = vmatprep.subr.bf16.mxu0 0
    %3383 = vmatpush1.bf16.msra.mxu0 0
    %3384 = vmatprep.subr.bf16.mxu0 0
    %3385 = vmatpush1.bf16.msra.mxu0 0
    %3386 = vmatprep.subr.bf16.mxu0 0
    %3387 = vmatpush1.bf16.msra.mxu0 0
    %3388 = vmatprep.subr.bf16.mxu0 0
    %3389 = vmatpush1.bf16.msra.mxu0 0
    %3390 = vmatprep.subr.bf16.mxu0 0
    %3391 = vmatpush1.bf16.msra.mxu0 0
    %3392 = vmatprep.subr.bf16.mxu0 0
    %3393 = vmatpush1.bf16.msra.mxu0 0
    %3394 = vmatprep.subr.bf16.mxu0 0
    %3395 = vmatpush1.bf16.msra.mxu0 0
    %3396 = vmatprep.subr.bf16.mxu0 0
    %3397 = vmatpush1.bf16.msra.mxu0 0
    %3398 = vmatprep.mubr.bf16.mxu0 0
    %3399 = vmatmul.mubr.bf16.gmra.mrb[0].mxu0 %v3361
    %v3400 = vpop.f32.mrb[0].mxu0
    %v3401 = vadd.f32 0.0, %v3400
    %v3402 = vpop.f32.mrb[0].mxu0
    %v3403 = vpop.f32.mrb[0].mxu0
    %v3404 = vadd.f32 0.0, %v3403
    %v3405 = vpop.f32.mrb[0].mxu0
    %3406 = vmatprep.mubr.bf16.mxu0 0
    %3407 = vmatmul.mubr.bf16.gmra.mrb[0].mxu0 %v3364
    %v3408 = vpop.f32.mrb[0].mxu0
    %v3409 = vadd.f32 0.0, %v3408
    %v3410 = vpop.f32.mrb[0].mxu0
    %v3411 = vpop.f32.mrb[0].mxu0
    %v3412 = vadd.f32 0.0, %v3411
    %v3413 = vpop.f32.mrb[0].mxu0
    %3414 = vdwg.mxu0
    %3419 = vrot.lane.b32.xlu0 %v3401, 16
    %v3420 = vpop.permute.xlu0 %3419
    %3421 = vrot.lane.b32.xlu0 %v3404, 16
    %v3422 = vpop.permute.xlu0 %3421
    %3423 = vrot.lane.b32.xlu0 %v3409, 16
    %v3424 = vpop.permute.xlu0 %3423
    %3425 = vrot.lane.b32.xlu0 %v3412, 16
    %v3426 = vpop.permute.xlu0 %3425
    %v3431 = vsel %vm486, %v3217, %v3420
    %v3432 = vsel %vm486, %v3220, %v3422
    %v3433 = vsel %vm486, %v3225, %v3424
    %v3434 = vsel %vm486, %v3228, %v3426
    %v3435 = vpack.c.bf16 %v3432, %v3431
    %v3436 = vpack.c.bf16 %v3434, %v3433
    %v3441 = vunpack.c.l.b16 %v2870
    %v3442 = vunpack.c.l.b16 %v2871
    %v3443 = vunpack.c.l.b16 %v2872
    %v3444 = vunpack.c.l.b16 %v2873
    %v3445 = vpack.c.b16 %v3442, %v3441
    %v3446 = vpack.c.b16 %v3444, %v3443
    %v3450 = vsel %vm306, %v3435, 0
    %v3453 = vsel %vm306, %v3436, 0
    %3455 = vmatprep.subr.bf16.mxu0 0
    %3456 = vmatpush1.bf16.msra.mxu0 %v3445
    %3457 = vmatprep.subr.bf16.mxu0 0
    %3458 = vmatpush1.bf16.msra.mxu0 %v3446
    %3459 = vmatprep.subr.bf16.mxu0 0
    %3460 = vmatpush1.bf16.msra.mxu0 0
    %3461 = vmatprep.subr.bf16.mxu0 0
    %3462 = vmatpush1.bf16.msra.mxu0 0
    %3463 = vmatprep.subr.bf16.mxu0 0
    %3464 = vmatpush1.bf16.msra.mxu0 0
    %3465 = vmatprep.subr.bf16.mxu0 0
    %3466 = vmatpush1.bf16.msra.mxu0 0
    %3467 = vmatprep.subr.bf16.mxu0 0
    %3468 = vmatpush1.bf16.msra.mxu0 0
    %3469 = vmatprep.subr.bf16.mxu0 0
    %3470 = vmatpush1.bf16.msra.mxu0 0
    %3471 = vmatprep.subr.bf16.mxu0 0
    %3472 = vmatpush1.bf16.msra.mxu0 0
    %3473 = vmatprep.subr.bf16.mxu0 0
    %3474 = vmatpush1.bf16.msra.mxu0 0
    %3475 = vmatprep.subr.bf16.mxu0 0
    %3476 = vmatpush1.bf16.msra.mxu0 0
    %3477 = vmatprep.subr.bf16.mxu0 0
    %3478 = vmatpush1.bf16.msra.mxu0 0
    %3479 = vmatprep.subr.bf16.mxu0 0
    %3480 = vmatpush1.bf16.msra.mxu0 0
    %3481 = vmatprep.subr.bf16.mxu0 0
    %3482 = vmatpush1.bf16.msra.mxu0 0
    %3483 = vmatprep.subr.bf16.mxu0 0
    %3484 = vmatpush1.bf16.msra.mxu0 0
    %3485 = vmatprep.subr.bf16.mxu0 0
    %3486 = vmatpush1.bf16.msra.mxu0 0
    %3487 = vmatprep.mubr.bf16.mxu0 0
    %3488 = vmatmul.mubr.bf16.gmra.mrb[0].mxu0 %v3450
    %v3489 = vpop.f32.mrb[0].mxu0
    %v3490 = vadd.f32 0.0, %v3489
    %v3491 = vpop.f32.mrb[0].mxu0
    %v3492 = vpop.f32.mrb[0].mxu0
    %v3493 = vadd.f32 0.0, %v3492
    %v3494 = vpop.f32.mrb[0].mxu0
    %3495 = vmatprep.mubr.bf16.mxu0 0
    %3496 = vmatmul.mubr.bf16.gmra.mrb[0].mxu0 %v3453
    %v3497 = vpop.f32.mrb[0].mxu0
    %v3498 = vadd.f32 0.0, %v3497
    %v3499 = vpop.f32.mrb[0].mxu0
    %v3500 = vpop.f32.mrb[0].mxu0
    %v3501 = vadd.f32 0.0, %v3500
    %v3502 = vpop.f32.mrb[0].mxu0
    %3503 = vdwg.mxu0
    %v3504 = vadd.f32 %v2856, %v3490
    %v3505 = vadd.f32 %v2857, %v3493
    %v3506 = vadd.f32 %v2858, %v3498
    %v3507 = vadd.f32 %v2859, %v3501
    %v3509 = vlaneseq
    %v3510 = vshrl.u32 %v3509, 7
    %v3511 = vsub.s32 0, %v3510
    %v3512 = vrot.slane %v2875, %v3511
    %v3514 = vadd.f32 %v3504, %v3512
    %v3515 = vadd.f32 %v3505, %v3512
    %v3516 = vadd.f32 %v3506, %v3512
    %v3517 = vadd.f32 %v3507, %v3512
    %v3518 = vsel %vm306, %v3514, 0.0
    %3519 = vadd.xlane.f32.xlu0 %v3518
    %v3520 = vpop.xlane.xlu0 %3519
    %v3521 = vsel %vm306, %v3515, 0.0
    %3522 = vadd.xlane.f32.xlu0 %v3521
    %v3523 = vpop.xlane.xlu0 %3522
    %v3524 = vsel %vm306, %v3516, 0.0
    %3525 = vadd.xlane.f32.xlu0 %v3524
    %v3526 = vpop.xlane.xlu0 %3525
    %v3527 = vsel %vm306, %v3517, 0.0
    %3528 = vadd.xlane.f32.xlu0 %v3527
    %v3529 = vpop.xlane.xlu0 %3528
    %v3530 = vmul.f32 %v3520, %v314
    %v3531 = vmul.f32 %v3523, %v314
    %v3532 = vmul.f32 %v3526, %v314
    %v3533 = vmul.f32 %v3529, %v314
    %v3534 = vsub.f32 %v3514, %v3530
    %v3535 = vsub.f32 %v3515, %v3531
    %v3536 = vsub.f32 %v3516, %v3532
    %v3537 = vsub.f32 %v3517, %v3533
    %v3538 = vmul.f32 %v3534, %v3534
    %v3539 = vmul.f32 %v3535, %v3535
    %v3540 = vmul.f32 %v3536, %v3536
    %v3541 = vmul.f32 %v3537, %v3537
    %v3542 = vsel %vm306, %v3538, 0.0
    %3543 = vadd.xlane.f32.xlu0 %v3542
    %v3544 = vpop.xlane.xlu0 %3543
    %v3545 = vsel %vm306, %v3539, 0.0
    %3546 = vadd.xlane.f32.xlu0 %v3545
    %v3547 = vpop.xlane.xlu0 %3546
    %v3548 = vsel %vm306, %v3540, 0.0
    %3549 = vadd.xlane.f32.xlu0 %v3548
    %v3550 = vpop.xlane.xlu0 %3549
    %v3551 = vsel %vm306, %v3541, 0.0
    %3552 = vadd.xlane.f32.xlu0 %v3551
    %v3553 = vpop.xlane.xlu0 %3552
    %v3554 = vmul.f32 %v3544, %v314
    %v3555 = vmul.f32 %v3547, %v314
    %v3556 = vmul.f32 %v3550, %v314
    %v3557 = vmul.f32 %v3553, %v314
    %v3558 = vadd.f32 %v3554, 1e-05
    %v3559 = vadd.f32 %v3555, 1e-05
    %v3560 = vadd.f32 %v3556, 1e-05
    %v3561 = vadd.f32 %v3557, 1e-05
    %v3562 = vrsqrt.pop %v3558
    %v3563 = vrsqrt.pop %v3559
    %v3564 = vrsqrt.pop %v3560
    %v3565 = vrsqrt.pop %v3561
    %v3566 = vmul.f32 %v3534, %v3562
    %v3567 = vmul.f32 %v3535, %v3563
    %v3568 = vmul.f32 %v3536, %v3564
    %v3569 = vmul.f32 %v3537, %v3565
    %v3570 = vlaneseq
    %v3571 = vshrl.u32 %v3570, 7
    %v3572 = vsub.s32 0, %v3571
    %v3573 = vrot.slane %v2877, %v3572
    %v3574 = vmul.f32 %v3566, %v3573
    %v3575 = vmul.f32 %v3567, %v3573
    %v3576 = vmul.f32 %v3568, %v3573
    %v3577 = vmul.f32 %v3569, %v3573
    %v3578 = vlaneseq
    %v3579 = vshrl.u32 %v3578, 7
    %v3580 = vsub.s32 1, %v3579
    %v3581 = vrot.slane %v2877, %v3580
    %v3582 = vadd.f32 %v3574, %v3581
    %v3583 = vadd.f32 %v3575, %v3581
    %v3584 = vadd.f32 %v3576, %v3581
    %v3585 = vadd.f32 %v3577, %v3581
    %v3586 = vpack.c.bf16 %v3583, %v3582
    %v3587 = vpack.c.bf16 %v3585, %v3584
    %v3589 = vlaneseq
    %v3590 = vshrl.u32 %v3589, 7
    %v3591 = vsub.s32 0, %v3590
    %v3592 = vrot.slane %v2884, %v3591
    %v3598 = vunpack.c.l.b16 %v2879
    %v3599 = vunpack.c.l.b16 %v2880
    %v3600 = vunpack.c.l.b16 %v2881
    %v3601 = vunpack.c.l.b16 %v2882
    %v3602 = vpack.c.b16 %v3599, %v3598
    %v3603 = vpack.c.b16 %v3601, %v3600
    %v3607 = vsel %vm306, %v3586, 0
    %v3610 = vsel %vm306, %v3587, 0
    %3612 = vmatprep.subr.bf16.mxu0 0
    %3613 = vmatpush1.bf16.msra.mxu0 %v3602
    %3614 = vmatprep.subr.bf16.mxu0 0
    %3615 = vmatpush1.bf16.msra.mxu0 %v3603
    %3616 = vmatprep.subr.bf16.mxu0 0
    %3617 = vmatpush1.bf16.msra.mxu0 0
    %3618 = vmatprep.subr.bf16.mxu0 0
    %3619 = vmatpush1.bf16.msra.mxu0 0
    %3620 = vmatprep.subr.bf16.mxu0 0
    %3621 = vmatpush1.bf16.msra.mxu0 0
    %3622 = vmatprep.subr.bf16.mxu0 0
    %3623 = vmatpush1.bf16.msra.mxu0 0
    %3624 = vmatprep.subr.bf16.mxu0 0
    %3625 = vmatpush1.bf16.msra.mxu0 0
    %3626 = vmatprep.subr.bf16.mxu0 0
    %3627 = vmatpush1.bf16.msra.mxu0 0
    %3628 = vmatprep.subr.bf16.mxu0 0
    %3629 = vmatpush1.bf16.msra.mxu0 0
    %3630 = vmatprep.subr.bf16.mxu0 0
    %3631 = vmatpush1.bf16.msra.mxu0 0
    %3632 = vmatprep.subr.bf16.mxu0 0
    %3633 = vmatpush1.bf16.msra.mxu0 0
    %3634 = vmatprep.subr.bf16.mxu0 0
    %3635 = vmatpush1.bf16.msra.mxu0 0
    %3636 = vmatprep.subr.bf16.mxu0 0
    %3637 = vmatpush1.bf16.msra.mxu0 0
    %3638 = vmatprep.subr.bf16.mxu0 0
    %3639 = vmatpush1.bf16.msra.mxu0 0
    %3640 = vmatprep.subr.bf16.mxu0 0
    %3641 = vmatpush1.bf16.msra.mxu0 0
    %3642 = vmatprep.subr.bf16.mxu0 0
    %3643 = vmatpush1.bf16.msra.mxu0 0
    %3644 = vmatprep.mubr.bf16.mxu0 0
    %3645 = vmatmul.mubr.bf16.gmra.mrb[0].mxu0 %v3607
    %v3646 = vpop.f32.mrb[0].mxu0
    %v3647 = vadd.f32 %v3592, %v3646
    %v3648 = vpop.f32.mrb[0].mxu0
    %v3649 = vpop.f32.mrb[0].mxu0
    %v3650 = vadd.f32 %v3592, %v3649
    %v3651 = vpop.f32.mrb[0].mxu0
    %3652 = vmatprep.mubr.bf16.mxu0 0
    %3653 = vmatmul.mubr.bf16.gmra.mrb[0].mxu0 %v3610
    %v3654 = vpop.f32.mrb[0].mxu0
    %v3655 = vadd.f32 %v3592, %v3654
    %v3656 = vpop.f32.mrb[0].mxu0
    %v3657 = vpop.f32.mrb[0].mxu0
    %v3658 = vadd.f32 %v3592, %v3657
    %v3659 = vpop.f32.mrb[0].mxu0
    %3660 = vdwg.mxu0
    %v3661 = vmul.f32 %v3647, 1.702
    %v3662 = vmul.f32 %v3650, 1.702
    %v3663 = vmul.f32 %v3655, 1.702
    %v3664 = vmul.f32 %v3658, 1.702
    %v3665 = vxor.u32 %v3661, 2147483648
    %v3666 = vxor.u32 %v3662, 2147483648
    %v3667 = vxor.u32 %v3663, 2147483648
    %v3668 = vxor.u32 %v3664, 2147483648
    %v3669 = vmul.f32 %v3665, 1.442695
    %v3670 = vpow.pop %v3669
    %v3671 = vmul.f32 %v3666, 1.442695
    %v3672 = vpow.pop %v3671
    %v3673 = vmul.f32 %v3667, 1.442695
    %v3674 = vpow.pop %v3673
    %v3675 = vmul.f32 %v3668, 1.442695
    %v3676 = vpow.pop %v3675
    %v3677 = vadd.f32 %v3670, 1.0
    %v3678 = vadd.f32 %v3672, 1.0
    %v3679 = vadd.f32 %v3674, 1.0
    %v3680 = vadd.f32 %v3676, 1.0
    %v3681 = vrcp.pop %v3677
    %v3682 = vmul.f32 1.0, %v3681
    %v3683 = vrcp.pop %v3678
    %v3684 = vmul.f32 1.0, %v3683
    %v3685 = vrcp.pop %v3679
    %v3686 = vmul.f32 1.0, %v3685
    %v3687 = vrcp.pop %v3680
    %v3688 = vmul.f32 1.0, %v3687
    %v3689 = vmul.f32 %v3647, %v3682
    %v3690 = vmul.f32 %v3650, %v3684
    %v3691 = vmul.f32 %v3655, %v3686
    %v3692 = vmul.f32 %v3658, %v3688
    %v3693 = vpack.c.bf16 %v3690, %v3689
    %v3694 = vpack.c.bf16 %v3692, %v3691
    %v3711 = vunpack.c.l.b16 %v2886
    %v3712 = vunpack.c.l.b16 %v2887
    %v3713 = vunpack.c.l.b16 %v2888
    %v3714 = vunpack.c.l.b16 %v2889
    %v3715 = vunpack.c.l.b16 %v2890
    %v3716 = vunpack.c.l.b16 %v2891
    %v3717 = vunpack.c.l.b16 %v2892
    %v3718 = vunpack.c.l.b16 %v2893
    %v3719 = vunpack.c.l.b16 %v2894
    %v3720 = vunpack.c.l.b16 %v2895
    %v3721 = vunpack.c.l.b16 %v2896
    %v3722 = vunpack.c.l.b16 %v2897
    %v3723 = vunpack.c.l.b16 %v2898
    %v3724 = vunpack.c.l.b16 %v2899
    %v3725 = vunpack.c.l.b16 %v2900
    %v3726 = vunpack.c.l.b16 %v2901
    %v3727 = vpack.c.b16 %v3712, %v3711
    %v3728 = vpack.c.b16 %v3714, %v3713
    %v3729 = vpack.c.b16 %v3716, %v3715
    %v3730 = vpack.c.b16 %v3718, %v3717
    %v3731 = vpack.c.b16 %v3720, %v3719
    %v3732 = vpack.c.b16 %v3722, %v3721
    %v3733 = vpack.c.b16 %v3724, %v3723
    %v3734 = vpack.c.b16 %v3726, %v3725
    %3743 = vmatprep.subr.bf16.mxu0 0
    %3744 = vmatpush1.bf16.msra.mxu0 %v3727
    %3745 = vmatprep.subr.bf16.mxu0 0
    %3746 = vmatpush1.bf16.msra.mxu0 %v3728
    %3747 = vmatprep.subr.bf16.mxu0 0
    %3748 = vmatpush1.bf16.msra.mxu0 %v3729
    %3749 = vmatprep.subr.bf16.mxu0 0
    %3750 = vmatpush1.bf16.msra.mxu0 %v3730
    %3751 = vmatprep.subr.bf16.mxu0 0
    %3752 = vmatpush1.bf16.msra.mxu0 %v3731
    %3753 = vmatprep.subr.bf16.mxu0 0
    %3754 = vmatpush1.bf16.msra.mxu0 %v3732
    %3755 = vmatprep.subr.bf16.mxu0 0
    %3756 = vmatpush1.bf16.msra.mxu0 %v3733
    %3757 = vmatprep.subr.bf16.mxu0 0
    %3758 = vmatpush1.bf16.msra.mxu0 %v3734
    %3759 = vmatprep.subr.bf16.mxu0 0
    %3760 = vmatpush1.bf16.msra.mxu0 0
    %3761 = vmatprep.subr.bf16.mxu0 0
    %3762 = vmatpush1.bf16.msra.mxu0 0
    %3763 = vmatprep.subr.bf16.mxu0 0
    %3764 = vmatpush1.bf16.msra.mxu0 0
    %3765 = vmatprep.subr.bf16.mxu0 0
    %3766 = vmatpush1.bf16.msra.mxu0 0
    %3767 = vmatprep.subr.bf16.mxu0 0
    %3768 = vmatpush1.bf16.msra.mxu0 0
    %3769 = vmatprep.subr.bf16.mxu0 0
    %3770 = vmatpush1.bf16.msra.mxu0 0
    %3771 = vmatprep.subr.bf16.mxu0 0
    %3772 = vmatpush1.bf16.msra.mxu0 0
    %3773 = vmatprep.subr.bf16.mxu0 0
    %3774 = vmatpush1.bf16.msra.mxu0 0
    %3775 = vmatprep.mubr.bf16.mxu0 0
    %3776 = vmatmul.mubr.bf16.gmra.mrb[0].mxu0 %v3693
    %v3777 = vpop.f32.mrb[0].mxu0
    %v3778 = vadd.f32 0.0, %v3777
    %v3779 = vpop.f32.mrb[0].mxu0
    %v3780 = vpop.f32.mrb[0].mxu0
    %v3781 = vadd.f32 0.0, %v3780
    %v3782 = vpop.f32.mrb[0].mxu0
    %3783 = vmatprep.mubr.bf16.mxu0 0
    %3784 = vmatmul.mubr.bf16.gmra.mrb[0].mxu0 %v3694
    %v3785 = vpop.f32.mrb[0].mxu0
    %v3786 = vadd.f32 0.0, %v3785
    %v3787 = vpop.f32.mrb[0].mxu0
    %v3788 = vpop.f32.mrb[0].mxu0
    %v3789 = vadd.f32 0.0, %v3788
    %v3790 = vpop.f32.mrb[0].mxu0
    %3791 = vdwg.mxu0
    %v3792 = vadd.f32 %v3514, %v3778
    %v3793 = vadd.f32 %v3515, %v3781
    %v3794 = vadd.f32 %v3516, %v3786
    %v3795 = vadd.f32 %v3517, %v3789
    %v3797 = vlaneseq
    %v3798 = vshrl.u32 %v3797, 7
    %v3799 = vsub.s32 0, %v3798
    %v3800 = vrot.slane %v2903, %v3799
    %v3802 = vadd.f32 %v3792, %v3800
    %v3803 = vadd.f32 %v3793, %v3800
    %v3804 = vadd.f32 %v3794, %v3800
    %v3805 = vadd.f32 %v3795, %v3800
    %v3806 = vld [vmem:[%s57] sm:$0x3]
    %v3807 = vsel %vm306, %v3802, 0.0
    %3808 = vadd.xlane.f32.xlu0 %v3807
    %v3809 = vpop.xlane.xlu0 %3808
    %v3810 = vsel %vm306, %v3803, 0.0
    %3811 = vadd.xlane.f32.xlu0 %v3810
    %v3812 = vpop.xlane.xlu0 %3811
    %v3813 = vsel %vm306, %v3804, 0.0
    %3814 = vadd.xlane.f32.xlu0 %v3813
    %v3815 = vpop.xlane.xlu0 %3814
    %v3816 = vsel %vm306, %v3805, 0.0
    %3817 = vadd.xlane.f32.xlu0 %v3816
    %v3818 = vpop.xlane.xlu0 %3817
    %v3819 = vmul.f32 %v3809, %v314
    %v3820 = vmul.f32 %v3812, %v314
    %v3821 = vmul.f32 %v3815, %v314
    %v3822 = vmul.f32 %v3818, %v314
    %v3823 = vsub.f32 %v3802, %v3819
    %v3824 = vsub.f32 %v3803, %v3820
    %v3825 = vsub.f32 %v3804, %v3821
    %v3826 = vsub.f32 %v3805, %v3822
    %v3827 = vmul.f32 %v3823, %v3823
    %v3828 = vmul.f32 %v3824, %v3824
    %v3829 = vmul.f32 %v3825, %v3825
    %v3830 = vmul.f32 %v3826, %v3826
    %v3831 = vsel %vm306, %v3827, 0.0
    %3832 = vadd.xlane.f32.xlu0 %v3831
    %v3833 = vpop.xlane.xlu0 %3832
    %v3834 = vsel %vm306, %v3828, 0.0
    %3835 = vadd.xlane.f32.xlu0 %v3834
    %v3836 = vpop.xlane.xlu0 %3835
    %v3837 = vsel %vm306, %v3829, 0.0
    %3838 = vadd.xlane.f32.xlu0 %v3837
    %v3839 = vpop.xlane.xlu0 %3838
    %v3840 = vsel %vm306, %v3830, 0.0
    %3841 = vadd.xlane.f32.xlu0 %v3840
    %v3842 = vpop.xlane.xlu0 %3841
    %v3843 = vmul.f32 %v3833, %v314
    %v3844 = vmul.f32 %v3836, %v314
    %v3845 = vmul.f32 %v3839, %v314
    %v3846 = vmul.f32 %v3842, %v314
    %v3847 = vadd.f32 %v3843, 1e-05
    %v3848 = vadd.f32 %v3844, 1e-05
    %v3849 = vadd.f32 %v3845, 1e-05
    %v3850 = vadd.f32 %v3846, 1e-05
    %v3851 = vrsqrt.pop %v3847
    %v3852 = vrsqrt.pop %v3848
    %v3853 = vrsqrt.pop %v3849
    %v3854 = vrsqrt.pop %v3850
    %v3855 = vmul.f32 %v3823, %v3851
    %v3856 = vmul.f32 %v3824, %v3852
    %v3857 = vmul.f32 %v3825, %v3853
    %v3858 = vmul.f32 %v3826, %v3854
    %v3859 = vlaneseq
    %v3860 = vshrl.u32 %v3859, 7
    %v3861 = vsub.s32 0, %v3860
    %v3862 = vrot.slane %v3806, %v3861
    %v3863 = vmul.f32 %v3855, %v3862
    %v3864 = vmul.f32 %v3856, %v3862
    %v3865 = vmul.f32 %v3857, %v3862
    %v3866 = vmul.f32 %v3858, %v3862
    %v3867 = vlaneseq
    %v3868 = vshrl.u32 %v3867, 7
    %v3869 = vsub.s32 1, %v3868
    %v3870 = vrot.slane %v3806, %v3869
    %v3871 = vadd.f32 %v3863, %v3870
    %v3872 = vadd.f32 %v3864, %v3870
    %v3873 = vadd.f32 %v3865, %v3870
    %v3874 = vadd.f32 %v3866, %v3870
    %v3875 = vld [vmem:[%s59] sm:$0xf]
    %v3877 = vsel %vm306, %v3875, 0
    %3879 = vmatprep.subr.mxu0 0.0
    %3880 = vmatpush1.msra.mxu0 %v3871
    %3881 = vmatprep.subr.mxu0 0.0
    %3882 = vmatpush1.msra.mxu0 %v3872
    %3883 = vmatprep.subr.mxu0 0.0
    %3884 = vmatpush1.msra.mxu0 %v3873
    %3885 = vmatprep.subr.mxu0 0.0
    %3886 = vmatpush1.msra.mxu0 %v3874
    %3887 = vmatprep.subr.mxu0 0.0
    %3888 = vmatpush1.msra.mxu0 0.0
    %3889 = vmatprep.subr.mxu0 0.0
    %3890 = vmatpush1.msra.mxu0 0.0
    %3891 = vmatprep.subr.mxu0 0.0
    %3892 = vmatpush1.msra.mxu0 0.0
    %3893 = vmatprep.subr.mxu0 0.0
    %3894 = vmatpush1.msra.mxu0 0.0
    %3895 = vmatprep.subr.mxu0 0.0
    %3896 = vmatpush1.msra.mxu0 0.0
    %3897 = vmatprep.subr.mxu0 0.0
    %3898 = vmatpush1.msra.mxu0 0.0
    %3899 = vmatprep.subr.mxu0 0.0
    %3900 = vmatpush1.msra.mxu0 0.0
    %3901 = vmatprep.subr.mxu0 0.0
    %3902 = vmatpush1.msra.mxu0 0.0
    %3903 = vmatprep.subr.mxu0 0.0
    %3904 = vmatpush1.msra.mxu0 0.0
    %3905 = vmatprep.subr.mxu0 0.0
    %3906 = vmatpush1.msra.mxu0 0.0
    %3907 = vmatprep.subr.mxu0 0.0
    %3908 = vmatpush1.msra.mxu0 0.0
    %3909 = vmatprep.subr.mxu0 0.0
    %3910 = vmatpush1.msra.mxu0 0.0
    %3911 = vmatprep.subr.mxu0 0.0
    %3912 = vmatpush1.msra.mxu0 0.0
    %3913 = vmatprep.subr.mxu0 0.0
    %3914 = vmatpush1.msra.mxu0 0.0
    %3915 = vmatprep.subr.mxu0 0.0
    %3916 = vmatpush1.msra.mxu0 0.0
    %3917 = vmatprep.subr.mxu0 0.0
    %3918 = vmatpush1.msra.mxu0 0.0
    %3919 = vmatprep.subr.mxu0 0.0
    %3920 = vmatpush1.msra.mxu0 0.0
    %3921 = vmatprep.subr.mxu0 0.0
    %3922 = vmatpush1.msra.mxu0 0.0
    %3923 = vmatprep.subr.mxu0 0.0
    %3924 = vmatpush1.msra.mxu0 0.0
    %3925 = vmatprep.subr.mxu0 0.0
    %3926 = vmatpush1.msra.mxu0 0.0
    %3927 = vmatprep.subr.mxu0 0.0
    %3928 = vmatpush1.msra.mxu0 0.0
    %3929 = vmatprep.subr.mxu0 0.0
    %3930 = vmatpush1.msra.mxu0 0.0
    %3931 = vmatprep.subr.mxu0 0.0
    %3932 = vmatpush1.msra.mxu0 0.0
    %3933 = vmatprep.subr.mxu0 0.0
    %3934 = vmatpush1.msra.mxu0 0.0
    %3935 = vmatprep.subr.mxu0 0.0
    %3936 = vmatpush1.msra.mxu0 0.0
    %3937 = vmatprep.subr.mxu0 0.0
    %3938 = vmatpush1.msra.mxu0 0.0
    %3939 = vmatprep.subr.mxu0 0.0
    %3940 = vmatpush1.msra.mxu0 0.0
    %3941 = vmatprep.subr.mxu0 0.0
    %3942 = vmatpush1.msra.mxu0 0.0
    %3943 = vmatprep.mubr.f32.mxu0 0.0
    %3944 = vmatmul.mubr.f32.gmra.mrb[0].mxu0 %v3877
    %v3945 = vpop.f32.mrb[0].mxu0
    %v3946 = vadd.f32 0.0, %v3945
    %v3947 = vpop.f32.mrb[0].mxu0
    %3948 = vdwg.mxu0
    %v3949 = vld [vmem:[%s61] sm:$0xf]
    %v3950 = vld [vmem:[%s61 + $0x4] sm:$0xf]
    %v3951 = vld [vmem:[%s61 + $0x8] sm:$0xf]
    %v3952 = vld [vmem:[%s61 + $0xc] sm:$0xf]
    %v3953 = vpack.c.bf16 %v3946, %v3946
    %v3958 = vunpack.c.l.b16 %v3949
    %v3959 = vunpack.c.l.b16 %v3950
    %v3960 = vunpack.c.l.b16 %v3951
    %v3961 = vunpack.c.l.b16 %v3952
    %v3962 = vpack.c.b16 %v3959, %v3958
    %v3963 = vpack.c.b16 %v3961, %v3960
    %v3967 = vsel %vm306, %v3953, 0
    %3969 = vmatprep.subr.bf16.mxu0 0
    %3970 = vmatpush1.bf16.msra.mxu0 %v3962
    %3971 = vmatprep.subr.bf16.mxu0 0
    %3972 = vmatpush1.bf16.msra.mxu0 %v3963
    %3973 = vmatprep.subr.bf16.mxu0 0
    %3974 = vmatpush1.bf16.msra.mxu0 0
    %3975 = vmatprep.subr.bf16.mxu0 0
    %3976 = vmatpush1.bf16.msra.mxu0 0
    %3977 = vmatprep.subr.bf16.mxu0 0
    %3978 = vmatpush1.bf16.msra.mxu0 0
    %3979 = vmatprep.subr.bf16.mxu0 0
    %3980 = vmatpush1.bf16.msra.mxu0 0
    %3981 = vmatprep.subr.bf16.mxu0 0
    %3982 = vmatpush1.bf16.msra.mxu0 0
    %3983 = vmatprep.subr.bf16.mxu0 0
    %3984 = vmatpush1.bf16.msra.mxu0 0
    %3985 = vmatprep.subr.bf16.mxu0 0
    %3986 = vmatpush1.bf16.msra.mxu0 0
    %3987 = vmatprep.subr.bf16.mxu0 0
    %3988 = vmatpush1.bf16.msra.mxu0 0
    %3989 = vmatprep.subr.bf16.mxu0 0
    %3990 = vmatpush1.bf16.msra.mxu0 0
    %3991 = vmatprep.subr.bf16.mxu0 0
    %3992 = vmatpush1.bf16.msra.mxu0 0
    %3993 = vmatprep.subr.bf16.mxu0 0
    %3994 = vmatpush1.bf16.msra.mxu0 0
    %3995 = vmatprep.subr.bf16.mxu0 0
    %3996 = vmatpush1.bf16.msra.mxu0 0
    %3997 = vmatprep.subr.bf16.mxu0 0
    %3998 = vmatpush1.bf16.msra.mxu0 0
    %3999 = vmatprep.subr.bf16.mxu0 0
    %4000 = vmatpush1.bf16.msra.mxu0 0
    %4001 = vmatprep.mubr.bf16.mxu0 0
    %4002 = vmatmul.mubr.bf16.gmra.mrb[0].mxu0 %v3967
    %v4003 = vpop.f32.mrb[0].mxu0
    %v4004 = vadd.f32 0.0, %v4003
    %v4005 = vpop.f32.mrb[0].mxu0
    %v4006 = vpop.f32.mrb[0].mxu0
    %v4007 = vpop.f32.mrb[0].mxu0
    %4008 = vdwg.mxu0
    %v4009 = vmul.f32 %v1884, %v1884
    %v4010 = vsel %vm310, %v4009, 0.0
    %4011 = vadd.xlane.f32.xlu0 %v4010
    %v4012 = vpop.xlane.xlu0 %4011
    %v4013 = vadd.f32 %v4012, 1e-12
    %v4014 = vrsqrt.pop %v4013
    %v4015 = vmul.f32 %v1884, %v4014
    %v4016 = vmul.f32 %v4004, %v4004
    %vm4017 = vcmask 257024
    %v4018 = vsel %vm4017, %v4016, 0.0
    %4019 = vadd.xlane.f32.xlu0 %v4018
    %v4020 = vpop.xlane.xlu0 %4019
    %v4021 = vadd.f32 %v4020, 1e-12
    %v4022 = vrsqrt.pop %v4021
    %v4023 = vmul.f32 %v4004, %v4022
    %v4025 = vsel %vm306, %v4015, 0
    %v4028 = vsel %vm306, %v4023, 0
    %4030 = vmatprep.subr.mxu0 0.0
    %4031 = vmatpush1.xpose.msra.mxu0 %v4028
    %4032 = vmatprep.subr.mxu0 0.0
    %4033 = vmatpush1.xpose.msra.mxu0 0.0
    %4034 = vmatprep.subr.mxu0 0.0
    %4035 = vmatpush1.xpose.msra.mxu0 0.0
    %4036 = vmatprep.subr.mxu0 0.0
    %4037 = vmatpush1.xpose.msra.mxu0 0.0
    %4038 = vmatprep.subr.mxu0 0.0
    %4039 = vmatpush1.xpose.msra.mxu0 0.0
    %4040 = vmatprep.subr.mxu0 0.0
    %4041 = vmatpush1.xpose.msra.mxu0 0.0
    %4042 = vmatprep.subr.mxu0 0.0
    %4043 = vmatpush1.xpose.msra.mxu0 0.0
    %4044 = vmatprep.subr.mxu0 0.0
    %4045 = vmatpush1.xpose.msra.mxu0 0.0
    %4046 = vmatprep.subr.mxu0 0.0
    %4047 = vmatpush1.xpose.msra.mxu0 0.0
    %4048 = vmatprep.subr.mxu0 0.0
    %4049 = vmatpush1.xpose.msra.mxu0 0.0
    %4050 = vmatprep.subr.mxu0 0.0
    %4051 = vmatpush1.xpose.msra.mxu0 0.0
    %4052 = vmatprep.subr.mxu0 0.0
    %4053 = vmatpush1.xpose.msra.mxu0 0.0
    %4054 = vmatprep.subr.mxu0 0.0
    %4055 = vmatpush1.xpose.msra.mxu0 0.0
    %4056 = vmatprep.subr.mxu0 0.0
    %4057 = vmatpush1.xpose.msra.mxu0 0.0
    %4058 = vmatprep.subr.mxu0 0.0
    %4059 = vmatpush1.xpose.msra.mxu0 0.0
    %4060 = vmatprep.subr.mxu0 0.0
    %4061 = vmatpush1.xpose.msra.mxu0 0.0
    %4062 = vmatprep.subr.mxu0 0.0
    %4063 = vmatpush1.xpose.msra.mxu0 0.0
    %4064 = vmatprep.subr.mxu0 0.0
    %4065 = vmatpush1.xpose.msra.mxu0 0.0
    %4066 = vmatprep.subr.mxu0 0.0
    %4067 = vmatpush1.xpose.msra.mxu0 0.0
    %4068 = vmatprep.subr.mxu0 0.0
    %4069 = vmatpush1.xpose.msra.mxu0 0.0
    %4070 = vmatprep.subr.mxu0 0.0
    %4071 = vmatpush1.xpose.msra.mxu0 0.0
    %4072 = vmatprep.subr.mxu0 0.0
    %4073 = vmatpush1.xpose.msra.mxu0 0.0
    %4074 = vmatprep.subr.mxu0 0.0
    %4075 = vmatpush1.xpose.msra.mxu0 0.0
    %4076 = vmatprep.subr.mxu0 0.0
    %4077 = vmatpush1.xpose.msra.mxu0 0.0
    %4078 = vmatprep.subr.mxu0 0.0
    %4079 = vmatpush1.xpose.msra.mxu0 0.0
    %4080 = vmatprep.subr.mxu0 0.0
    %4081 = vmatpush1.xpose.msra.mxu0 0.0
    %4082 = vmatprep.subr.mxu0 0.0
    %4083 = vmatpush1.xpose.msra.mxu0 0.0
    %4084 = vmatprep.subr.mxu0 0.0
    %4085 = vmatpush1.xpose.msra.mxu0 0.0
    %4086 = vmatprep.subr.mxu0 0.0
    %4087 = vmatpush1.xpose.msra.mxu0 0.0
    %4088 = vmatprep.subr.mxu0 0.0
    %4089 = vmatpush1.xpose.msra.mxu0 0.0
    %4090 = vmatprep.subr.mxu0 0.0
    %4091 = vmatpush1.xpose.msra.mxu0 0.0
    %4092 = vmatprep.subr.mxu0 0.0
    %4093 = vmatpush1.xpose.msra.mxu0 0.0
    %4094 = vmatprep.mubr.f32.mxu0 0.0
    %4095 = vmatmul.mubr.f32.gmra.mrb[0].mxu0 %v4025
    %v4096 = vpop.f32.mrb[0].mxu0
    %v4097 = vadd.f32 0.0, %v4096
    %v4098 = vpop.f32.mrb[0].mxu0
    %4099 = vdwg.mxu0
    %s4100 = sld [smem:[#allocation2]]
    %v4101 = vstv %s4100
    %v4102 = vmul.f32 %v4101, %v4097
    %vm4103 = vcmask 25600
    %4104 = vst.msk [vmem:[#allocation3] sm:$0x3] %vm4103, %v4102
    // Predicated region
    $region130: #{_lambda_.1} parent=1 // pred_check
      _
    $region131: #{_lambda_.1} parent=1 // pred_check_branch
      %4106 = sbr.rel (0) target = $region133
    $region132: #{_lambda_.1} parent=1 // pred_region
      %s4108 = ssub.s32 32, 32
      %4109 = vsyncadd [#allocation4], %s4108
      %s4111 = sshll.u32 [#allocation3], 4
      %s4112 = int_to_ptr.vmem [resolvable:$true] %s4111
      %4114 = dma.vmem_to_hbm [thread:$0]  %s4112, 32, %s65, [#allocation4]
    $region133: #{_lambda_.1} parent=1 // pred_fallthru
      _
    // Predicated region
    $region134: #{_lambda_.1} parent=1 // pred_check
      _
    $region135: #{_lambda_.1} parent=1 // pred_check_branch
      %4116 = sbr.rel (0) target = $region137
    $region136: #{_lambda_.1} parent=1 // pred_region
      %4117 = dma.done [#allocation4], 32
    $region137: #{_lambda_.1} parent=1 // pred_fallthru
      _
    %4118 = vsyncpa [#allocation4], 1

</llo_original>
